<compile_context>
chip_gen: v7x
topology: tpu7x:2x2x1
jax: 0.10.0
libtpu: 0.0.40
codegen_flags: <defaults>
</compile_context>

<pallas_src>
import functools
import random

import jax
import jax.numpy as jnp
from jax.experimental import pallas as pl
from jax.experimental.pallas import tpu as pltpu

_LANE = 128      # TPU vreg lane width
_SUBLANE = 8     # TPU vreg sublane count (f32)

# Whole-array, VMEM-resident operand (single copy before the grid, no
# per-iteration DMA / double-buffering).
_VMEM = pl.BlockSpec(memory_space=pltpu.MemorySpace.VMEM)


def _round_up(n, m):
    return ((n + m - 1) // m) * m


def _chunk_len(L, max_tb=8):
    """Largest divisor of L that is <= max_tb (encoder time-chunk size)."""
    tb = 1
    for d in range(1, min(L, max_tb) + 1):
        if L % d == 0:
            tb = d
    return tb


def _vmem_limit_bytes():
    """Explicit scoped-VMEM budget, leaving headroom below physical capacity."""
    try:
        cap = pltpu.get_tpu_info().vmem_capacity_bytes
    except Exception:
        cap = 64 * 1024 * 1024          # conservative (v7x-sized) fallback
    return int(min(100 * 1024 * 1024, max(cap - 16 * 1024 * 1024,
                                          32 * 1024 * 1024)))


_VMEM_LIMIT = _vmem_limit_bytes()


# ----------------------------------------------------------------------------
# Pallas kernels
# ----------------------------------------------------------------------------

def _enc_rnn_kernel(x_ref, wih_ref, bih_ref, whh_ref, bhh_ref, hout_ref, h_scr):
    """Bidirectional encoder GRU, grid = (L // TB,) time chunks.

    x_ref block: (2, TB*bp, E) bf16 -- direction 0 in forward time order,
    direction 1 already time-reversed (host-side flip), so both walk forward.
    Per chunk: one (TB*bp, E)@(E, 3Hp) input projection per direction (hoisted
    out of the recurrence), then a fully unrolled TB-step recurrence per
    direction carried in the (2, bp, hp) VMEM scratch.  Gate order [r|z|n]
    (PyTorch), each gate padded to a 128-lane block (padded lanes stay 0).
    """
    c = pl.program_id(0)

    @pl.when(c == 0)
    def _():
        h_scr[...] = jnp.zeros_like(h_scr)

    bp = h_scr.shape[1]
    hp = h_scr.shape[2]
    tb = x_ref.shape[1] // bp

    # Chunk input projections (both directions), f32 accumulation.
    gi_f = jnp.dot(x_ref[0], wih_ref[0],
                   preferred_element_type=jnp.float32) + bih_ref[0]
    gi_b = jnp.dot(x_ref[1], wih_ref[1],
                   preferred_element_type=jnp.float32) + bih_ref[1]

    def gru_step(h, gi, whh, bhh):
        gh = jnp.dot(h.astype(jnp.bfloat16), whh,
                     preferred_element_type=jnp.float32) + bhh
        r = jax.nn.sigmoid(gi[:, :hp] + gh[:, :hp])
        z = jax.nn.sigmoid(gi[:, hp:2 * hp] + gh[:, hp:2 * hp])
        n = jnp.tanh(gi[:, 2 * hp:] + r * gh[:, 2 * hp:])
        return (1.0 - z) * n + z * h

    whh_f, whh_b = whh_ref[0], whh_ref[1]
    bhh_f, bhh_b = bhh_ref[0], bhh_ref[1]
    h_f = h_scr[0]
    h_b = h_scr[1]
    for i in range(tb):                       # static, fully unrolled
        h_f = gru_step(h_f, gi_f[i * bp:(i + 1) * bp], whh_f, bhh_f)
        h_b = gru_step(h_b, gi_b[i * bp:(i + 1) * bp], whh_b, bhh_b)
    h_scr[0] = h_f
    h_scr[1] = h_b

    @pl.when(c == pl.num_programs(0) - 1)
    def _():
        hout_ref[0] = h_f
        hout_ref[1] = h_b


def _dec_rnn_kernel(tf_ref,                                   # scalar prefetch
                    tgt_ref, h0_ref, gi_tab_ref, whh_ref, bhh_ref,
                    wout_ref, bout_ref,
                    logits_ref, preds_ref,
                    h_scr, top1_scr, preds_scr):
    """Whole decoder loop fused into one kernel, grid = (T-1,).

    Per step: next-input select (teacher forcing), ONE matmul of a one-hot row
    against the precomputed (emb @ Wih + bih) table (yields the input gates
    directly), ONE recurrent matmul, gate math, ONE matmul against the
    collapsed output projection, argmax.  Hidden, previous argmax and the
    prediction row-buffer are carried in VMEM scratch; all weights and the
    target tokens are resident (whole-array VMEM operands, copied once).
    """
    s = pl.program_id(0)

    @pl.when(s == 0)
    def _():
        h_scr[...] = h0_ref[...]
        top1_scr[...] = jnp.zeros_like(top1_scr)
        preds_scr[...] = jnp.zeros_like(preds_scr)

    # Next-input select (mirrors the reference module verbatim:
    #   decoder_input = top1 if teacher_force else target[:, t]).
    tgt_s = tgt_ref[s]                                        # (bp, 1) int32
    tf_prev = tf_ref[jnp.maximum(s - 1, 0)]
    use_top1 = jnp.where(s > 0, tf_prev, 0)                   # scalar {0, 1}
    tok = use_top1 * top1_scr[...] + (1 - use_top1) * tgt_s   # (bp, 1) int32

    vp = gi_tab_ref.shape[0]
    oh = jnp.where(
        jax.lax.broadcasted_iota(jnp.int32, (tok.shape[0], vp), 1) == tok,
        1.0, 0.0).astype(jnp.bfloat16)
    # gi = emb(tok) @ Wih + bih, via the fused precomputed table (one matmul).
    gi = jnp.dot(oh, gi_tab_ref[...], preferred_element_type=jnp.float32)

    # GRU cell (gate order r|z|n, each gate a 128-lane block).
    h = h_scr[...]
    hp = h.shape[-1]
    gh = jnp.dot(h.astype(jnp.bfloat16), whh_ref[...],
                 preferred_element_type=jnp.float32) + bhh_ref[...]
    r = jax.nn.sigmoid(gi[:, :hp] + gh[:, :hp])
    z = jax.nn.sigmoid(gi[:, hp:2 * hp] + gh[:, hp:2 * hp])
    n = jnp.tanh(gi[:, 2 * hp:] + r * gh[:, 2 * hp:])
    h_new = (1.0 - z) * n + z * h
    h_scr[...] = h_new

    # Collapsed output projection (w1@w2@w3 composed offline in f32).
    logits = jnp.dot(h_new.astype(jnp.bfloat16), wout_ref[...],
                     preferred_element_type=jnp.float32) + bout_ref[...]
    logits_ref[0] = logits

    # argmax over the vocab (first occurrence on ties; padded cols never win).
    ids = jax.lax.broadcasted_iota(jnp.int32, logits.shape, 1)
    mx = jnp.max(logits, axis=-1, keepdims=True)
    top1 = jnp.min(jnp.where(logits == mx, ids, vp), axis=-1, keepdims=True)
    top1_scr[...] = top1

    # Accumulate predictions lane-dense; store once at the last step.
    lane = jax.lax.broadcasted_iota(jnp.int32, preds_scr.shape, 1)
    preds_scr[...] = jnp.where(lane == s, top1, preds_scr[...])

    @pl.when(s == pl.num_programs(0) - 1)
    def _():
        preds_ref[...] = preds_scr[...]


# ----------------------------------------------------------------------------
# pallas_call wrappers
# ----------------------------------------------------------------------------

def enc_recurrence(x_dirs, wih, bih, whh, bhh, *, bp):
    _, lbp, e = x_dirs.shape
    L = lbp // bp
    hp = whh.shape[1]
    tb = _chunk_len(L)
    n_chunks = L // tb
    return pl.pallas_call(
        _enc_rnn_kernel,
        out_shape=jax.ShapeDtypeStruct((2, bp, hp), jnp.float32),
        grid_spec=pltpu.PrefetchScalarGridSpec(
            num_scalar_prefetch=0,
            grid=(n_chunks,),
            in_specs=[
                pl.BlockSpec((2, tb * bp, e), lambda c: (0, c, 0)),
                _VMEM,      # wih  (2, E, 3*hp)  bf16, resident
                _VMEM,      # bih  (2, 1, 3*hp)  f32,  resident
                _VMEM,      # whh  (2, hp, 3*hp) bf16, resident
                _VMEM,      # bhh  (2, 1, 3*hp)  f32,  resident
            ],
            out_specs=pl.BlockSpec((2, bp, hp), lambda c: (0, 0, 0)),
            scratch_shapes=[pltpu.VMEM((2, bp, hp), jnp.float32)],
        ),
        compiler_params=pltpu.CompilerParams(
            dimension_semantics=("arbitrary",),
            vmem_limit_bytes=_VMEM_LIMIT),
    )(x_dirs, wih, bih, whh, bhh)


def decoder_run(tf_flags, tgt_steps, h0, dp):
    n_steps = tgt_steps.shape[0] - 1
    bp = h0.shape[0]
    h2p = h0.shape[1]
    vp = dp["gi_tab"].shape[0]
    tpad = _round_up(max(n_steps, _LANE), _LANE)

    logits, preds = pl.pallas_call(
        _dec_rnn_kernel,
        out_shape=(
            jax.ShapeDtypeStruct((n_steps, bp, vp), jnp.float32),
            jax.ShapeDtypeStruct((bp, tpad), jnp.int32),
        ),
        grid_spec=pltpu.PrefetchScalarGridSpec(
            num_scalar_prefetch=1,                      # teacher-forcing flags
            grid=(n_steps,),
            in_specs=[
                _VMEM,      # target tokens (T, bp, 1), resident
                _VMEM,      # h0
                _VMEM,      # gi_tab  (vp, 3*h2p) bf16
                _VMEM,      # whh     (h2p, 3*h2p) bf16
                _VMEM,      # bhh     (1, 3*h2p) f32
                _VMEM,      # wout    (h2p, vp) bf16   (collapsed w1@w2@w3)
                _VMEM,      # bout    (1, vp) f32
            ],
            out_specs=(
                pl.BlockSpec((1, bp, vp), lambda s, tf: (s, 0, 0)),
                pl.BlockSpec((bp, tpad), lambda s, tf: (0, 0)),
            ),
            scratch_shapes=[pltpu.VMEM((bp, h2p), jnp.float32),
                            pltpu.VMEM((bp, 1), jnp.int32),
                            pltpu.VMEM((bp, tpad), jnp.int32)],
        ),
        compiler_params=pltpu.CompilerParams(
            dimension_semantics=("arbitrary",),
            vmem_limit_bytes=_VMEM_LIMIT),
    )(tf_flags, tgt_steps, h0,
      dp["gi_tab"], dp["whh"], dp["bhh"], dp["wout"], dp["bout"])
    return logits, preds


# ----------------------------------------------------------------------------
# Parameters (logical PyTorch shapes -> padded/fused/bf16 kernel layout)
# ----------------------------------------------------------------------------

def init_params(key, en_vocab, cn_vocab, emb_dim, hid_dim):
    H, H2 = hid_dim, 2 * hid_dim
    keys = jax.random.split(key, 32)
    k = iter(keys)

    def w(shape):
        return 0.1 * jax.random.normal(next(k), shape, jnp.float32)

    def gru(in_dim, h):
        return {"wih": w((in_dim, 3 * h)), "whh": w((h, 3 * h)),
                "bih": w((1, 3 * h)), "bhh": w((1, 3 * h))}

    return {
        "enc_emb": w((en_vocab, emb_dim)),
        "enc_f": gru(emb_dim, H),                 # forward encoder GRU
        "enc_b": gru(emb_dim, H),                 # backward encoder GRU
        "dec_emb": w((cn_vocab, emb_dim)),
        "dec": {**gru(emb_dim, H2),
                "w1": w((H2, 2 * H2)), "b1": w((1, 2 * H2)),
                "w2": w((2 * H2, 4 * H2)), "b2": w((1, 4 * H2)),
                "w3": w((4 * H2, cn_vocab)), "b3": w((1, cn_vocab))},
    }


def _pad_to(x, shape):
    return jnp.pad(x, [(0, s - d) for d, s in zip(x.shape, shape)])


def _pad_gate_cols(w, h, hp):
    """(in, 3*h) -> (in, 3*hp): each [r|z|n] gate block zero-padded to hp lanes."""
    return jnp.concatenate(
        [_pad_to(w[:, g * h:(g + 1) * h], (w.shape[0], hp)) for g in range(3)],
        axis=-1)


def pack_params(p, hid_dim, cn_vocab):
    """Pad gate blocks / vocab to 128-lane blocks, fuse offline what can be
    fused (decoder emb@Wih+bih table; collapsed w1@w2@w3 output projection,
    composed in f32), cast matmul operands to bf16 (f32 accumulation
    in-kernel), keep biases f32.  Zero padding keeps padded hidden lanes
    exactly 0 through the recurrence; padded vocab columns get a -1e30 bias so
    argmax never selects them."""
    bf16 = jnp.bfloat16
    H, H2 = hid_dim, 2 * hid_dim
    hp = _round_up(max(H, _LANE), _LANE)        # encoder per-gate lane width
    h2p = _round_up(max(H2, _LANE), _LANE)      # decoder per-gate lane width
    vp = _round_up(max(cn_vocab, _LANE), _LANE)

    def pack_gru(g, h, hpad):
        return {
            "wih": _pad_gate_cols(g["wih"], h, hpad).astype(bf16),
            "whh": _pad_gate_cols(_pad_to(g["whh"], (hpad, 3 * h)), h, hpad).astype(bf16),
            "bih": _pad_gate_cols(g["bih"], h, hpad),
            "bhh": _pad_gate_cols(g["bhh"], h, hpad),
        }

    ef, eb = pack_gru(p["enc_f"], H, hp), pack_gru(p["enc_b"], H, hp)
    enc = {
        "emb": p["enc_emb"].astype(bf16),
        "wih": jnp.stack([ef["wih"], eb["wih"]], axis=0),     # (2, E, 3*hp)
        "bih": jnp.stack([ef["bih"], eb["bih"]], axis=0),     # (2, 1, 3*hp)
        "whh": jnp.stack([ef["whh"], eb["whh"]], axis=0),     # (2, hp, 3*hp)
        "bhh": jnp.stack([ef["bhh"], eb["bhh"]], axis=0),     # (2, 1, 3*hp)
    }

    d = p["dec"]
    # Fused decoder input table: one one-hot matmul yields gi = emb@Wih + bih.
    gi_tab = jnp.dot(p["dec_emb"], d["wih"]) + d["bih"]       # (V, 3*H2) f32
    gi_tab = _pad_to(_pad_gate_cols(gi_tab, H2, h2p), (vp, 3 * h2p)).astype(bf16)

    whh = _pad_gate_cols(_pad_to(d["whh"], (h2p, 3 * H2)), H2, h2p).astype(bf16)
    bhh = _pad_gate_cols(d["bhh"], H2, h2p)                   # (1, 3*h2p) f32

    # Collapse the three chained output linears (no nonlinearity between them).
    wout = d["w1"] @ d["w2"] @ d["w3"]                        # (H2, V) f32
    bout = (d["b1"] @ d["w2"] + d["b2"]) @ d["w3"] + d["b3"]  # (1, V) f32
    wout = _pad_to(wout, (h2p, vp)).astype(bf16)
    bout = jnp.concatenate(
        [bout, jnp.full((1, vp - cn_vocab), -1e30, jnp.float32)], axis=-1)

    dec = {"gi_tab": gi_tab, "whh": whh, "bhh": bhh, "wout": wout, "bout": bout}
    return {"enc": enc, "dec": dec}


# ----------------------------------------------------------------------------
# Forward pass (mirrors Seq2Seq.forward, n_layers = 1, isatt = False)
# ----------------------------------------------------------------------------

def encoder_forward(enc_p, inputs_pad):
    """inputs_pad: (bp, L) int32.  Returns final fwd/bwd hiddens (bp, hp) each.
    TODO(synk): per-step encoder_output is not materialized (only the unused
    attention branch consumes it)."""
    bp, L = inputs_pad.shape
    emb = enc_p["emb"][inputs_pad]                             # (bp, L, E) gather glue
    x = jnp.transpose(emb, (1, 0, 2))                          # (L, bp, E)
    # dir 0 = forward time order, dir 1 = reversed (backward direction).
    x_dirs = jnp.stack([x, jnp.flip(x, axis=0)], axis=0).reshape(2, L * bp, -1)
    hout = enc_recurrence(x_dirs, enc_p["wih"], enc_p["bih"],
                          enc_p["whh"], enc_p["bhh"], bp=bp)   # (2, bp, hp)
    return hout[0], hout[1]


@functools.partial(jax.jit, static_argnames=("hid_dim",))
def _forward_core(kparams, inputs_pad, target_pad, tf_flags, hid_dim):
    H = hid_dim
    h_f, h_b = encoder_forward(kparams["enc"], inputs_pad)
    bp = inputs_pad.shape[0]
    h2p = kparams["dec"]["whh"].shape[0]
    # decoder init hidden = cat(fwd final, bwd final), zero-padded to h2p lanes
    h0 = jnp.zeros((bp, h2p), jnp.float32)
    h0 = h0.at[:, :H].set(h_f[:, :H]).at[:, H:2 * H].set(h_b[:, :H])
    tgt_steps = jnp.transpose(target_pad).astype(jnp.int32)[:, :, None]  # (T, bp, 1)
    return decoder_run(tf_flags, tgt_steps, h0, kparams["dec"])


def seq2seq_forward(kparams, inputs, target, teacher_forcing_ratio, mode,
                    hid_dim, cn_vocab):
    B, T = target.shape
    L = inputs.shape[1]
    bp = _round_up(max(B, _SUBLANE), _SUBLANE)

    outputs = jnp.zeros((B, T, cn_vocab), jnp.float32)
    if mode == "train":
        # teacher-forcing flags drawn host-side in the same order as the torch loop
        tf_flags = jnp.asarray(
            [1 if random.random() <= teacher_forcing_ratio else 0
             for _ in range(1, T)], dtype=jnp.int32)
    elif mode == "test":
        tf_flags = jnp.ones((T - 1,), jnp.int32)     # always feed own prediction
    else:
        print("mode is error!")
        return outputs, jnp.zeros((B, 0), jnp.int32)

    inputs_pad = jnp.zeros((bp, L), jnp.int32).at[:B].set(inputs.astype(jnp.int32))
    target_pad = jnp.zeros((bp, T), jnp.int32).at[:B].set(target.astype(jnp.int32))

    logits_p, preds_p = _forward_core(kparams, inputs_pad, target_pad, tf_flags,
                                      hid_dim=hid_dim)

    # outputs[:, 0] stays zero (the reference loop starts at t = 1).
    logits = logits_p[:, :B, :cn_vocab]                        # (T-1, B, V)
    outputs = outputs.at[:, 1:].set(jnp.transpose(logits, (1, 0, 2)))
    preds = preds_p[:B, :T - 1]                                # (B, T-1)
    return outputs, preds


# ----------------------------------------------------------------------------
# Driver
# ----------------------------------------------------------------------------

if __name__ == "__main__":
    EN_VOCAB, CN_VOCAB = 50, 60
    EMB_DIM, HID_DIM = 16, 32
    B, SRC_LEN, TGT_LEN = 2, 8, 8

    key = jax.random.PRNGKey(0)
    kp, ki, kt = jax.random.split(key, 3)
    params = init_params(kp, EN_VOCAB, CN_VOCAB, EMB_DIM, HID_DIM)
    kparams = pack_params(params, HID_DIM, CN_VOCAB)

    inputs = jax.random.randint(ki, (B, SRC_LEN), 0, EN_VOCAB, jnp.int32)
    target = jax.random.randint(kt, (B, TGT_LEN), 0, CN_VOCAB, jnp.int32)

    random.seed(0)   # deterministic teacher-forcing decisions
    outputs, preds = seq2seq_forward(kparams, inputs, target,
                                     teacher_forcing_ratio=0.5, mode="train",
                                     hid_dim=HID_DIM, cn_vocab=CN_VOCAB)
    jax.block_until_ready((outputs, preds))

    assert outputs.shape == (B, TGT_LEN, CN_VOCAB)
    assert preds.shape == (B, TGT_LEN - 1)
    assert bool(jnp.all(jnp.isfinite(outputs)))
    assert bool(jnp.all((preds >= 0) & (preds < CN_VOCAB)))
    print("KERNEL_OK")
</pallas_src>

<mosaic_0001>
module attributes {stable_mosaic.version = 11 : i64} {
  func.func @_enc_rnn_kernel(%arg0: i32, %arg1: memref<2x64x16xbf16, #tpu.memory_space<vmem>>, %arg2: memref<2x16x384xbf16, #tpu.memory_space<vmem>>, %arg3: memref<2x1x384xf32, #tpu.memory_space<vmem>>, %arg4: memref<2x128x384xbf16, #tpu.memory_space<vmem>>, %arg5: memref<2x1x384xf32, #tpu.memory_space<vmem>>, %arg6: memref<2x8x128xf32, #tpu.memory_space<vmem>>, %arg7: memref<2x8x128xf32, #tpu.memory_space<vmem>>) attributes {dimension_semantics = [#tpu.dimension_semantics<arbitrary>], iteration_bounds = array<i64: 1>, scalar_prefetch = 0 : i64, scratch_operands = 1 : i64, tpu.core_type = #tpu.core_type<tc>, window_params = [{transform_indices = @transform_0, window_bounds = array<i64: 2, 64, 16>}, {pipeline_mode = #tpu.pipeline_mode<synchronous>, transform_indices = @transform_1, window_bounds = array<i64: 2, 16, 384>}, {pipeline_mode = #tpu.pipeline_mode<synchronous>, transform_indices = @transform_2, window_bounds = array<i64: 2, 1, 384>}, {pipeline_mode = #tpu.pipeline_mode<synchronous>, transform_indices = @transform_3, window_bounds = array<i64: 2, 128, 384>}, {pipeline_mode = #tpu.pipeline_mode<synchronous>, transform_indices = @transform_4, window_bounds = array<i64: 2, 1, 384>}, {pipeline_mode = #tpu.pipeline_mode<synchronous>, transform_indices = @transform_5, window_bounds = array<i64: 2, 8, 128>}]} {
    %c0_i32 = arith.constant 0 : i32
    %0 = arith.cmpi eq, %arg0, %c0_i32 : i32
    %1 = arith.extui %0 : i1 to i32
    %c0_i32_0 = arith.constant 0 : i32
    %2 = arith.cmpi ne, %1, %c0_i32_0 : i32
    scf.if %2 {
      %cst_108 = arith.constant 0.000000e+00 : f32
      %538 = vector.broadcast %cst_108 : f32 to vector<2x8x128xf32>
      %c0_109 = arith.constant 0 : index
      %c0_110 = arith.constant 0 : index
      %c0_111 = arith.constant 0 : index
      %539 = vector.load %arg7[%c0_109, %c0_110, %c0_111] : memref<2x8x128xf32, #tpu.memory_space<vmem>>, vector<2x8x128xf32>
      tpu.vector_store %arg7[%c0_109, %c0_110, %c0_111], %538 {strides = array<i32>} : memref<2x8x128xf32, #tpu.memory_space<vmem>>, vector<2x8x128xf32>,
    } else {
    }
    %c0 = arith.constant 0 : index
    %c0_1 = arith.constant 0 : index
    %c0_2 = arith.constant 0 : index
    %3 = vector.load %arg1[%c0, %c0_1, %c0_2] : memref<2x64x16xbf16, #tpu.memory_space<vmem>>, vector<1x64x16xbf16>
    %4 = vector.shape_cast %3 : vector<1x64x16xbf16> to vector<64x16xbf16>
    %c0_3 = arith.constant 0 : index
    %c0_4 = arith.constant 0 : index
    %c0_5 = arith.constant 0 : index
    %5 = vector.load %arg2[%c0_3, %c0_4, %c0_5] : memref<2x16x384xbf16, #tpu.memory_space<vmem>>, vector<1x16x384xbf16>
    %6 = vector.shape_cast %5 : vector<1x16x384xbf16> to vector<16x384xbf16>
    %cst = arith.constant dense<0.000000e+00> : vector<64x384xf32>
    %7 = tpu.matmul %4, %6, %cst {dimension_numbers = #tpu.dot_dimension_numbers<[1], [0], [0], [1], [0, 0, 1, 1], [], []>} : vector<64x16xbf16>, vector<16x384xbf16>, vector<64x384xf32> -> vector<64x384xf32>
    %c0_6 = arith.constant 0 : index
    %c0_7 = arith.constant 0 : index
    %c0_8 = arith.constant 0 : index
    %8 = vector.load %arg3[%c0_6, %c0_7, %c0_8] : memref<2x1x384xf32, #tpu.memory_space<vmem>>, vector<1x1x384xf32>
    %9 = vector.shape_cast %8 : vector<1x1x384xf32> to vector<1x384xf32>
    %10 = vector.broadcast %9 : vector<1x384xf32> to vector<64x384xf32>
    %11 = arith.addf %7, %10 : vector<64x384xf32>
    %c1 = arith.constant 1 : index
    %c0_9 = arith.constant 0 : index
    %c0_10 = arith.constant 0 : index
    %12 = vector.load %arg1[%c1, %c0_9, %c0_10] : memref<2x64x16xbf16, #tpu.memory_space<vmem>>, vector<1x64x16xbf16>
    %13 = vector.shape_cast %12 : vector<1x64x16xbf16> to vector<64x16xbf16>
    %c1_11 = arith.constant 1 : index
    %c0_12 = arith.constant 0 : index
    %c0_13 = arith.constant 0 : index
    %14 = vector.load %arg2[%c1_11, %c0_12, %c0_13] : memref<2x16x384xbf16, #tpu.memory_space<vmem>>, vector<1x16x384xbf16>
    %15 = vector.shape_cast %14 : vector<1x16x384xbf16> to vector<16x384xbf16>
    %cst_14 = arith.constant dense<0.000000e+00> : vector<64x384xf32>
    %16 = tpu.matmul %13, %15, %cst_14 {dimension_numbers = #tpu.dot_dimension_numbers<[1], [0], [0], [1], [0, 0, 1, 1], [], []>} : vector<64x16xbf16>, vector<16x384xbf16>, vector<64x384xf32> -> vector<64x384xf32>
    %c1_15 = arith.constant 1 : index
    %c0_16 = arith.constant 0 : index
    %c0_17 = arith.constant 0 : index
    %17 = vector.load %arg3[%c1_15, %c0_16, %c0_17] : memref<2x1x384xf32, #tpu.memory_space<vmem>>, vector<1x1x384xf32>
    %18 = vector.shape_cast %17 : vector<1x1x384xf32> to vector<1x384xf32>
    %19 = vector.broadcast %18 : vector<1x384xf32> to vector<64x384xf32>
    %20 = arith.addf %16, %19 : vector<64x384xf32>
    %c0_18 = arith.constant 0 : index
    %c0_19 = arith.constant 0 : index
    %c0_20 = arith.constant 0 : index
    %21 = vector.load %arg4[%c0_18, %c0_19, %c0_20] : memref<2x128x384xbf16, #tpu.memory_space<vmem>>, vector<1x128x384xbf16>
    %22 = vector.shape_cast %21 : vector<1x128x384xbf16> to vector<128x384xbf16>
    %c1_21 = arith.constant 1 : index
    %c0_22 = arith.constant 0 : index
    %c0_23 = arith.constant 0 : index
    %23 = vector.load %arg4[%c1_21, %c0_22, %c0_23] : memref<2x128x384xbf16, #tpu.memory_space<vmem>>, vector<1x128x384xbf16>
    %24 = vector.shape_cast %23 : vector<1x128x384xbf16> to vector<128x384xbf16>
    %c0_24 = arith.constant 0 : index
    %c0_25 = arith.constant 0 : index
    %c0_26 = arith.constant 0 : index
    %25 = vector.load %arg5[%c0_24, %c0_25, %c0_26] : memref<2x1x384xf32, #tpu.memory_space<vmem>>, vector<1x1x384xf32>
    %26 = vector.shape_cast %25 : vector<1x1x384xf32> to vector<1x384xf32>
    %c1_27 = arith.constant 1 : index
    %c0_28 = arith.constant 0 : index
    %c0_29 = arith.constant 0 : index
    %27 = vector.load %arg5[%c1_27, %c0_28, %c0_29] : memref<2x1x384xf32, #tpu.memory_space<vmem>>, vector<1x1x384xf32>
    %28 = vector.shape_cast %27 : vector<1x1x384xf32> to vector<1x384xf32>
    %c0_30 = arith.constant 0 : index
    %c0_31 = arith.constant 0 : index
    %c0_32 = arith.constant 0 : index
    %29 = vector.load %arg7[%c0_30, %c0_31, %c0_32] : memref<2x8x128xf32, #tpu.memory_space<vmem>>, vector<1x8x128xf32>
    %30 = vector.shape_cast %29 : vector<1x8x128xf32> to vector<8x128xf32>
    %c1_33 = arith.constant 1 : index
    %c0_34 = arith.constant 0 : index
    %c0_35 = arith.constant 0 : index
    %31 = vector.load %arg7[%c1_33, %c0_34, %c0_35] : memref<2x8x128xf32, #tpu.memory_space<vmem>>, vector<1x8x128xf32>
    %32 = vector.shape_cast %31 : vector<1x8x128xf32> to vector<8x128xf32>
    %33 = vector.extract_strided_slice %11 {offsets = [0, 0], sizes = [8, 384], strides = [1, 1]} : vector<64x384xf32> to vector<8x384xf32>
    %34 = arith.truncf %30 : vector<8x128xf32> to vector<8x128xbf16>
    %cst_36 = arith.constant dense<0.000000e+00> : vector<8x384xf32>
    %35 = tpu.matmul %34, %22, %cst_36 {dimension_numbers = #tpu.dot_dimension_numbers<[1], [0], [0], [1], [0, 0, 1, 1], [], []>} : vector<8x128xbf16>, vector<128x384xbf16>, vector<8x384xf32> -> vector<8x384xf32>
    %36 = vector.broadcast %26 : vector<1x384xf32> to vector<8x384xf32>
    %37 = arith.addf %35, %36 : vector<8x384xf32>
    %38 = vector.extract_strided_slice %33 {offsets = [0, 0], sizes = [8, 128], strides = [1, 1]} : vector<8x384xf32> to vector<8x128xf32>
    %39 = vector.extract_strided_slice %37 {offsets = [0, 0], sizes = [8, 128], strides = [1, 1]} : vector<8x384xf32> to vector<8x128xf32>
    %40 = arith.addf %38, %39 : vector<8x128xf32>
    %41 = arith.negf %40 : vector<8x128xf32>
    %42 = math.exp %41 : vector<8x128xf32>
    %cst_37 = arith.constant 1.000000e+00 : f32
    %43 = vector.broadcast %cst_37 : f32 to vector<8x128xf32>
    %44 = arith.addf %43, %42 : vector<8x128xf32>
    %45 = arith.divf %43, %44 : vector<8x128xf32>
    %46 = vector.extract_strided_slice %33 {offsets = [0, 128], sizes = [8, 128], strides = [1, 1]} : vector<8x384xf32> to vector<8x128xf32>
    %47 = vector.extract_strided_slice %37 {offsets = [0, 128], sizes = [8, 128], strides = [1, 1]} : vector<8x384xf32> to vector<8x128xf32>
    %48 = arith.addf %46, %47 : vector<8x128xf32>
    %49 = arith.negf %48 : vector<8x128xf32>
    %50 = math.exp %49 : vector<8x128xf32>
    %cst_38 = arith.constant 1.000000e+00 : f32
    %51 = vector.broadcast %cst_38 : f32 to vector<8x128xf32>
    %52 = arith.addf %51, %50 : vector<8x128xf32>
    %53 = arith.divf %51, %52 : vector<8x128xf32>
    %54 = vector.extract_strided_slice %33 {offsets = [0, 256], sizes = [8, 128], strides = [1, 1]} : vector<8x384xf32> to vector<8x128xf32>
    %55 = vector.extract_strided_slice %37 {offsets = [0, 256], sizes = [8, 128], strides = [1, 1]} : vector<8x384xf32> to vector<8x128xf32>
    %56 = arith.mulf %45, %55 : vector<8x128xf32>
    %57 = arith.addf %54, %56 : vector<8x128xf32>
    %58 = math.tanh %57 : vector<8x128xf32>
    %cst_39 = arith.constant 1.000000e+00 : f32
    %59 = vector.broadcast %cst_39 : f32 to vector<8x128xf32>
    %60 = arith.subf %59, %53 : vector<8x128xf32>
    %61 = arith.mulf %60, %58 : vector<8x128xf32>
    %62 = arith.mulf %53, %30 : vector<8x128xf32>
    %63 = arith.addf %61, %62 : vector<8x128xf32>
    %64 = vector.extract_strided_slice %20 {offsets = [0, 0], sizes = [8, 384], strides = [1, 1]} : vector<64x384xf32> to vector<8x384xf32>
    %65 = arith.truncf %32 : vector<8x128xf32> to vector<8x128xbf16>
    %cst_40 = arith.constant dense<0.000000e+00> : vector<8x384xf32>
    %66 = tpu.matmul %65, %24, %cst_40 {dimension_numbers = #tpu.dot_dimension_numbers<[1], [0], [0], [1], [0, 0, 1, 1], [], []>} : vector<8x128xbf16>, vector<128x384xbf16>, vector<8x384xf32> -> vector<8x384xf32>
    %67 = vector.broadcast %28 : vector<1x384xf32> to vector<8x384xf32>
    %68 = arith.addf %66, %67 : vector<8x384xf32>
    %69 = vector.extract_strided_slice %64 {offsets = [0, 0], sizes = [8, 128], strides = [1, 1]} : vector<8x384xf32> to vector<8x128xf32>
    %70 = vector.extract_strided_slice %68 {offsets = [0, 0], sizes = [8, 128], strides = [1, 1]} : vector<8x384xf32> to vector<8x128xf32>
    %71 = arith.addf %69, %70 : vector<8x128xf32>
    %72 = arith.negf %71 : vector<8x128xf32>
    %73 = math.exp %72 : vector<8x128xf32>
    %cst_41 = arith.constant 1.000000e+00 : f32
    %74 = vector.broadcast %cst_41 : f32 to vector<8x128xf32>
    %75 = arith.addf %74, %73 : vector<8x128xf32>
    %76 = arith.divf %74, %75 : vector<8x128xf32>
    %77 = vector.extract_strided_slice %64 {offsets = [0, 128], sizes = [8, 128], strides = [1, 1]} : vector<8x384xf32> to vector<8x128xf32>
    %78 = vector.extract_strided_slice %68 {offsets = [0, 128], sizes = [8, 128], strides = [1, 1]} : vector<8x384xf32> to vector<8x128xf32>
    %79 = arith.addf %77, %78 : vector<8x128xf32>
    %80 = arith.negf %79 : vector<8x128xf32>
    %81 = math.exp %80 : vector<8x128xf32>
    %cst_42 = arith.constant 1.000000e+00 : f32
    %82 = vector.broadcast %cst_42 : f32 to vector<8x128xf32>
    %83 = arith.addf %82, %81 : vector<8x128xf32>
    %84 = arith.divf %82, %83 : vector<8x128xf32>
    %85 = vector.extract_strided_slice %64 {offsets = [0, 256], sizes = [8, 128], strides = [1, 1]} : vector<8x384xf32> to vector<8x128xf32>
    %86 = vector.extract_strided_slice %68 {offsets = [0, 256], sizes = [8, 128], strides = [1, 1]} : vector<8x384xf32> to vector<8x128xf32>
    %87 = arith.mulf %76, %86 : vector<8x128xf32>
    %88 = arith.addf %85, %87 : vector<8x128xf32>
    %89 = math.tanh %88 : vector<8x128xf32>
    %cst_43 = arith.constant 1.000000e+00 : f32
    %90 = vector.broadcast %cst_43 : f32 to vector<8x128xf32>
    %91 = arith.subf %90, %84 : vector<8x128xf32>
    %92 = arith.mulf %91, %89 : vector<8x128xf32>
    %93 = arith.mulf %84, %32 : vector<8x128xf32>
    %94 = arith.addf %92, %93 : vector<8x128xf32>
    %95 = vector.extract_strided_slice %11 {offsets = [8, 0], sizes = [8, 384], strides = [1, 1]} : vector<64x384xf32> to vector<8x384xf32>
    %96 = arith.truncf %63 : vector<8x128xf32> to vector<8x128xbf16>
    %cst_44 = arith.constant dense<0.000000e+00> : vector<8x384xf32>
    %97 = tpu.matmul %96, %22, %cst_44 {dimension_numbers = #tpu.dot_dimension_numbers<[1], [0], [0], [1], [0, 0, 1, 1], [], []>} : vector<8x128xbf16>, vector<128x384xbf16>, vector<8x384xf32> -> vector<8x384xf32>
    %98 = vector.broadcast %26 : vector<1x384xf32> to vector<8x384xf32>
    %99 = arith.addf %97, %98 : vector<8x384xf32>
    %100 = vector.extract_strided_slice %95 {offsets = [0, 0], sizes = [8, 128], strides = [1, 1]} : vector<8x384xf32> to vector<8x128xf32>
    %101 = vector.extract_strided_slice %99 {offsets = [0, 0], sizes = [8, 128], strides = [1, 1]} : vector<8x384xf32> to vector<8x128xf32>
    %102 = arith.addf %100, %101 : vector<8x128xf32>
    %103 = arith.negf %102 : vector<8x128xf32>
    %104 = math.exp %103 : vector<8x128xf32>
    %cst_45 = arith.constant 1.000000e+00 : f32
    %105 = vector.broadcast %cst_45 : f32 to vector<8x128xf32>
    %106 = arith.addf %105, %104 : vector<8x128xf32>
    %107 = arith.divf %105, %106 : vector<8x128xf32>
    %108 = vector.extract_strided_slice %95 {offsets = [0, 128], sizes = [8, 128], strides = [1, 1]} : vector<8x384xf32> to vector<8x128xf32>
    %109 = vector.extract_strided_slice %99 {offsets = [0, 128], sizes = [8, 128], strides = [1, 1]} : vector<8x384xf32> to vector<8x128xf32>
    %110 = arith.addf %108, %109 : vector<8x128xf32>
    %111 = arith.negf %110 : vector<8x128xf32>
    %112 = math.exp %111 : vector<8x128xf32>
    %cst_46 = arith.constant 1.000000e+00 : f32
    %113 = vector.broadcast %cst_46 : f32 to vector<8x128xf32>
    %114 = arith.addf %113, %112 : vector<8x128xf32>
    %115 = arith.divf %113, %114 : vector<8x128xf32>
    %116 = vector.extract_strided_slice %95 {offsets = [0, 256], sizes = [8, 128], strides = [1, 1]} : vector<8x384xf32> to vector<8x128xf32>
    %117 = vector.extract_strided_slice %99 {offsets = [0, 256], sizes = [8, 128], strides = [1, 1]} : vector<8x384xf32> to vector<8x128xf32>
    %118 = arith.mulf %107, %117 : vector<8x128xf32>
    %119 = arith.addf %116, %118 : vector<8x128xf32>
    %120 = math.tanh %119 : vector<8x128xf32>
    %cst_47 = arith.constant 1.000000e+00 : f32
    %121 = vector.broadcast %cst_47 : f32 to vector<8x128xf32>
    %122 = arith.subf %121, %115 : vector<8x128xf32>
    %123 = arith.mulf %122, %120 : vector<8x128xf32>
    %124 = arith.mulf %115, %63 : vector<8x128xf32>
    %125 = arith.addf %123, %124 : vector<8x128xf32>
    %126 = vector.extract_strided_slice %20 {offsets = [8, 0], sizes = [8, 384], strides = [1, 1]} : vector<64x384xf32> to vector<8x384xf32>
    %127 = arith.truncf %94 : vector<8x128xf32> to vector<8x128xbf16>
    %cst_48 = arith.constant dense<0.000000e+00> : vector<8x384xf32>
    %128 = tpu.matmul %127, %24, %cst_48 {dimension_numbers = #tpu.dot_dimension_numbers<[1], [0], [0], [1], [0, 0, 1, 1], [], []>} : vector<8x128xbf16>, vector<128x384xbf16>, vector<8x384xf32> -> vector<8x384xf32>
    %129 = vector.broadcast %28 : vector<1x384xf32> to vector<8x384xf32>
    %130 = arith.addf %128, %129 : vector<8x384xf32>
    %131 = vector.extract_strided_slice %126 {offsets = [0, 0], sizes = [8, 128], strides = [1, 1]} : vector<8x384xf32> to vector<8x128xf32>
    %132 = vector.extract_strided_slice %130 {offsets = [0, 0], sizes = [8, 128], strides = [1, 1]} : vector<8x384xf32> to vector<8x128xf32>
    %133 = arith.addf %131, %132 : vector<8x128xf32>
    %134 = arith.negf %133 : vector<8x128xf32>
    %135 = math.exp %134 : vector<8x128xf32>
    %cst_49 = arith.constant 1.000000e+00 : f32
    %136 = vector.broadcast %cst_49 : f32 to vector<8x128xf32>
    %137 = arith.addf %136, %135 : vector<8x128xf32>
    %138 = arith.divf %136, %137 : vector<8x128xf32>
    %139 = vector.extract_strided_slice %126 {offsets = [0, 128], sizes = [8, 128], strides = [1, 1]} : vector<8x384xf32> to vector<8x128xf32>
    %140 = vector.extract_strided_slice %130 {offsets = [0, 128], sizes = [8, 128], strides = [1, 1]} : vector<8x384xf32> to vector<8x128xf32>
    %141 = arith.addf %139, %140 : vector<8x128xf32>
    %142 = arith.negf %141 : vector<8x128xf32>
    %143 = math.exp %142 : vector<8x128xf32>
    %cst_50 = arith.constant 1.000000e+00 : f32
    %144 = vector.broadcast %cst_50 : f32 to vector<8x128xf32>
    %145 = arith.addf %144, %143 : vector<8x128xf32>
    %146 = arith.divf %144, %145 : vector<8x128xf32>
    %147 = vector.extract_strided_slice %126 {offsets = [0, 256], sizes = [8, 128], strides = [1, 1]} : vector<8x384xf32> to vector<8x128xf32>
    %148 = vector.extract_strided_slice %130 {offsets = [0, 256], sizes = [8, 128], strides = [1, 1]} : vector<8x384xf32> to vector<8x128xf32>
    %149 = arith.mulf %138, %148 : vector<8x128xf32>
    %150 = arith.addf %147, %149 : vector<8x128xf32>
    %151 = math.tanh %150 : vector<8x128xf32>
    %cst_51 = arith.constant 1.000000e+00 : f32
    %152 = vector.broadcast %cst_51 : f32 to vector<8x128xf32>
    %153 = arith.subf %152, %146 : vector<8x128xf32>
    %154 = arith.mulf %153, %151 : vector<8x128xf32>
    %155 = arith.mulf %146, %94 : vector<8x128xf32>
    %156 = arith.addf %154, %155 : vector<8x128xf32>
    %157 = vector.extract_strided_slice %11 {offsets = [16, 0], sizes = [8, 384], strides = [1, 1]} : vector<64x384xf32> to vector<8x384xf32>
    %158 = arith.truncf %125 : vector<8x128xf32> to vector<8x128xbf16>
    %cst_52 = arith.constant dense<0.000000e+00> : vector<8x384xf32>
    %159 = tpu.matmul %158, %22, %cst_52 {dimension_numbers = #tpu.dot_dimension_numbers<[1], [0], [0], [1], [0, 0, 1, 1], [], []>} : vector<8x128xbf16>, vector<128x384xbf16>, vector<8x384xf32> -> vector<8x384xf32>
    %160 = vector.broadcast %26 : vector<1x384xf32> to vector<8x384xf32>
    %161 = arith.addf %159, %160 : vector<8x384xf32>
    %162 = vector.extract_strided_slice %157 {offsets = [0, 0], sizes = [8, 128], strides = [1, 1]} : vector<8x384xf32> to vector<8x128xf32>
    %163 = vector.extract_strided_slice %161 {offsets = [0, 0], sizes = [8, 128], strides = [1, 1]} : vector<8x384xf32> to vector<8x128xf32>
    %164 = arith.addf %162, %163 : vector<8x128xf32>
    %165 = arith.negf %164 : vector<8x128xf32>
    %166 = math.exp %165 : vector<8x128xf32>
    %cst_53 = arith.constant 1.000000e+00 : f32
    %167 = vector.broadcast %cst_53 : f32 to vector<8x128xf32>
    %168 = arith.addf %167, %166 : vector<8x128xf32>
    %169 = arith.divf %167, %168 : vector<8x128xf32>
    %170 = vector.extract_strided_slice %157 {offsets = [0, 128], sizes = [8, 128], strides = [1, 1]} : vector<8x384xf32> to vector<8x128xf32>
    %171 = vector.extract_strided_slice %161 {offsets = [0, 128], sizes = [8, 128], strides = [1, 1]} : vector<8x384xf32> to vector<8x128xf32>
    %172 = arith.addf %170, %171 : vector<8x128xf32>
    %173 = arith.negf %172 : vector<8x128xf32>
    %174 = math.exp %173 : vector<8x128xf32>
    %cst_54 = arith.constant 1.000000e+00 : f32
    %175 = vector.broadcast %cst_54 : f32 to vector<8x128xf32>
    %176 = arith.addf %175, %174 : vector<8x128xf32>
    %177 = arith.divf %175, %176 : vector<8x128xf32>
    %178 = vector.extract_strided_slice %157 {offsets = [0, 256], sizes = [8, 128], strides = [1, 1]} : vector<8x384xf32> to vector<8x128xf32>
    %179 = vector.extract_strided_slice %161 {offsets = [0, 256], sizes = [8, 128], strides = [1, 1]} : vector<8x384xf32> to vector<8x128xf32>
    %180 = arith.mulf %169, %179 : vector<8x128xf32>
    %181 = arith.addf %178, %180 : vector<8x128xf32>
    %182 = math.tanh %181 : vector<8x128xf32>
    %cst_55 = arith.constant 1.000000e+00 : f32
    %183 = vector.broadcast %cst_55 : f32 to vector<8x128xf32>
    %184 = arith.subf %183, %177 : vector<8x128xf32>
    %185 = arith.mulf %184, %182 : vector<8x128xf32>
    %186 = arith.mulf %177, %125 : vector<8x128xf32>
    %187 = arith.addf %185, %186 : vector<8x128xf32>
    %188 = vector.extract_strided_slice %20 {offsets = [16, 0], sizes = [8, 384], strides = [1, 1]} : vector<64x384xf32> to vector<8x384xf32>
    %189 = arith.truncf %156 : vector<8x128xf32> to vector<8x128xbf16>
    %cst_56 = arith.constant dense<0.000000e+00> : vector<8x384xf32>
    %190 = tpu.matmul %189, %24, %cst_56 {dimension_numbers = #tpu.dot_dimension_numbers<[1], [0], [0], [1], [0, 0, 1, 1], [], []>} : vector<8x128xbf16>, vector<128x384xbf16>, vector<8x384xf32> -> vector<8x384xf32>
    %191 = vector.broadcast %28 : vector<1x384xf32> to vector<8x384xf32>
    %192 = arith.addf %190, %191 : vector<8x384xf32>
    %193 = vector.extract_strided_slice %188 {offsets = [0, 0], sizes = [8, 128], strides = [1, 1]} : vector<8x384xf32> to vector<8x128xf32>
    %194 = vector.extract_strided_slice %192 {offsets = [0, 0], sizes = [8, 128], strides = [1, 1]} : vector<8x384xf32> to vector<8x128xf32>
    %195 = arith.addf %193, %194 : vector<8x128xf32>
    %196 = arith.negf %195 : vector<8x128xf32>
    %197 = math.exp %196 : vector<8x128xf32>
    %cst_57 = arith.constant 1.000000e+00 : f32
    %198 = vector.broadcast %cst_57 : f32 to vector<8x128xf32>
    %199 = arith.addf %198, %197 : vector<8x128xf32>
    %200 = arith.divf %198, %199 : vector<8x128xf32>
    %201 = vector.extract_strided_slice %188 {offsets = [0, 128], sizes = [8, 128], strides = [1, 1]} : vector<8x384xf32> to vector<8x128xf32>
    %202 = vector.extract_strided_slice %192 {offsets = [0, 128], sizes = [8, 128], strides = [1, 1]} : vector<8x384xf32> to vector<8x128xf32>
    %203 = arith.addf %201, %202 : vector<8x128xf32>
    %204 = arith.negf %203 : vector<8x128xf32>
    %205 = math.exp %204 : vector<8x128xf32>
    %cst_58 = arith.constant 1.000000e+00 : f32
    %206 = vector.broadcast %cst_58 : f32 to vector<8x128xf32>
    %207 = arith.addf %206, %205 : vector<8x128xf32>
    %208 = arith.divf %206, %207 : vector<8x128xf32>
    %209 = vector.extract_strided_slice %188 {offsets = [0, 256], sizes = [8, 128], strides = [1, 1]} : vector<8x384xf32> to vector<8x128xf32>
    %210 = vector.extract_strided_slice %192 {offsets = [0, 256], sizes = [8, 128], strides = [1, 1]} : vector<8x384xf32> to vector<8x128xf32>
    %211 = arith.mulf %200, %210 : vector<8x128xf32>
    %212 = arith.addf %209, %211 : vector<8x128xf32>
    %213 = math.tanh %212 : vector<8x128xf32>
    %cst_59 = arith.constant 1.000000e+00 : f32
    %214 = vector.broadcast %cst_59 : f32 to vector<8x128xf32>
    %215 = arith.subf %214, %208 : vector<8x128xf32>
    %216 = arith.mulf %215, %213 : vector<8x128xf32>
    %217 = arith.mulf %208, %156 : vector<8x128xf32>
    %218 = arith.addf %216, %217 : vector<8x128xf32>
    %219 = vector.extract_strided_slice %11 {offsets = [24, 0], sizes = [8, 384], strides = [1, 1]} : vector<64x384xf32> to vector<8x384xf32>
    %220 = arith.truncf %187 : vector<8x128xf32> to vector<8x128xbf16>
    %cst_60 = arith.constant dense<0.000000e+00> : vector<8x384xf32>
    %221 = tpu.matmul %220, %22, %cst_60 {dimension_numbers = #tpu.dot_dimension_numbers<[1], [0], [0], [1], [0, 0, 1, 1], [], []>} : vector<8x128xbf16>, vector<128x384xbf16>, vector<8x384xf32> -> vector<8x384xf32>
    %222 = vector.broadcast %26 : vector<1x384xf32> to vector<8x384xf32>
    %223 = arith.addf %221, %222 : vector<8x384xf32>
    %224 = vector.extract_strided_slice %219 {offsets = [0, 0], sizes = [8, 128], strides = [1, 1]} : vector<8x384xf32> to vector<8x128xf32>
    %225 = vector.extract_strided_slice %223 {offsets = [0, 0], sizes = [8, 128], strides = [1, 1]} : vector<8x384xf32> to vector<8x128xf32>
    %226 = arith.addf %224, %225 : vector<8x128xf32>
    %227 = arith.negf %226 : vector<8x128xf32>
    %228 = math.exp %227 : vector<8x128xf32>
    %cst_61 = arith.constant 1.000000e+00 : f32
    %229 = vector.broadcast %cst_61 : f32 to vector<8x128xf32>
    %230 = arith.addf %229, %228 : vector<8x128xf32>
    %231 = arith.divf %229, %230 : vector<8x128xf32>
    %232 = vector.extract_strided_slice %219 {offsets = [0, 128], sizes = [8, 128], strides = [1, 1]} : vector<8x384xf32> to vector<8x128xf32>
    %233 = vector.extract_strided_slice %223 {offsets = [0, 128], sizes = [8, 128], strides = [1, 1]} : vector<8x384xf32> to vector<8x128xf32>
    %234 = arith.addf %232, %233 : vector<8x128xf32>
    %235 = arith.negf %234 : vector<8x128xf32>
    %236 = math.exp %235 : vector<8x128xf32>
    %cst_62 = arith.constant 1.000000e+00 : f32
    %237 = vector.broadcast %cst_62 : f32 to vector<8x128xf32>
    %238 = arith.addf %237, %236 : vector<8x128xf32>
    %239 = arith.divf %237, %238 : vector<8x128xf32>
    %240 = vector.extract_strided_slice %219 {offsets = [0, 256], sizes = [8, 128], strides = [1, 1]} : vector<8x384xf32> to vector<8x128xf32>
    %241 = vector.extract_strided_slice %223 {offsets = [0, 256], sizes = [8, 128], strides = [1, 1]} : vector<8x384xf32> to vector<8x128xf32>
    %242 = arith.mulf %231, %241 : vector<8x128xf32>
    %243 = arith.addf %240, %242 : vector<8x128xf32>
    %244 = math.tanh %243 : vector<8x128xf32>
    %cst_63 = arith.constant 1.000000e+00 : f32
    %245 = vector.broadcast %cst_63 : f32 to vector<8x128xf32>
    %246 = arith.subf %245, %239 : vector<8x128xf32>
    %247 = arith.mulf %246, %244 : vector<8x128xf32>
    %248 = arith.mulf %239, %187 : vector<8x128xf32>
    %249 = arith.addf %247, %248 : vector<8x128xf32>
    %250 = vector.extract_strided_slice %20 {offsets = [24, 0], sizes = [8, 384], strides = [1, 1]} : vector<64x384xf32> to vector<8x384xf32>
    %251 = arith.truncf %218 : vector<8x128xf32> to vector<8x128xbf16>
    %cst_64 = arith.constant dense<0.000000e+00> : vector<8x384xf32>
    %252 = tpu.matmul %251, %24, %cst_64 {dimension_numbers = #tpu.dot_dimension_numbers<[1], [0], [0], [1], [0, 0, 1, 1], [], []>} : vector<8x128xbf16>, vector<128x384xbf16>, vector<8x384xf32> -> vector<8x384xf32>
    %253 = vector.broadcast %28 : vector<1x384xf32> to vector<8x384xf32>
    %254 = arith.addf %252, %253 : vector<8x384xf32>
    %255 = vector.extract_strided_slice %250 {offsets = [0, 0], sizes = [8, 128], strides = [1, 1]} : vector<8x384xf32> to vector<8x128xf32>
    %256 = vector.extract_strided_slice %254 {offsets = [0, 0], sizes = [8, 128], strides = [1, 1]} : vector<8x384xf32> to vector<8x128xf32>
    %257 = arith.addf %255, %256 : vector<8x128xf32>
    %258 = arith.negf %257 : vector<8x128xf32>
    %259 = math.exp %258 : vector<8x128xf32>
    %cst_65 = arith.constant 1.000000e+00 : f32
    %260 = vector.broadcast %cst_65 : f32 to vector<8x128xf32>
    %261 = arith.addf %260, %259 : vector<8x128xf32>
    %262 = arith.divf %260, %261 : vector<8x128xf32>
    %263 = vector.extract_strided_slice %250 {offsets = [0, 128], sizes = [8, 128], strides = [1, 1]} : vector<8x384xf32> to vector<8x128xf32>
    %264 = vector.extract_strided_slice %254 {offsets = [0, 128], sizes = [8, 128], strides = [1, 1]} : vector<8x384xf32> to vector<8x128xf32>
    %265 = arith.addf %263, %264 : vector<8x128xf32>
    %266 = arith.negf %265 : vector<8x128xf32>
    %267 = math.exp %266 : vector<8x128xf32>
    %cst_66 = arith.constant 1.000000e+00 : f32
    %268 = vector.broadcast %cst_66 : f32 to vector<8x128xf32>
    %269 = arith.addf %268, %267 : vector<8x128xf32>
    %270 = arith.divf %268, %269 : vector<8x128xf32>
    %271 = vector.extract_strided_slice %250 {offsets = [0, 256], sizes = [8, 128], strides = [1, 1]} : vector<8x384xf32> to vector<8x128xf32>
    %272 = vector.extract_strided_slice %254 {offsets = [0, 256], sizes = [8, 128], strides = [1, 1]} : vector<8x384xf32> to vector<8x128xf32>
    %273 = arith.mulf %262, %272 : vector<8x128xf32>
    %274 = arith.addf %271, %273 : vector<8x128xf32>
    %275 = math.tanh %274 : vector<8x128xf32>
    %cst_67 = arith.constant 1.000000e+00 : f32
    %276 = vector.broadcast %cst_67 : f32 to vector<8x128xf32>
    %277 = arith.subf %276, %270 : vector<8x128xf32>
    %278 = arith.mulf %277, %275 : vector<8x128xf32>
    %279 = arith.mulf %270, %218 : vector<8x128xf32>
    %280 = arith.addf %278, %279 : vector<8x128xf32>
    %281 = vector.extract_strided_slice %11 {offsets = [32, 0], sizes = [8, 384], strides = [1, 1]} : vector<64x384xf32> to vector<8x384xf32>
    %282 = arith.truncf %249 : vector<8x128xf32> to vector<8x128xbf16>
    %cst_68 = arith.constant dense<0.000000e+00> : vector<8x384xf32>
    %283 = tpu.matmul %282, %22, %cst_68 {dimension_numbers = #tpu.dot_dimension_numbers<[1], [0], [0], [1], [0, 0, 1, 1], [], []>} : vector<8x128xbf16>, vector<128x384xbf16>, vector<8x384xf32> -> vector<8x384xf32>
    %284 = vector.broadcast %26 : vector<1x384xf32> to vector<8x384xf32>
    %285 = arith.addf %283, %284 : vector<8x384xf32>
    %286 = vector.extract_strided_slice %281 {offsets = [0, 0], sizes = [8, 128], strides = [1, 1]} : vector<8x384xf32> to vector<8x128xf32>
    %287 = vector.extract_strided_slice %285 {offsets = [0, 0], sizes = [8, 128], strides = [1, 1]} : vector<8x384xf32> to vector<8x128xf32>
    %288 = arith.addf %286, %287 : vector<8x128xf32>
    %289 = arith.negf %288 : vector<8x128xf32>
    %290 = math.exp %289 : vector<8x128xf32>
    %cst_69 = arith.constant 1.000000e+00 : f32
    %291 = vector.broadcast %cst_69 : f32 to vector<8x128xf32>
    %292 = arith.addf %291, %290 : vector<8x128xf32>
    %293 = arith.divf %291, %292 : vector<8x128xf32>
    %294 = vector.extract_strided_slice %281 {offsets = [0, 128], sizes = [8, 128], strides = [1, 1]} : vector<8x384xf32> to vector<8x128xf32>
    %295 = vector.extract_strided_slice %285 {offsets = [0, 128], sizes = [8, 128], strides = [1, 1]} : vector<8x384xf32> to vector<8x128xf32>
    %296 = arith.addf %294, %295 : vector<8x128xf32>
    %297 = arith.negf %296 : vector<8x128xf32>
    %298 = math.exp %297 : vector<8x128xf32>
    %cst_70 = arith.constant 1.000000e+00 : f32
    %299 = vector.broadcast %cst_70 : f32 to vector<8x128xf32>
    %300 = arith.addf %299, %298 : vector<8x128xf32>
    %301 = arith.divf %299, %300 : vector<8x128xf32>
    %302 = vector.extract_strided_slice %281 {offsets = [0, 256], sizes = [8, 128], strides = [1, 1]} : vector<8x384xf32> to vector<8x128xf32>
    %303 = vector.extract_strided_slice %285 {offsets = [0, 256], sizes = [8, 128], strides = [1, 1]} : vector<8x384xf32> to vector<8x128xf32>
    %304 = arith.mulf %293, %303 : vector<8x128xf32>
    %305 = arith.addf %302, %304 : vector<8x128xf32>
    %306 = math.tanh %305 : vector<8x128xf32>
    %cst_71 = arith.constant 1.000000e+00 : f32
    %307 = vector.broadcast %cst_71 : f32 to vector<8x128xf32>
    %308 = arith.subf %307, %301 : vector<8x128xf32>
    %309 = arith.mulf %308, %306 : vector<8x128xf32>
    %310 = arith.mulf %301, %249 : vector<8x128xf32>
    %311 = arith.addf %309, %310 : vector<8x128xf32>
    %312 = vector.extract_strided_slice %20 {offsets = [32, 0], sizes = [8, 384], strides = [1, 1]} : vector<64x384xf32> to vector<8x384xf32>
    %313 = arith.truncf %280 : vector<8x128xf32> to vector<8x128xbf16>
    %cst_72 = arith.constant dense<0.000000e+00> : vector<8x384xf32>
    %314 = tpu.matmul %313, %24, %cst_72 {dimension_numbers = #tpu.dot_dimension_numbers<[1], [0], [0], [1], [0, 0, 1, 1], [], []>} : vector<8x128xbf16>, vector<128x384xbf16>, vector<8x384xf32> -> vector<8x384xf32>
    %315 = vector.broadcast %28 : vector<1x384xf32> to vector<8x384xf32>
    %316 = arith.addf %314, %315 : vector<8x384xf32>
    %317 = vector.extract_strided_slice %312 {offsets = [0, 0], sizes = [8, 128], strides = [1, 1]} : vector<8x384xf32> to vector<8x128xf32>
    %318 = vector.extract_strided_slice %316 {offsets = [0, 0], sizes = [8, 128], strides = [1, 1]} : vector<8x384xf32> to vector<8x128xf32>
    %319 = arith.addf %317, %318 : vector<8x128xf32>
    %320 = arith.negf %319 : vector<8x128xf32>
    %321 = math.exp %320 : vector<8x128xf32>
    %cst_73 = arith.constant 1.000000e+00 : f32
    %322 = vector.broadcast %cst_73 : f32 to vector<8x128xf32>
    %323 = arith.addf %322, %321 : vector<8x128xf32>
    %324 = arith.divf %322, %323 : vector<8x128xf32>
    %325 = vector.extract_strided_slice %312 {offsets = [0, 128], sizes = [8, 128], strides = [1, 1]} : vector<8x384xf32> to vector<8x128xf32>
    %326 = vector.extract_strided_slice %316 {offsets = [0, 128], sizes = [8, 128], strides = [1, 1]} : vector<8x384xf32> to vector<8x128xf32>
    %327 = arith.addf %325, %326 : vector<8x128xf32>
    %328 = arith.negf %327 : vector<8x128xf32>
    %329 = math.exp %328 : vector<8x128xf32>
    %cst_74 = arith.constant 1.000000e+00 : f32
    %330 = vector.broadcast %cst_74 : f32 to vector<8x128xf32>
    %331 = arith.addf %330, %329 : vector<8x128xf32>
    %332 = arith.divf %330, %331 : vector<8x128xf32>
    %333 = vector.extract_strided_slice %312 {offsets = [0, 256], sizes = [8, 128], strides = [1, 1]} : vector<8x384xf32> to vector<8x128xf32>
    %334 = vector.extract_strided_slice %316 {offsets = [0, 256], sizes = [8, 128], strides = [1, 1]} : vector<8x384xf32> to vector<8x128xf32>
    %335 = arith.mulf %324, %334 : vector<8x128xf32>
    %336 = arith.addf %333, %335 : vector<8x128xf32>
    %337 = math.tanh %336 : vector<8x128xf32>
    %cst_75 = arith.constant 1.000000e+00 : f32
    %338 = vector.broadcast %cst_75 : f32 to vector<8x128xf32>
    %339 = arith.subf %338, %332 : vector<8x128xf32>
    %340 = arith.mulf %339, %337 : vector<8x128xf32>
    %341 = arith.mulf %332, %280 : vector<8x128xf32>
    %342 = arith.addf %340, %341 : vector<8x128xf32>
    %343 = vector.extract_strided_slice %11 {offsets = [40, 0], sizes = [8, 384], strides = [1, 1]} : vector<64x384xf32> to vector<8x384xf32>
    %344 = arith.truncf %311 : vector<8x128xf32> to vector<8x128xbf16>
    %cst_76 = arith.constant dense<0.000000e+00> : vector<8x384xf32>
    %345 = tpu.matmul %344, %22, %cst_76 {dimension_numbers = #tpu.dot_dimension_numbers<[1], [0], [0], [1], [0, 0, 1, 1], [], []>} : vector<8x128xbf16>, vector<128x384xbf16>, vector<8x384xf32> -> vector<8x384xf32>
    %346 = vector.broadcast %26 : vector<1x384xf32> to vector<8x384xf32>
    %347 = arith.addf %345, %346 : vector<8x384xf32>
    %348 = vector.extract_strided_slice %343 {offsets = [0, 0], sizes = [8, 128], strides = [1, 1]} : vector<8x384xf32> to vector<8x128xf32>
    %349 = vector.extract_strided_slice %347 {offsets = [0, 0], sizes = [8, 128], strides = [1, 1]} : vector<8x384xf32> to vector<8x128xf32>
    %350 = arith.addf %348, %349 : vector<8x128xf32>
    %351 = arith.negf %350 : vector<8x128xf32>
    %352 = math.exp %351 : vector<8x128xf32>
    %cst_77 = arith.constant 1.000000e+00 : f32
    %353 = vector.broadcast %cst_77 : f32 to vector<8x128xf32>
    %354 = arith.addf %353, %352 : vector<8x128xf32>
    %355 = arith.divf %353, %354 : vector<8x128xf32>
    %356 = vector.extract_strided_slice %343 {offsets = [0, 128], sizes = [8, 128], strides = [1, 1]} : vector<8x384xf32> to vector<8x128xf32>
    %357 = vector.extract_strided_slice %347 {offsets = [0, 128], sizes = [8, 128], strides = [1, 1]} : vector<8x384xf32> to vector<8x128xf32>
    %358 = arith.addf %356, %357 : vector<8x128xf32>
    %359 = arith.negf %358 : vector<8x128xf32>
    %360 = math.exp %359 : vector<8x128xf32>
    %cst_78 = arith.constant 1.000000e+00 : f32
    %361 = vector.broadcast %cst_78 : f32 to vector<8x128xf32>
    %362 = arith.addf %361, %360 : vector<8x128xf32>
    %363 = arith.divf %361, %362 : vector<8x128xf32>
    %364 = vector.extract_strided_slice %343 {offsets = [0, 256], sizes = [8, 128], strides = [1, 1]} : vector<8x384xf32> to vector<8x128xf32>
    %365 = vector.extract_strided_slice %347 {offsets = [0, 256], sizes = [8, 128], strides = [1, 1]} : vector<8x384xf32> to vector<8x128xf32>
    %366 = arith.mulf %355, %365 : vector<8x128xf32>
    %367 = arith.addf %364, %366 : vector<8x128xf32>
    %368 = math.tanh %367 : vector<8x128xf32>
    %cst_79 = arith.constant 1.000000e+00 : f32
    %369 = vector.broadcast %cst_79 : f32 to vector<8x128xf32>
    %370 = arith.subf %369, %363 : vector<8x128xf32>
    %371 = arith.mulf %370, %368 : vector<8x128xf32>
    %372 = arith.mulf %363, %311 : vector<8x128xf32>
    %373 = arith.addf %371, %372 : vector<8x128xf32>
    %374 = vector.extract_strided_slice %20 {offsets = [40, 0], sizes = [8, 384], strides = [1, 1]} : vector<64x384xf32> to vector<8x384xf32>
    %375 = arith.truncf %342 : vector<8x128xf32> to vector<8x128xbf16>
    %cst_80 = arith.constant dense<0.000000e+00> : vector<8x384xf32>
    %376 = tpu.matmul %375, %24, %cst_80 {dimension_numbers = #tpu.dot_dimension_numbers<[1], [0], [0], [1], [0, 0, 1, 1], [], []>} : vector<8x128xbf16>, vector<128x384xbf16>, vector<8x384xf32> -> vector<8x384xf32>
    %377 = vector.broadcast %28 : vector<1x384xf32> to vector<8x384xf32>
    %378 = arith.addf %376, %377 : vector<8x384xf32>
    %379 = vector.extract_strided_slice %374 {offsets = [0, 0], sizes = [8, 128], strides = [1, 1]} : vector<8x384xf32> to vector<8x128xf32>
    %380 = vector.extract_strided_slice %378 {offsets = [0, 0], sizes = [8, 128], strides = [1, 1]} : vector<8x384xf32> to vector<8x128xf32>
    %381 = arith.addf %379, %380 : vector<8x128xf32>
    %382 = arith.negf %381 : vector<8x128xf32>
    %383 = math.exp %382 : vector<8x128xf32>
    %cst_81 = arith.constant 1.000000e+00 : f32
    %384 = vector.broadcast %cst_81 : f32 to vector<8x128xf32>
    %385 = arith.addf %384, %383 : vector<8x128xf32>
    %386 = arith.divf %384, %385 : vector<8x128xf32>
    %387 = vector.extract_strided_slice %374 {offsets = [0, 128], sizes = [8, 128], strides = [1, 1]} : vector<8x384xf32> to vector<8x128xf32>
    %388 = vector.extract_strided_slice %378 {offsets = [0, 128], sizes = [8, 128], strides = [1, 1]} : vector<8x384xf32> to vector<8x128xf32>
    %389 = arith.addf %387, %388 : vector<8x128xf32>
    %390 = arith.negf %389 : vector<8x128xf32>
    %391 = math.exp %390 : vector<8x128xf32>
    %cst_82 = arith.constant 1.000000e+00 : f32
    %392 = vector.broadcast %cst_82 : f32 to vector<8x128xf32>
    %393 = arith.addf %392, %391 : vector<8x128xf32>
    %394 = arith.divf %392, %393 : vector<8x128xf32>
    %395 = vector.extract_strided_slice %374 {offsets = [0, 256], sizes = [8, 128], strides = [1, 1]} : vector<8x384xf32> to vector<8x128xf32>
    %396 = vector.extract_strided_slice %378 {offsets = [0, 256], sizes = [8, 128], strides = [1, 1]} : vector<8x384xf32> to vector<8x128xf32>
    %397 = arith.mulf %386, %396 : vector<8x128xf32>
    %398 = arith.addf %395, %397 : vector<8x128xf32>
    %399 = math.tanh %398 : vector<8x128xf32>
    %cst_83 = arith.constant 1.000000e+00 : f32
    %400 = vector.broadcast %cst_83 : f32 to vector<8x128xf32>
    %401 = arith.subf %400, %394 : vector<8x128xf32>
    %402 = arith.mulf %401, %399 : vector<8x128xf32>
    %403 = arith.mulf %394, %342 : vector<8x128xf32>
    %404 = arith.addf %402, %403 : vector<8x128xf32>
    %405 = vector.extract_strided_slice %11 {offsets = [48, 0], sizes = [8, 384], strides = [1, 1]} : vector<64x384xf32> to vector<8x384xf32>
    %406 = arith.truncf %373 : vector<8x128xf32> to vector<8x128xbf16>
    %cst_84 = arith.constant dense<0.000000e+00> : vector<8x384xf32>
    %407 = tpu.matmul %406, %22, %cst_84 {dimension_numbers = #tpu.dot_dimension_numbers<[1], [0], [0], [1], [0, 0, 1, 1], [], []>} : vector<8x128xbf16>, vector<128x384xbf16>, vector<8x384xf32> -> vector<8x384xf32>
    %408 = vector.broadcast %26 : vector<1x384xf32> to vector<8x384xf32>
    %409 = arith.addf %407, %408 : vector<8x384xf32>
    %410 = vector.extract_strided_slice %405 {offsets = [0, 0], sizes = [8, 128], strides = [1, 1]} : vector<8x384xf32> to vector<8x128xf32>
    %411 = vector.extract_strided_slice %409 {offsets = [0, 0], sizes = [8, 128], strides = [1, 1]} : vector<8x384xf32> to vector<8x128xf32>
    %412 = arith.addf %410, %411 : vector<8x128xf32>
    %413 = arith.negf %412 : vector<8x128xf32>
    %414 = math.exp %413 : vector<8x128xf32>
    %cst_85 = arith.constant 1.000000e+00 : f32
    %415 = vector.broadcast %cst_85 : f32 to vector<8x128xf32>
    %416 = arith.addf %415, %414 : vector<8x128xf32>
    %417 = arith.divf %415, %416 : vector<8x128xf32>
    %418 = vector.extract_strided_slice %405 {offsets = [0, 128], sizes = [8, 128], strides = [1, 1]} : vector<8x384xf32> to vector<8x128xf32>
    %419 = vector.extract_strided_slice %409 {offsets = [0, 128], sizes = [8, 128], strides = [1, 1]} : vector<8x384xf32> to vector<8x128xf32>
    %420 = arith.addf %418, %419 : vector<8x128xf32>
    %421 = arith.negf %420 : vector<8x128xf32>
    %422 = math.exp %421 : vector<8x128xf32>
    %cst_86 = arith.constant 1.000000e+00 : f32
    %423 = vector.broadcast %cst_86 : f32 to vector<8x128xf32>
    %424 = arith.addf %423, %422 : vector<8x128xf32>
    %425 = arith.divf %423, %424 : vector<8x128xf32>
    %426 = vector.extract_strided_slice %405 {offsets = [0, 256], sizes = [8, 128], strides = [1, 1]} : vector<8x384xf32> to vector<8x128xf32>
    %427 = vector.extract_strided_slice %409 {offsets = [0, 256], sizes = [8, 128], strides = [1, 1]} : vector<8x384xf32> to vector<8x128xf32>
    %428 = arith.mulf %417, %427 : vector<8x128xf32>
    %429 = arith.addf %426, %428 : vector<8x128xf32>
    %430 = math.tanh %429 : vector<8x128xf32>
    %cst_87 = arith.constant 1.000000e+00 : f32
    %431 = vector.broadcast %cst_87 : f32 to vector<8x128xf32>
    %432 = arith.subf %431, %425 : vector<8x128xf32>
    %433 = arith.mulf %432, %430 : vector<8x128xf32>
    %434 = arith.mulf %425, %373 : vector<8x128xf32>
    %435 = arith.addf %433, %434 : vector<8x128xf32>
    %436 = vector.extract_strided_slice %20 {offsets = [48, 0], sizes = [8, 384], strides = [1, 1]} : vector<64x384xf32> to vector<8x384xf32>
    %437 = arith.truncf %404 : vector<8x128xf32> to vector<8x128xbf16>
    %cst_88 = arith.constant dense<0.000000e+00> : vector<8x384xf32>
    %438 = tpu.matmul %437, %24, %cst_88 {dimension_numbers = #tpu.dot_dimension_numbers<[1], [0], [0], [1], [0, 0, 1, 1], [], []>} : vector<8x128xbf16>, vector<128x384xbf16>, vector<8x384xf32> -> vector<8x384xf32>
    %439 = vector.broadcast %28 : vector<1x384xf32> to vector<8x384xf32>
    %440 = arith.addf %438, %439 : vector<8x384xf32>
    %441 = vector.extract_strided_slice %436 {offsets = [0, 0], sizes = [8, 128], strides = [1, 1]} : vector<8x384xf32> to vector<8x128xf32>
    %442 = vector.extract_strided_slice %440 {offsets = [0, 0], sizes = [8, 128], strides = [1, 1]} : vector<8x384xf32> to vector<8x128xf32>
    %443 = arith.addf %441, %442 : vector<8x128xf32>
    %444 = arith.negf %443 : vector<8x128xf32>
    %445 = math.exp %444 : vector<8x128xf32>
    %cst_89 = arith.constant 1.000000e+00 : f32
    %446 = vector.broadcast %cst_89 : f32 to vector<8x128xf32>
    %447 = arith.addf %446, %445 : vector<8x128xf32>
    %448 = arith.divf %446, %447 : vector<8x128xf32>
    %449 = vector.extract_strided_slice %436 {offsets = [0, 128], sizes = [8, 128], strides = [1, 1]} : vector<8x384xf32> to vector<8x128xf32>
    %450 = vector.extract_strided_slice %440 {offsets = [0, 128], sizes = [8, 128], strides = [1, 1]} : vector<8x384xf32> to vector<8x128xf32>
    %451 = arith.addf %449, %450 : vector<8x128xf32>
    %452 = arith.negf %451 : vector<8x128xf32>
    %453 = math.exp %452 : vector<8x128xf32>
    %cst_90 = arith.constant 1.000000e+00 : f32
    %454 = vector.broadcast %cst_90 : f32 to vector<8x128xf32>
    %455 = arith.addf %454, %453 : vector<8x128xf32>
    %456 = arith.divf %454, %455 : vector<8x128xf32>
    %457 = vector.extract_strided_slice %436 {offsets = [0, 256], sizes = [8, 128], strides = [1, 1]} : vector<8x384xf32> to vector<8x128xf32>
    %458 = vector.extract_strided_slice %440 {offsets = [0, 256], sizes = [8, 128], strides = [1, 1]} : vector<8x384xf32> to vector<8x128xf32>
    %459 = arith.mulf %448, %458 : vector<8x128xf32>
    %460 = arith.addf %457, %459 : vector<8x128xf32>
    %461 = math.tanh %460 : vector<8x128xf32>
    %cst_91 = arith.constant 1.000000e+00 : f32
    %462 = vector.broadcast %cst_91 : f32 to vector<8x128xf32>
    %463 = arith.subf %462, %456 : vector<8x128xf32>
    %464 = arith.mulf %463, %461 : vector<8x128xf32>
    %465 = arith.mulf %456, %404 : vector<8x128xf32>
    %466 = arith.addf %464, %465 : vector<8x128xf32>
    %467 = vector.extract_strided_slice %11 {offsets = [56, 0], sizes = [8, 384], strides = [1, 1]} : vector<64x384xf32> to vector<8x384xf32>
    %468 = arith.truncf %435 : vector<8x128xf32> to vector<8x128xbf16>
    %cst_92 = arith.constant dense<0.000000e+00> : vector<8x384xf32>
    %469 = tpu.matmul %468, %22, %cst_92 {dimension_numbers = #tpu.dot_dimension_numbers<[1], [0], [0], [1], [0, 0, 1, 1], [], []>} : vector<8x128xbf16>, vector<128x384xbf16>, vector<8x384xf32> -> vector<8x384xf32>
    %470 = vector.broadcast %26 : vector<1x384xf32> to vector<8x384xf32>
    %471 = arith.addf %469, %470 : vector<8x384xf32>
    %472 = vector.extract_strided_slice %467 {offsets = [0, 0], sizes = [8, 128], strides = [1, 1]} : vector<8x384xf32> to vector<8x128xf32>
    %473 = vector.extract_strided_slice %471 {offsets = [0, 0], sizes = [8, 128], strides = [1, 1]} : vector<8x384xf32> to vector<8x128xf32>
    %474 = arith.addf %472, %473 : vector<8x128xf32>
    %475 = arith.negf %474 : vector<8x128xf32>
    %476 = math.exp %475 : vector<8x128xf32>
    %cst_93 = arith.constant 1.000000e+00 : f32
    %477 = vector.broadcast %cst_93 : f32 to vector<8x128xf32>
    %478 = arith.addf %477, %476 : vector<8x128xf32>
    %479 = arith.divf %477, %478 : vector<8x128xf32>
    %480 = vector.extract_strided_slice %467 {offsets = [0, 128], sizes = [8, 128], strides = [1, 1]} : vector<8x384xf32> to vector<8x128xf32>
    %481 = vector.extract_strided_slice %471 {offsets = [0, 128], sizes = [8, 128], strides = [1, 1]} : vector<8x384xf32> to vector<8x128xf32>
    %482 = arith.addf %480, %481 : vector<8x128xf32>
    %483 = arith.negf %482 : vector<8x128xf32>
    %484 = math.exp %483 : vector<8x128xf32>
    %cst_94 = arith.constant 1.000000e+00 : f32
    %485 = vector.broadcast %cst_94 : f32 to vector<8x128xf32>
    %486 = arith.addf %485, %484 : vector<8x128xf32>
    %487 = arith.divf %485, %486 : vector<8x128xf32>
    %488 = vector.extract_strided_slice %467 {offsets = [0, 256], sizes = [8, 128], strides = [1, 1]} : vector<8x384xf32> to vector<8x128xf32>
    %489 = vector.extract_strided_slice %471 {offsets = [0, 256], sizes = [8, 128], strides = [1, 1]} : vector<8x384xf32> to vector<8x128xf32>
    %490 = arith.mulf %479, %489 : vector<8x128xf32>
    %491 = arith.addf %488, %490 : vector<8x128xf32>
    %492 = math.tanh %491 : vector<8x128xf32>
    %cst_95 = arith.constant 1.000000e+00 : f32
    %493 = vector.broadcast %cst_95 : f32 to vector<8x128xf32>
    %494 = arith.subf %493, %487 : vector<8x128xf32>
    %495 = arith.mulf %494, %492 : vector<8x128xf32>
    %496 = arith.mulf %487, %435 : vector<8x128xf32>
    %497 = arith.addf %495, %496 : vector<8x128xf32>
    %498 = vector.extract_strided_slice %20 {offsets = [56, 0], sizes = [8, 384], strides = [1, 1]} : vector<64x384xf32> to vector<8x384xf32>
    %499 = arith.truncf %466 : vector<8x128xf32> to vector<8x128xbf16>
    %cst_96 = arith.constant dense<0.000000e+00> : vector<8x384xf32>
    %500 = tpu.matmul %499, %24, %cst_96 {dimension_numbers = #tpu.dot_dimension_numbers<[1], [0], [0], [1], [0, 0, 1, 1], [], []>} : vector<8x128xbf16>, vector<128x384xbf16>, vector<8x384xf32> -> vector<8x384xf32>
    %501 = vector.broadcast %28 : vector<1x384xf32> to vector<8x384xf32>
    %502 = arith.addf %500, %501 : vector<8x384xf32>
    %503 = vector.extract_strided_slice %498 {offsets = [0, 0], sizes = [8, 128], strides = [1, 1]} : vector<8x384xf32> to vector<8x128xf32>
    %504 = vector.extract_strided_slice %502 {offsets = [0, 0], sizes = [8, 128], strides = [1, 1]} : vector<8x384xf32> to vector<8x128xf32>
    %505 = arith.addf %503, %504 : vector<8x128xf32>
    %506 = arith.negf %505 : vector<8x128xf32>
    %507 = math.exp %506 : vector<8x128xf32>
    %cst_97 = arith.constant 1.000000e+00 : f32
    %508 = vector.broadcast %cst_97 : f32 to vector<8x128xf32>
    %509 = arith.addf %508, %507 : vector<8x128xf32>
    %510 = arith.divf %508, %509 : vector<8x128xf32>
    %511 = vector.extract_strided_slice %498 {offsets = [0, 128], sizes = [8, 128], strides = [1, 1]} : vector<8x384xf32> to vector<8x128xf32>
    %512 = vector.extract_strided_slice %502 {offsets = [0, 128], sizes = [8, 128], strides = [1, 1]} : vector<8x384xf32> to vector<8x128xf32>
    %513 = arith.addf %511, %512 : vector<8x128xf32>
    %514 = arith.negf %513 : vector<8x128xf32>
    %515 = math.exp %514 : vector<8x128xf32>
    %cst_98 = arith.constant 1.000000e+00 : f32
    %516 = vector.broadcast %cst_98 : f32 to vector<8x128xf32>
    %517 = arith.addf %516, %515 : vector<8x128xf32>
    %518 = arith.divf %516, %517 : vector<8x128xf32>
    %519 = vector.extract_strided_slice %498 {offsets = [0, 256], sizes = [8, 128], strides = [1, 1]} : vector<8x384xf32> to vector<8x128xf32>
    %520 = vector.extract_strided_slice %502 {offsets = [0, 256], sizes = [8, 128], strides = [1, 1]} : vector<8x384xf32> to vector<8x128xf32>
    %521 = arith.mulf %510, %520 : vector<8x128xf32>
    %522 = arith.addf %519, %521 : vector<8x128xf32>
    %523 = math.tanh %522 : vector<8x128xf32>
    %cst_99 = arith.constant 1.000000e+00 : f32
    %524 = vector.broadcast %cst_99 : f32 to vector<8x128xf32>
    %525 = arith.subf %524, %518 : vector<8x128xf32>
    %526 = arith.mulf %525, %523 : vector<8x128xf32>
    %527 = arith.mulf %518, %466 : vector<8x128xf32>
    %528 = arith.addf %526, %527 : vector<8x128xf32>
    %c0_100 = arith.constant 0 : index
    %c0_101 = arith.constant 0 : index
    %c0_102 = arith.constant 0 : index
    %529 = vector.load %arg7[%c0_100, %c0_101, %c0_102] : memref<2x8x128xf32, #tpu.memory_space<vmem>>, vector<1x8x128xf32>
    %530 = vector.shape_cast %529 : vector<1x8x128xf32> to vector<8x128xf32>
    %531 = vector.shape_cast %497 : vector<8x128xf32> to vector<1x8x128xf32>
    tpu.vector_store %arg7[%c0_100, %c0_101, %c0_102], %531 {strides = array<i32>} : memref<2x8x128xf32, #tpu.memory_space<vmem>>, vector<1x8x128xf32>,
    %c1_103 = arith.constant 1 : index
    %c0_104 = arith.constant 0 : index
    %c0_105 = arith.constant 0 : index
    %532 = vector.load %arg7[%c1_103, %c0_104, %c0_105] : memref<2x8x128xf32, #tpu.memory_space<vmem>>, vector<1x8x128xf32>
    %533 = vector.shape_cast %532 : vector<1x8x128xf32> to vector<8x128xf32>
    %534 = vector.shape_cast %528 : vector<8x128xf32> to vector<1x8x128xf32>
    tpu.vector_store %arg7[%c1_103, %c0_104, %c0_105], %534 {strides = array<i32>} : memref<2x8x128xf32, #tpu.memory_space<vmem>>, vector<1x8x128xf32>,
    %c0_i32_106 = arith.constant 0 : i32
    %535 = arith.cmpi eq, %arg0, %c0_i32_106 : i32
    %536 = arith.extui %535 : i1 to i32
    %c0_i32_107 = arith.constant 0 : i32
    %537 = arith.cmpi ne, %536, %c0_i32_107 : i32
    scf.if %537 {
      %c0_108 = arith.constant 0 : index
      %c0_109 = arith.constant 0 : index
      %c0_110 = arith.constant 0 : index
      %538 = vector.load %arg6[%c0_108, %c0_109, %c0_110] : memref<2x8x128xf32, #tpu.memory_space<vmem>>, vector<1x8x128xf32>
      %539 = vector.shape_cast %538 : vector<1x8x128xf32> to vector<8x128xf32>
      %540 = vector.shape_cast %497 : vector<8x128xf32> to vector<1x8x128xf32>
      tpu.vector_store %arg6[%c0_108, %c0_109, %c0_110], %540 {strides = array<i32>} : memref<2x8x128xf32, #tpu.memory_space<vmem>>, vector<1x8x128xf32>,
      %c1_111 = arith.constant 1 : index
      %c0_112 = arith.constant 0 : index
      %c0_113 = arith.constant 0 : index
      %541 = vector.load %arg6[%c1_111, %c0_112, %c0_113] : memref<2x8x128xf32, #tpu.memory_space<vmem>>, vector<1x8x128xf32>
      %542 = vector.shape_cast %541 : vector<1x8x128xf32> to vector<8x128xf32>
      %543 = vector.shape_cast %528 : vector<8x128xf32> to vector<1x8x128xf32>
      tpu.vector_store %arg6[%c1_111, %c0_112, %c0_113], %543 {strides = array<i32>} : memref<2x8x128xf32, #tpu.memory_space<vmem>>, vector<1x8x128xf32>,
    } else {
    }
    return
  }
  func.func @transform_0(%arg0: i32) -> (i32, i32, i32) {
    %c0_i32 = arith.constant 0 : i32
    %c0_i32_0 = arith.constant 0 : i32
    %c0_i32_1 = arith.constant 0 : i32
    return %c0_i32, %arg0, %c0_i32_0 : i32, i32, i32
  }
  func.func @transform_1(%arg0: i32) -> (i32, i32, i32) {
    %c0_i32 = arith.constant 0 : i32
    %c0_i32_0 = arith.constant 0 : i32
    %c0_i32_1 = arith.constant 0 : i32
    %c0_i32_2 = arith.constant 0 : i32
    return %c0_i32, %c0_i32_0, %c0_i32_1 : i32, i32, i32
  }
  func.func @transform_2(%arg0: i32) -> (i32, i32, i32) {
    %c0_i32 = arith.constant 0 : i32
    %c0_i32_0 = arith.constant 0 : i32
    %c0_i32_1 = arith.constant 0 : i32
    %c0_i32_2 = arith.constant 0 : i32
    return %c0_i32, %c0_i32_0, %c0_i32_1 : i32, i32, i32
  }
  func.func @transform_3(%arg0: i32) -> (i32, i32, i32) {
    %c0_i32 = arith.constant 0 : i32
    %c0_i32_0 = arith.constant 0 : i32
    %c0_i32_1 = arith.constant 0 : i32
    %c0_i32_2 = arith.constant 0 : i32
    return %c0_i32, %c0_i32_0, %c0_i32_1 : i32, i32, i32
  }
  func.func @transform_4(%arg0: i32) -> (i32, i32, i32) {
    %c0_i32 = arith.constant 0 : i32
    %c0_i32_0 = arith.constant 0 : i32
    %c0_i32_1 = arith.constant 0 : i32
    %c0_i32_2 = arith.constant 0 : i32
    return %c0_i32, %c0_i32_0, %c0_i32_1 : i32, i32, i32
  }
  func.func @transform_5(%arg0: i32) -> (i32, i32, i32) {
    %c0_i32 = arith.constant 0 : i32
    %c0_i32_0 = arith.constant 0 : i32
    %c0_i32_1 = arith.constant 0 : i32
    %c0_i32_2 = arith.constant 0 : i32
    return %c0_i32, %c0_i32_0, %c0_i32_1 : i32, i32, i32
  }
}

module attributes {stable_mosaic.version = 11 : i64} {
  func.func @_dec_rnn_kernel(%arg0: i32, %arg1: memref<7xi32, #tpu.memory_space<smem>>, %arg2: memref<8x8x1xi32, #tpu.memory_space<vmem>>, %arg3: memref<8x128xf32, #tpu.memory_space<vmem>>, %arg4: memref<128x384xbf16, #tpu.memory_space<vmem>>, %arg5: memref<128x384xbf16, #tpu.memory_space<vmem>>, %arg6: memref<1x384xf32, #tpu.memory_space<vmem>>, %arg7: memref<128x128xbf16, #tpu.memory_space<vmem>>, %arg8: memref<1x128xf32, #tpu.memory_space<vmem>>, %arg9: memref<1x8x128xf32, #tpu.memory_space<vmem>>, %arg10: memref<8x128xi32, #tpu.memory_space<vmem>>, %arg11: memref<8x128xf32, #tpu.memory_space<vmem>>, %arg12: memref<8x1xi32, #tpu.memory_space<vmem>>, %arg13: memref<8x128xi32, #tpu.memory_space<vmem>>) attributes {dimension_semantics = [#tpu.dimension_semantics<arbitrary>], iteration_bounds = array<i64: 7>, scalar_prefetch = 1 : i64, scratch_operands = 3 : i64, tpu.core_type = #tpu.core_type<tc>, window_params = [{pipeline_mode = #tpu.pipeline_mode<synchronous>, transform_indices = @transform_0, window_bounds = array<i64: 8, 8, 1>}, {pipeline_mode = #tpu.pipeline_mode<synchronous>, transform_indices = @transform_1, window_bounds = array<i64: 8, 128>}, {pipeline_mode = #tpu.pipeline_mode<synchronous>, transform_indices = @transform_2, window_bounds = array<i64: 128, 384>}, {pipeline_mode = #tpu.pipeline_mode<synchronous>, transform_indices = @transform_3, window_bounds = array<i64: 128, 384>}, {pipeline_mode = #tpu.pipeline_mode<synchronous>, transform_indices = @transform_4, window_bounds = array<i64: 1, 384>}, {pipeline_mode = #tpu.pipeline_mode<synchronous>, transform_indices = @transform_5, window_bounds = array<i64: 128, 128>}, {pipeline_mode = #tpu.pipeline_mode<synchronous>, transform_indices = @transform_6, window_bounds = array<i64: 1, 128>}, {transform_indices = @transform_7, window_bounds = array<i64: 1, 8, 128>}, {pipeline_mode = #tpu.pipeline_mode<synchronous>, transform_indices = @transform_8, window_bounds = array<i64: 8, 128>}]} {
    %c0_i32 = arith.constant 0 : i32
    %0 = arith.cmpi eq, %arg0, %c0_i32 : i32
    %1 = arith.extui %0 : i1 to i32
    %c0_i32_0 = arith.constant 0 : i32
    %2 = arith.cmpi ne, %1, %c0_i32_0 : i32
    scf.if %2 {
      %c0_41 = arith.constant 0 : index
      %c0_42 = arith.constant 0 : index
      %92 = vector.load %arg3[%c0_41, %c0_42] : memref<8x128xf32, #tpu.memory_space<vmem>>, vector<8x128xf32>
      %c0_43 = arith.constant 0 : index
      %c0_44 = arith.constant 0 : index
      %93 = vector.load %arg11[%c0_43, %c0_44] : memref<8x128xf32, #tpu.memory_space<vmem>>, vector<8x128xf32>
      tpu.vector_store %arg11[%c0_43, %c0_44], %92 {strides = array<i32>} : memref<8x128xf32, #tpu.memory_space<vmem>>, vector<8x128xf32>,
      %c0_i32_45 = arith.constant 0 : i32
      %94 = vector.broadcast %c0_i32_45 : i32 to vector<8x1xi32>
      %c0_46 = arith.constant 0 : index
      %c0_47 = arith.constant 0 : index
      %95 = vector.load %arg12[%c0_46, %c0_47] : memref<8x1xi32, #tpu.memory_space<vmem>>, vector<8x1xi32>
      tpu.vector_store %arg12[%c0_46, %c0_47], %94 {strides = array<i32>} : memref<8x1xi32, #tpu.memory_space<vmem>>, vector<8x1xi32>,
      %c0_i32_48 = arith.constant 0 : i32
      %96 = vector.broadcast %c0_i32_48 : i32 to vector<8x128xi32>
      %c0_49 = arith.constant 0 : index
      %c0_50 = arith.constant 0 : index
      %97 = vector.load %arg13[%c0_49, %c0_50] : memref<8x128xi32, #tpu.memory_space<vmem>>, vector<8x128xi32>
      tpu.vector_store %arg13[%c0_49, %c0_50], %96 {strides = array<i32>} : memref<8x128xi32, #tpu.memory_space<vmem>>, vector<8x128xi32>,
    } else {
    }
    %3 = arith.index_cast %arg0 : i32 to index
    %c0 = arith.constant 0 : index
    %c0_1 = arith.constant 0 : index
    %4 = vector.load %arg2[%3, %c0, %c0_1] : memref<8x8x1xi32, #tpu.memory_space<vmem>>, vector<1x8x1xi32>
    %5 = vector.shape_cast %4 : vector<1x8x1xi32> to vector<8x1xi32>
    %c1_i32 = arith.constant 1 : i32
    %6 = arith.subi %arg0, %c1_i32 : i32
    %c0_i32_2 = arith.constant 0 : i32
    %7 = arith.maxsi %6, %c0_i32_2 : i32
    %8 = arith.index_cast %7 : i32 to index
    %9 = memref.load %arg1[%8] : memref<7xi32, #tpu.memory_space<smem>>
    %c0_i32_3 = arith.constant 0 : i32
    %10 = arith.cmpi sgt, %arg0, %c0_i32_3 : i32
    %c0_i32_4 = arith.constant 0 : i32
    %11 = arith.select %10, %9, %c0_i32_4 : i32
    %c0_5 = arith.constant 0 : index
    %c0_6 = arith.constant 0 : index
    %12 = vector.load %arg12[%c0_5, %c0_6] : memref<8x1xi32, #tpu.memory_space<vmem>>, vector<8x1xi32>
    %13 = vector.broadcast %11 : i32 to vector<8x1xi32>
    %14 = arith.muli %13, %12 : vector<8x1xi32>
    %c1_i32_7 = arith.constant 1 : i32
    %15 = arith.subi %c1_i32_7, %11 : i32
    %16 = vector.broadcast %15 : i32 to vector<8x1xi32>
    %17 = arith.muli %16, %5 : vector<8x1xi32>
    %18 = arith.addi %14, %17 : vector<8x1xi32>
    %19 = tpu.iota {dimensions = array<i32: 1>} : vector<8x128xi32>
    %20 = vector.broadcast %18 : vector<8x1xi32> to vector<8x128xi32>
    %21 = arith.cmpi eq, %19, %20 : vector<8x128xi32>
    %cst = arith.constant 1.000000e+00 : f32
    %cst_8 = arith.constant 0.000000e+00 : f32
    %22 = vector.broadcast %cst : f32 to vector<8x128xf32>
    %23 = vector.broadcast %cst_8 : f32 to vector<8x128xf32>
    %24 = arith.select %21, %22, %23 : vector<8x128xi1>, vector<8x128xf32>
    %25 = arith.truncf %24 : vector<8x128xf32> to vector<8x128xbf16>
    %c0_9 = arith.constant 0 : index
    %c0_10 = arith.constant 0 : index
    %26 = vector.load %arg4[%c0_9, %c0_10] : memref<128x384xbf16, #tpu.memory_space<vmem>>, vector<128x384xbf16>
    %cst_11 = arith.constant dense<0.000000e+00> : vector<8x384xf32>
    %27 = tpu.matmul %25, %26, %cst_11 {dimension_numbers = #tpu.dot_dimension_numbers<[1], [0], [0], [1], [0, 0, 1, 1], [], []>} : vector<8x128xbf16>, vector<128x384xbf16>, vector<8x384xf32> -> vector<8x384xf32>
    %c0_12 = arith.constant 0 : index
    %c0_13 = arith.constant 0 : index
    %28 = vector.load %arg11[%c0_12, %c0_13] : memref<8x128xf32, #tpu.memory_space<vmem>>, vector<8x128xf32>
    %29 = arith.truncf %28 : vector<8x128xf32> to vector<8x128xbf16>
    %c0_14 = arith.constant 0 : index
    %c0_15 = arith.constant 0 : index
    %30 = vector.load %arg5[%c0_14, %c0_15] : memref<128x384xbf16, #tpu.memory_space<vmem>>, vector<128x384xbf16>
    %cst_16 = arith.constant dense<0.000000e+00> : vector<8x384xf32>
    %31 = tpu.matmul %29, %30, %cst_16 {dimension_numbers = #tpu.dot_dimension_numbers<[1], [0], [0], [1], [0, 0, 1, 1], [], []>} : vector<8x128xbf16>, vector<128x384xbf16>, vector<8x384xf32> -> vector<8x384xf32>
    %c0_17 = arith.constant 0 : index
    %c0_18 = arith.constant 0 : index
    %32 = vector.load %arg6[%c0_17, %c0_18] : memref<1x384xf32, #tpu.memory_space<vmem>>, vector<1x384xf32>
    %33 = vector.broadcast %32 : vector<1x384xf32> to vector<8x384xf32>
    %34 = arith.addf %31, %33 : vector<8x384xf32>
    %35 = vector.extract_strided_slice %27 {offsets = [0, 0], sizes = [8, 128], strides = [1, 1]} : vector<8x384xf32> to vector<8x128xf32>
    %36 = vector.extract_strided_slice %34 {offsets = [0, 0], sizes = [8, 128], strides = [1, 1]} : vector<8x384xf32> to vector<8x128xf32>
    %37 = arith.addf %35, %36 : vector<8x128xf32>
    %38 = arith.negf %37 : vector<8x128xf32>
    %39 = math.exp %38 : vector<8x128xf32>
    %cst_19 = arith.constant 1.000000e+00 : f32
    %40 = vector.broadcast %cst_19 : f32 to vector<8x128xf32>
    %41 = arith.addf %40, %39 : vector<8x128xf32>
    %42 = arith.divf %40, %41 : vector<8x128xf32>
    %43 = vector.extract_strided_slice %27 {offsets = [0, 128], sizes = [8, 128], strides = [1, 1]} : vector<8x384xf32> to vector<8x128xf32>
    %44 = vector.extract_strided_slice %34 {offsets = [0, 128], sizes = [8, 128], strides = [1, 1]} : vector<8x384xf32> to vector<8x128xf32>
    %45 = arith.addf %43, %44 : vector<8x128xf32>
    %46 = arith.negf %45 : vector<8x128xf32>
    %47 = math.exp %46 : vector<8x128xf32>
    %cst_20 = arith.constant 1.000000e+00 : f32
    %48 = vector.broadcast %cst_20 : f32 to vector<8x128xf32>
    %49 = arith.addf %48, %47 : vector<8x128xf32>
    %50 = arith.divf %48, %49 : vector<8x128xf32>
    %51 = vector.extract_strided_slice %27 {offsets = [0, 256], sizes = [8, 128], strides = [1, 1]} : vector<8x384xf32> to vector<8x128xf32>
    %52 = vector.extract_strided_slice %34 {offsets = [0, 256], sizes = [8, 128], strides = [1, 1]} : vector<8x384xf32> to vector<8x128xf32>
    %53 = arith.mulf %42, %52 : vector<8x128xf32>
    %54 = arith.addf %51, %53 : vector<8x128xf32>
    %55 = math.tanh %54 : vector<8x128xf32>
    %cst_21 = arith.constant 1.000000e+00 : f32
    %56 = vector.broadcast %cst_21 : f32 to vector<8x128xf32>
    %57 = arith.subf %56, %50 : vector<8x128xf32>
    %58 = arith.mulf %57, %55 : vector<8x128xf32>
    %59 = arith.mulf %50, %28 : vector<8x128xf32>
    %60 = arith.addf %58, %59 : vector<8x128xf32>
    %c0_22 = arith.constant 0 : index
    %c0_23 = arith.constant 0 : index
    %61 = vector.load %arg11[%c0_22, %c0_23] : memref<8x128xf32, #tpu.memory_space<vmem>>, vector<8x128xf32>
    tpu.vector_store %arg11[%c0_22, %c0_23], %60 {strides = array<i32>} : memref<8x128xf32, #tpu.memory_space<vmem>>, vector<8x128xf32>,
    %62 = arith.truncf %60 : vector<8x128xf32> to vector<8x128xbf16>
    %c0_24 = arith.constant 0 : index
    %c0_25 = arith.constant 0 : index
    %63 = vector.load %arg7[%c0_24, %c0_25] : memref<128x128xbf16, #tpu.memory_space<vmem>>, vector<128x128xbf16>
    %cst_26 = arith.constant dense<0.000000e+00> : vector<8x128xf32>
    %64 = tpu.matmul %62, %63, %cst_26 {dimension_numbers = #tpu.dot_dimension_numbers<[1], [0], [0], [1], [0, 0, 1, 1], [], []>} : vector<8x128xbf16>, vector<128x128xbf16>, vector<8x128xf32> -> vector<8x128xf32>
    %c0_27 = arith.constant 0 : index
    %c0_28 = arith.constant 0 : index
    %65 = vector.load %arg8[%c0_27, %c0_28] : memref<1x128xf32, #tpu.memory_space<vmem>>, vector<1x128xf32>
    %66 = vector.broadcast %65 : vector<1x128xf32> to vector<8x128xf32>
    %67 = arith.addf %64, %66 : vector<8x128xf32>
    %c0_29 = arith.constant 0 : index
    %c0_30 = arith.constant 0 : index
    %c0_31 = arith.constant 0 : index
    %68 = vector.load %arg9[%c0_29, %c0_30, %c0_31] : memref<1x8x128xf32, #tpu.memory_space<vmem>>, vector<1x8x128xf32>
    %69 = vector.shape_cast %68 : vector<1x8x128xf32> to vector<8x128xf32>
    %70 = vector.shape_cast %67 : vector<8x128xf32> to vector<1x8x128xf32>
    tpu.vector_store %arg9[%c0_29, %c0_30, %c0_31], %70 {strides = array<i32>} : memref<1x8x128xf32, #tpu.memory_space<vmem>>, vector<1x8x128xf32>,
    %71 = tpu.iota {dimensions = array<i32: 1>} : vector<8x128xi32>
    %cst_32 = arith.constant dense<0xFF800000> : vector<8xf32>
    %72 = vector.multi_reduction <maximumf>, %67, %cst_32 [1] : vector<8x128xf32> to vector<8xf32>
    %73 = vector.shape_cast %72 : vector<8xf32> to vector<8x1xf32>
    %74 = vector.broadcast %73 : vector<8x1xf32> to vector<8x128xf32>
    %75 = arith.cmpf oeq, %67, %74 : vector<8x128xf32>
    %c128_i32 = arith.constant 128 : i32
    %76 = vector.broadcast %c128_i32 : i32 to vector<8x128xi32>
    %77 = arith.select %75, %71, %76 : vector<8x128xi1>, vector<8x128xi32>
    %cst_33 = arith.constant dense<2147483647> : vector<8xi32>
    %78 = vector.multi_reduction <minsi>, %77, %cst_33 [1] : vector<8x128xi32> to vector<8xi32>
    %79 = vector.shape_cast %78 : vector<8xi32> to vector<8x1xi32>
    %c0_34 = arith.constant 0 : index
    %c0_35 = arith.constant 0 : index
    %80 = vector.load %arg12[%c0_34, %c0_35] : memref<8x1xi32, #tpu.memory_space<vmem>>, vector<8x1xi32>
    tpu.vector_store %arg12[%c0_34, %c0_35], %79 {strides = array<i32>} : memref<8x1xi32, #tpu.memory_space<vmem>>, vector<8x1xi32>,
    %81 = tpu.iota {dimensions = array<i32: 1>} : vector<8x128xi32>
    %82 = vector.broadcast %arg0 : i32 to vector<8x128xi32>
    %83 = arith.cmpi eq, %81, %82 : vector<8x128xi32>
    %c0_36 = arith.constant 0 : index
    %c0_37 = arith.constant 0 : index
    %84 = vector.load %arg13[%c0_36, %c0_37] : memref<8x128xi32, #tpu.memory_space<vmem>>, vector<8x128xi32>
    %85 = vector.shape_cast %79 : vector<8x1xi32> to vector<8x1xi32>
    %86 = vector.broadcast %85 : vector<8x1xi32> to vector<8x128xi32>
    %87 = arith.select %83, %86, %84 : vector<8x128xi1>, vector<8x128xi32>
    %c0_38 = arith.constant 0 : index
    %c0_39 = arith.constant 0 : index
    %88 = vector.load %arg13[%c0_38, %c0_39] : memref<8x128xi32, #tpu.memory_space<vmem>>, vector<8x128xi32>
    tpu.vector_store %arg13[%c0_38, %c0_39], %87 {strides = array<i32>} : memref<8x128xi32, #tpu.memory_space<vmem>>, vector<8x128xi32>,
    %c6_i32 = arith.constant 6 : i32
    %89 = arith.cmpi eq, %arg0, %c6_i32 : i32
    %90 = arith.extui %89 : i1 to i32
    %c0_i32_40 = arith.constant 0 : i32
    %91 = arith.cmpi ne, %90, %c0_i32_40 : i32
    scf.if %91 {
      %c0_41 = arith.constant 0 : index
      %c0_42 = arith.constant 0 : index
      %92 = vector.load %arg13[%c0_41, %c0_42] : memref<8x128xi32, #tpu.memory_space<vmem>>, vector<8x128xi32>
      %c0_43 = arith.constant 0 : index
      %c0_44 = arith.constant 0 : index
      %93 = vector.load %arg10[%c0_43, %c0_44] : memref<8x128xi32, #tpu.memory_space<vmem>>, vector<8x128xi32>
      tpu.vector_store %arg10[%c0_43, %c0_44], %92 {strides = array<i32>} : memref<8x128xi32, #tpu.memory_space<vmem>>, vector<8x128xi32>,
    } else {
    }
    return
  }
  func.func @transform_0(%arg0: i32, %arg1: memref<7xi32, #tpu.memory_space<smem>>) -> (i32, i32, i32) {
    %c0_i32 = arith.constant 0 : i32
    %c0_i32_0 = arith.constant 0 : i32
    %c0_i32_1 = arith.constant 0 : i32
    %c0_i32_2 = arith.constant 0 : i32
    return %c0_i32, %c0_i32_0, %c0_i32_1 : i32, i32, i32
  }
  func.func @transform_1(%arg0: i32, %arg1: memref<7xi32, #tpu.memory_space<smem>>) -> (i32, i32) {
    %c0_i32 = arith.constant 0 : i32
    %c0_i32_0 = arith.constant 0 : i32
    %c0_i32_1 = arith.constant 0 : i32
    return %c0_i32, %c0_i32_0 : i32, i32
  }
  func.func @transform_2(%arg0: i32, %arg1: memref<7xi32, #tpu.memory_space<smem>>) -> (i32, i32) {
    %c0_i32 = arith.constant 0 : i32
    %c0_i32_0 = arith.constant 0 : i32
    %c0_i32_1 = arith.constant 0 : i32
    return %c0_i32, %c0_i32_0 : i32, i32
  }
  func.func @transform_3(%arg0: i32, %arg1: memref<7xi32, #tpu.memory_space<smem>>) -> (i32, i32) {
    %c0_i32 = arith.constant 0 : i32
    %c0_i32_0 = arith.constant 0 : i32
    %c0_i32_1 = arith.constant 0 : i32
    return %c0_i32, %c0_i32_0 : i32, i32
  }
  func.func @transform_4(%arg0: i32, %arg1: memref<7xi32, #tpu.memory_space<smem>>) -> (i32, i32) {
    %c0_i32 = arith.constant 0 : i32
    %c0_i32_0 = arith.constant 0 : i32
    %c0_i32_1 = arith.constant 0 : i32
    return %c0_i32, %c0_i32_0 : i32, i32
  }
  func.func @transform_5(%arg0: i32, %arg1: memref<7xi32, #tpu.memory_space<smem>>) -> (i32, i32) {
    %c0_i32 = arith.constant 0 : i32
    %c0_i32_0 = arith.constant 0 : i32
    %c0_i32_1 = arith.constant 0 : i32
    return %c0_i32, %c0_i32_0 : i32, i32
  }
  func.func @transform_6(%arg0: i32, %arg1: memref<7xi32, #tpu.memory_space<smem>>) -> (i32, i32) {
    %c0_i32 = arith.constant 0 : i32
    %c0_i32_0 = arith.constant 0 : i32
    %c0_i32_1 = arith.constant 0 : i32
    return %c0_i32, %c0_i32_0 : i32, i32
  }
  func.func @transform_7(%arg0: i32, %arg1: memref<7xi32, #tpu.memory_space<smem>>) -> (i32, i32, i32) {
    %c0_i32 = arith.constant 0 : i32
    %c0_i32_0 = arith.constant 0 : i32
    %c0_i32_1 = arith.constant 0 : i32
    return %arg0, %c0_i32, %c0_i32_0 : i32, i32, i32
  }
  func.func @transform_8(%arg0: i32, %arg1: memref<7xi32, #tpu.memory_space<smem>>) -> (i32, i32) {
    %c0_i32 = arith.constant 0 : i32
    %c0_i32_0 = arith.constant 0 : i32
    %c0_i32_1 = arith.constant 0 : i32
    return %c0_i32, %c0_i32_0 : i32, i32
  }
}

</mosaic_0001>

<llo_original>
// kernel: _forward_core.3
$region0: #{_forward_core.3}
  #allocation0 [shape = 'u32[]', space=smem, size = 0x4, offset = 0x4, fixed_abs, tag = 'smem constant byte address 0x4 - core index']
  #allocation1 [shape = 'u32[144,128]{1,0:T(1,128)}', space=vmem, size = 0x12000, scoped, tag = 'internal scratch']
  #allocation2 [shape = 'f32[8,128]{1,0:T(8,128)}', space=vmem, size = 0x1000, scoped, tag = 'scratch operand']
  #allocation3 [shape = 's32[8,1]{1,0:T(8,128)}', space=vmem, size = 0x1000, scoped, tag = 'scratch operand']
  #allocation4 [shape = 's32[8,128]{1,0:T(8,128)}', space=vmem, size = 0x1000, scoped, tag = 'scratch operand']
  #allocation5 [shape = 's32[1]{0}', space=sflag, size = 0x4, scoped, tag = 'scoped memory for _forward_core.3']
  #allocation6 [shape = 'u8[512]{0}', space=smem, size = 0x200, scoped, tag = 'prefetched SMEM operand 0']
  %s0 = inlined_call_operand.vmem [shape: s32[7], index: 0, kind: input, shape index: {}]
  %s1 = inlined_call_operand.vmem [shape: s32[8,8,1], index: 1, kind: input, shape index: {}]
  %s2 = inlined_call_operand.vmem [shape: f32[8,128], index: 2, kind: input, shape index: {}]
  %s3 = inlined_call_operand.vmem [shape: bf16[128,384], index: 3, kind: input, shape index: {}]
  %s4 = inlined_call_operand.vmem [shape: bf16[128,384], index: 4, kind: input, shape index: {}]
  %s5 = inlined_call_operand.vmem [shape: f32[1,384], index: 5, kind: input, shape index: {}]
  %s6 = inlined_call_operand.vmem [shape: bf16[128,128], index: 6, kind: input, shape index: {}]
  %s7 = inlined_call_operand.vmem [shape: f32[1,128], index: 7, kind: input, shape index: {}]
  %s8 = inlined_call_operand.hbm [shape: f32[7,8,128], index: 8, kind: output, shape index: {0}]
  %s9 = inlined_call_operand.hbm [shape: s32[8,128], index: 9, kind: output, shape index: {1}]
  %10 = xla_tuple %s8, %s9
  %s11 = sld [smem:[#allocation0]]
  $region77: #{_forward_core.3} parent=0
    _
  %s13 = ssub.s32 1, %s11
  %s14 = scalar_select 0, %s13, %s11
  %s15 = sshll.u32 %s0, 4
  %s16 = int_to_ptr.vmem [resolvable:$true] %s15
  %18 = dma.vmem_to_smem %s16, 16, [#allocation6], [#allocation5]
  %19 = dma.done [#allocation5], 16
  %20 = sfence
  $region1: #{_forward_core.3} parent=0
    #allocation7 [shape = 'u8[8192]{0}', space=vmem, size = 0x2000, scoped, tag = 'output window, operand 0']
    #allocation8 [shape = 's32[2]{0}', space=sflag, size = 0x8, scoped, tag = 'scoped memory for _forward_core.3']
    #allocation9 [shape = 'u8[4096]{0}', space=vmem, size = 0x1000, scoped, tag = 'output window, operand 1, single buffered']
    #allocation10 [shape = 's32[1]{0}', space=sflag, size = 0x4, scoped, tag = 'scoped memory for _forward_core.3']
    %21 = vsyncpa [#allocation8], 0
    %s22 = scalar_lea.sflag [#allocation8], 1
    %23 = vsyncpa %s22, 0
    %24 = vsyncpa [#allocation10], 0
    loop: start=0, step=1, limit=9
    $region2: #{_forward_core.3} parent=1 // loop_pre_header
      _
    $region3: #{_forward_core.3} parent=1 // loop_header
      %s26 = sphi 0, %s30
      %p27 = scmp.ge.s32.totalorder %s26, 9
      %s34 = sphi 0, %s34
      %s36 = sphi 0, %s34
      %s37 = sphi 0, %s36
      %s51 = sphi 0, %s37
      %s55 = sphi 0, %s55
      %s57 = sphi 0, %s55
      %s58 = sphi 0, %s57
      %s72 = sphi 0, %s58
      %s76 = sphi 0, %s76
      %s78 = sphi 0, %s76
      %s79 = sphi 0, %s78
      %s93 = sphi 0, %s79
      %s97 = sphi 0, %s97
      %s99 = sphi 0, %s97
      %s100 = sphi 0, %s99
      %s114 = sphi 0, %s100
      %s118 = sphi 0, %s118
      %s120 = sphi 0, %s118
      %s121 = sphi 0, %s120
      %s135 = sphi 0, %s121
      %s139 = sphi 0, %s139
      %s141 = sphi 0, %s139
      %s142 = sphi 0, %s141
      %s156 = sphi 0, %s142
      %s160 = sphi 0, %s160
      %s162 = sphi 0, %s160
      %s163 = sphi 0, %s162
      %s177 = sphi 0, %s163
      %s183 = sphi 0, %s185
      %s186 = sphi 0, %s183
      %s187 = sphi 0, %s186
      %s203 = sphi 0, %s187
      %s207 = sphi 0, %s207
      %s209 = sphi 0, %s207
      %s210 = sphi 0, %s209
      %s224 = sphi 0, %s210
    $region4: #{_forward_core.3} parent=1 // loop_header_branch
      %29 = sbr.rel (%p27) target = $region8
    $region5: #{_forward_core.3} parent=1 // loop_body
      %s31 = ssub.s32 %s26, 1
      %s32 = ssub.s32 %s26, 2
      %s33 = sadd.s32 %s26, 1
      %s35 = sadd.s32 %s34, 1
      %p38 = scmp.eq.s32.totalorder %s26, 6
      %p39 = scmp.ne.s32.totalorder %s34, %s36
      %p40 = scmp.eq.s32.totalorder %s26, 0
      %p41 = por %p39, %p40
      %p42 = scmp.ne.s32.totalorder %s34, %s36
      %p43 = scmp.eq.s32.totalorder %s31, 6
      %p44 = por %p42, %p43
      %p45 = scmp.ne.s32.totalorder %s36, %s37
      %p46 = scmp.eq.s32.totalorder %s31, 0
      %p47 = por %p45, %p46
      %p48 = scmp.ne.s32.totalorder %s36, %s37
      %p49 = scmp.eq.s32.totalorder %s32, 6
      %p50 = por %p48, %p49
      %p52 = scmp.ne.s32.totalorder %s37, %s51
      %p53 = scmp.eq.s32.totalorder %s32, 0
      %p54 = por %p52, %p53
      %s56 = sadd.s32 %s55, 1
      %p59 = scmp.eq.s32.totalorder %s26, 6
      %p60 = scmp.ne.s32.totalorder %s55, %s57
      %p61 = scmp.eq.s32.totalorder %s26, 0
      %p62 = por %p60, %p61
      %p63 = scmp.ne.s32.totalorder %s55, %s57
      %p64 = scmp.eq.s32.totalorder %s31, 6
      %p65 = por %p63, %p64
      %p66 = scmp.ne.s32.totalorder %s57, %s58
      %p67 = scmp.eq.s32.totalorder %s31, 0
      %p68 = por %p66, %p67
      %p69 = scmp.ne.s32.totalorder %s57, %s58
      %p70 = scmp.eq.s32.totalorder %s32, 6
      %p71 = por %p69, %p70
      %p73 = scmp.ne.s32.totalorder %s58, %s72
      %p74 = scmp.eq.s32.totalorder %s32, 0
      %p75 = por %p73, %p74
      %s77 = sadd.s32 %s76, 1
      %p80 = scmp.eq.s32.totalorder %s26, 6
      %p81 = scmp.ne.s32.totalorder %s76, %s78
      %p82 = scmp.eq.s32.totalorder %s26, 0
      %p83 = por %p81, %p82
      %p84 = scmp.ne.s32.totalorder %s76, %s78
      %p85 = scmp.eq.s32.totalorder %s31, 6
      %p86 = por %p84, %p85
      %p87 = scmp.ne.s32.totalorder %s78, %s79
      %p88 = scmp.eq.s32.totalorder %s31, 0
      %p89 = por %p87, %p88
      %p90 = scmp.ne.s32.totalorder %s78, %s79
      %p91 = scmp.eq.s32.totalorder %s32, 6
      %p92 = por %p90, %p91
      %p94 = scmp.ne.s32.totalorder %s79, %s93
      %p95 = scmp.eq.s32.totalorder %s32, 0
      %p96 = por %p94, %p95
      %s98 = sadd.s32 %s97, 1
      %p101 = scmp.eq.s32.totalorder %s26, 6
      %p102 = scmp.ne.s32.totalorder %s97, %s99
      %p103 = scmp.eq.s32.totalorder %s26, 0
      %p104 = por %p102, %p103
      %p105 = scmp.ne.s32.totalorder %s97, %s99
      %p106 = scmp.eq.s32.totalorder %s31, 6
      %p107 = por %p105, %p106
      %p108 = scmp.ne.s32.totalorder %s99, %s100
      %p109 = scmp.eq.s32.totalorder %s31, 0
      %p110 = por %p108, %p109
      %p111 = scmp.ne.s32.totalorder %s99, %s100
      %p112 = scmp.eq.s32.totalorder %s32, 6
      %p113 = por %p111, %p112
      %p115 = scmp.ne.s32.totalorder %s100, %s114
      %p116 = scmp.eq.s32.totalorder %s32, 0
      %p117 = por %p115, %p116
      %s119 = sadd.s32 %s118, 1
      %p122 = scmp.eq.s32.totalorder %s26, 6
      %p123 = scmp.ne.s32.totalorder %s118, %s120
      %p124 = scmp.eq.s32.totalorder %s26, 0
      %p125 = por %p123, %p124
      %p126 = scmp.ne.s32.totalorder %s118, %s120
      %p127 = scmp.eq.s32.totalorder %s31, 6
      %p128 = por %p126, %p127
      %p129 = scmp.ne.s32.totalorder %s120, %s121
      %p130 = scmp.eq.s32.totalorder %s31, 0
      %p131 = por %p129, %p130
      %p132 = scmp.ne.s32.totalorder %s120, %s121
      %p133 = scmp.eq.s32.totalorder %s32, 6
      %p134 = por %p132, %p133
      %p136 = scmp.ne.s32.totalorder %s121, %s135
      %p137 = scmp.eq.s32.totalorder %s32, 0
      %p138 = por %p136, %p137
      %s140 = sadd.s32 %s139, 1
      %p143 = scmp.eq.s32.totalorder %s26, 6
      %p144 = scmp.ne.s32.totalorder %s139, %s141
      %p145 = scmp.eq.s32.totalorder %s26, 0
      %p146 = por %p144, %p145
      %p147 = scmp.ne.s32.totalorder %s139, %s141
      %p148 = scmp.eq.s32.totalorder %s31, 6
      %p149 = por %p147, %p148
      %p150 = scmp.ne.s32.totalorder %s141, %s142
      %p151 = scmp.eq.s32.totalorder %s31, 0
      %p152 = por %p150, %p151
      %p153 = scmp.ne.s32.totalorder %s141, %s142
      %p154 = scmp.eq.s32.totalorder %s32, 6
      %p155 = por %p153, %p154
      %p157 = scmp.ne.s32.totalorder %s142, %s156
      %p158 = scmp.eq.s32.totalorder %s32, 0
      %p159 = por %p157, %p158
      %s161 = sadd.s32 %s160, 1
      %p164 = scmp.eq.s32.totalorder %s26, 6
      %p165 = scmp.ne.s32.totalorder %s160, %s162
      %p166 = scmp.eq.s32.totalorder %s26, 0
      %p167 = por %p165, %p166
      %p168 = scmp.ne.s32.totalorder %s160, %s162
      %p169 = scmp.eq.s32.totalorder %s31, 6
      %p170 = por %p168, %p169
      %p171 = scmp.ne.s32.totalorder %s162, %s163
      %p172 = scmp.eq.s32.totalorder %s31, 0
      %p173 = por %p171, %p172
      %p174 = scmp.ne.s32.totalorder %s162, %s163
      %p175 = scmp.eq.s32.totalorder %s32, 6
      %p176 = por %p174, %p175
      %p178 = scmp.ne.s32.totalorder %s163, %s177
      %p179 = scmp.eq.s32.totalorder %s32, 0
      %p180 = por %p178, %p179
      %s181 = ssub.s32 %s26, %s33
      %p182 = scmp.eq.s32.totalorder %s181, 0
      %s184 = sadd.s32 %s183, 1
      %s185 = scalar_select %p182, %s183, %s184
      %p188 = pneg %p182
      %p189 = scmp.eq.s32.totalorder %s26, 6
      %p190 = por %p188, %p189
      %p191 = scmp.ne.s32.totalorder %s183, %s186
      %p192 = scmp.eq.s32.totalorder %s26, 0
      %p193 = por %p191, %p192
      %p194 = scmp.ne.s32.totalorder %s183, %s186
      %p195 = scmp.eq.s32.totalorder %s31, 6
      %p196 = por %p194, %p195
      %p197 = scmp.ne.s32.totalorder %s186, %s187
      %p198 = scmp.eq.s32.totalorder %s31, 0
      %p199 = por %p197, %p198
      %p200 = scmp.ne.s32.totalorder %s186, %s187
      %p201 = scmp.eq.s32.totalorder %s32, 6
      %p202 = por %p200, %p201
      %p204 = scmp.ne.s32.totalorder %s187, %s203
      %p205 = scmp.eq.s32.totalorder %s32, 0
      %p206 = por %p204, %p205
      %s208 = sadd.s32 %s207, 1
      %p211 = scmp.eq.s32.totalorder %s26, 6
      %p212 = scmp.ne.s32.totalorder %s207, %s209
      %p213 = scmp.eq.s32.totalorder %s26, 0
      %p214 = por %p212, %p213
      %p215 = scmp.ne.s32.totalorder %s207, %s209
      %p216 = scmp.eq.s32.totalorder %s31, 6
      %p217 = por %p215, %p216
      %p218 = scmp.ne.s32.totalorder %s209, %s210
      %p219 = scmp.eq.s32.totalorder %s31, 0
      %p220 = por %p218, %p219
      %p221 = scmp.ne.s32.totalorder %s209, %s210
      %p222 = scmp.eq.s32.totalorder %s32, 6
      %p223 = por %p221, %p222
      %p225 = scmp.ne.s32.totalorder %s210, %s224
      %p226 = scmp.eq.s32.totalorder %s32, 0
      %p227 = por %p225, %p226
      %p228 = scmp.le.s32.totalorder 1, %s26
      %p229 = scmp.lt.s32.totalorder %s26, 8
      %p230 = pnand %p228, %p229
      %p231 = pneg %p230
      // Predicated region
      $region9: #{_forward_core.3} parent=5 // pred_check
        _
      $region10: #{_forward_core.3} parent=5 // pred_check_branch
        %233 = sbr.rel (%p230) target = $region12
      $region11: #{_forward_core.3} parent=5 // pred_region
        %s234 = ssub.s32 %s26, 1
        // Predicated region
        $region13: #{_forward_core.3} parent=11 // pred_check
          %p235 = pneg %p47
        $region14: #{_forward_core.3} parent=11 // pred_check_branch
          %237 = sbr.rel (%p235) target = $region16
        $region15: #{_forward_core.3} parent=11 // pred_region
          _
        $region16: #{_forward_core.3} parent=11 // pred_fallthru
          _
        // Predicated region
        $region17: #{_forward_core.3} parent=11 // pred_check
          %p238 = pneg %p68
        $region18: #{_forward_core.3} parent=11 // pred_check_branch
          %240 = sbr.rel (%p238) target = $region20
        $region19: #{_forward_core.3} parent=11 // pred_region
          _
        $region20: #{_forward_core.3} parent=11 // pred_fallthru
          _
        // Predicated region
        $region21: #{_forward_core.3} parent=11 // pred_check
          %p241 = pneg %p89
        $region22: #{_forward_core.3} parent=11 // pred_check_branch
          %243 = sbr.rel (%p241) target = $region24
        $region23: #{_forward_core.3} parent=11 // pred_region
          _
        $region24: #{_forward_core.3} parent=11 // pred_fallthru
          _
        // Predicated region
        $region25: #{_forward_core.3} parent=11 // pred_check
          %p244 = pneg %p110
        $region26: #{_forward_core.3} parent=11 // pred_check_branch
          %246 = sbr.rel (%p244) target = $region28
        $region27: #{_forward_core.3} parent=11 // pred_region
          _
        $region28: #{_forward_core.3} parent=11 // pred_fallthru
          _
        // Predicated region
        $region29: #{_forward_core.3} parent=11 // pred_check
          %p247 = pneg %p131
        $region30: #{_forward_core.3} parent=11 // pred_check_branch
          %249 = sbr.rel (%p247) target = $region32
        $region31: #{_forward_core.3} parent=11 // pred_region
          _
        $region32: #{_forward_core.3} parent=11 // pred_fallthru
          _
        // Predicated region
        $region33: #{_forward_core.3} parent=11 // pred_check
          %p250 = pneg %p152
        $region34: #{_forward_core.3} parent=11 // pred_check_branch
          %252 = sbr.rel (%p250) target = $region36
        $region35: #{_forward_core.3} parent=11 // pred_region
          _
        $region36: #{_forward_core.3} parent=11 // pred_fallthru
          _
        // Predicated region
        $region37: #{_forward_core.3} parent=11 // pred_check
          %p253 = pneg %p173
        $region38: #{_forward_core.3} parent=11 // pred_check_branch
          %255 = sbr.rel (%p253) target = $region40
        $region39: #{_forward_core.3} parent=11 // pred_region
          _
        $region40: #{_forward_core.3} parent=11 // pred_fallthru
          _
      $region12: #{_forward_core.3} parent=5 // pred_fallthru
        _
      %p256 = scmp.lt.s32.totalorder %s26, 7
      // Predicated region
      $region41: #{_forward_core.3} parent=5 // pred_check
        %p257 = pneg %p256
      $region42: #{_forward_core.3} parent=5 // pred_check_branch
        %259 = sbr.rel (%p257) target = $region44
      $region43: #{_forward_core.3} parent=5 // pred_region
        _
      $region44: #{_forward_core.3} parent=5 // pred_fallthru
        _
      %p260 = scmp.le.s32.totalorder 1, %s26
      %p261 = scmp.lt.s32.totalorder %s26, 8
      %p262 = pnand %p260, %p261
      %p263 = pneg %p262
      // Predicated region
      $region45: #{_forward_core.3} parent=5 // pred_check
        _
      $region46: #{_forward_core.3} parent=5 // pred_check_branch
        %265 = sbr.rel (%p262) target = $region48
      $region47: #{_forward_core.3} parent=5 // pred_region
        %s266 = ssub.s32 %s26, 1
        %p267 = pneg %p47
        %p268 = pneg %p44
        %p269 = pneg %p68
        %p270 = pneg %p65
        %p271 = pneg %p89
        %p272 = pneg %p86
        %p273 = pneg %p110
        %p274 = pneg %p107
        %p275 = pneg %p131
        %p276 = pneg %p128
        %p277 = pneg %p152
        %p278 = pneg %p149
        %p279 = pneg %p173
        %p280 = pneg %p170
        %p281 = pneg %p199
        %p282 = pneg %p196
        %s283 = sand.u32 %s186, 1
        %s284 = scalar_lea.sflag [#allocation8], %s283
        %s285 = sand.u32 %s186, 1
        %s286 = smul.addr %s285, 8
        %s287 = scalar_lea.vmem [#allocation7], %s286
        %p288 = pneg %p220
        %p289 = pneg %p217
        %p291 = scmp.eq.s32.totalorder %s31, 0
        // Predicated region
        $region49: #{_forward_core.3} parent=47 // pred_check
          %p292 = pneg %p291
        $region50: #{_forward_core.3} parent=47 // pred_check_branch
          %294 = sbr.rel (%p292) target = $region52
        $region51: #{_forward_core.3} parent=47 // pred_region
          %v295 = vld [vmem:[%s2] sm:$0xff]
          %296 = vst [vmem:[#allocation2] sm:$0xff] %v295
          %vm297 = vcmask 7168
          %298 = vst.msk [vmem:[#allocation3] sm:$0xff] %vm297, 0
          %299 = vst [vmem:[#allocation4] sm:$0xff] 0
        $region52: #{_forward_core.3} parent=47 // pred_fallthru
          _
        %s300 = smul.u32 %s31, 8
        %s301 = scalar_lea.vmem %s1, %s300
        %v302 = vld [vmem:[%s301] sm:$0xff]
        %s303 = ssub.s32 %s31, 1
        %p304 = scmp.gt.s32.totalorder %s303, 0
        %s305 = scalar_select %p304, %s303, 0
        %s306 = sld [smem:[#allocation6 + %s305]]
        %p307 = scmp.gt.s32.totalorder %s31, 0
        %s308 = scalar_select %p307, %s306, 0
        %v309 = vld [vmem:[#allocation3] sm:$0xff]
        %v310 = vstv %s308
        %v311 = vmul.u32 %v310, %v309
        %s312 = ssub.s32 1, %s308
        %v313 = vstv %s312
        %v314 = vmul.u32 %v313, %v302
        %v315 = vadd.s32 %v311, %v314
        %v316 = vlaneseq
        %v317 = vand.u32 %v316, 127
        %318 = vset.pattern.permute.xlu0 0
        %319 = vperm.xlu0 %318, %v315
        %v320 = vpop.permute.xlu0 %319
        %vm321 = vcmp.eq.s32.totalorder %v317, %v320
        %v322 = vsel %vm321, 1.0, 0.0
        %v323 = vpack.c.bf16 %v322, %v322
        %v324 = vld [vmem:[%s3] sm:$0xff]
        %v325 = vld [vmem:[%s3 + $0x8] sm:$0xf]
        %v326 = vld [vmem:[%s3 + $0xc] sm:$0xff]
        %v327 = vld [vmem:[%s3 + $0x14] sm:$0xf]
        %v328 = vld [vmem:[%s3 + $0x18] sm:$0xff]
        %v329 = vld [vmem:[%s3 + $0x20] sm:$0xf]
        %v330 = vld [vmem:[%s3 + $0x24] sm:$0xff]
        %v331 = vld [vmem:[%s3 + $0x2c] sm:$0xf]
        %v332 = vld [vmem:[%s3 + $0x30] sm:$0xff]
        %v333 = vld [vmem:[%s3 + $0x38] sm:$0xf]
        %v334 = vld [vmem:[%s3 + $0x3c] sm:$0xff]
        %v335 = vld [vmem:[%s3 + $0x44] sm:$0xf]
        %v336 = vld [vmem:[%s3 + $0x48] sm:$0xff]
        %v337 = vld [vmem:[%s3 + $0x50] sm:$0xf]
        %v338 = vld [vmem:[%s3 + $0x54] sm:$0xff]
        %v339 = vld [vmem:[%s3 + $0x5c] sm:$0xf]
        %v340 = vld [vmem:[%s3 + $0x60] sm:$0xff]
        %v341 = vld [vmem:[%s3 + $0x68] sm:$0xf]
        %v342 = vld [vmem:[%s3 + $0x6c] sm:$0xff]
        %v343 = vld [vmem:[%s3 + $0x74] sm:$0xf]
        %v344 = vld [vmem:[%s3 + $0x78] sm:$0xff]
        %v345 = vld [vmem:[%s3 + $0x80] sm:$0xf]
        %v346 = vld [vmem:[%s3 + $0x84] sm:$0xff]
        %v347 = vld [vmem:[%s3 + $0x8c] sm:$0xf]
        %v348 = vld [vmem:[%s3 + $0x90] sm:$0xff]
        %v349 = vld [vmem:[%s3 + $0x98] sm:$0xf]
        %v350 = vld [vmem:[%s3 + $0x9c] sm:$0xff]
        %v351 = vld [vmem:[%s3 + $0xa4] sm:$0xf]
        %v352 = vld [vmem:[%s3 + $0xa8] sm:$0xff]
        %v353 = vld [vmem:[%s3 + $0xb0] sm:$0xf]
        %v354 = vld [vmem:[%s3 + $0xb4] sm:$0xff]
        %v355 = vld [vmem:[%s3 + $0xbc] sm:$0xf]
        %v388 = vunpack.c.l.b16 %v324
        %v389 = vunpack.c.h.b16 %v324
        %v390 = vunpack.c.l.b16 %v325
        %v391 = vunpack.c.l.b16 %v326
        %v392 = vunpack.c.h.b16 %v326
        %v393 = vunpack.c.l.b16 %v327
        %v394 = vunpack.c.l.b16 %v328
        %v395 = vunpack.c.h.b16 %v328
        %v396 = vunpack.c.l.b16 %v329
        %v397 = vunpack.c.l.b16 %v330
        %v398 = vunpack.c.h.b16 %v330
        %v399 = vunpack.c.l.b16 %v331
        %v400 = vunpack.c.l.b16 %v332
        %v401 = vunpack.c.h.b16 %v332
        %v402 = vunpack.c.l.b16 %v333
        %v403 = vunpack.c.l.b16 %v334
        %v404 = vunpack.c.h.b16 %v334
        %v405 = vunpack.c.l.b16 %v335
        %v406 = vunpack.c.l.b16 %v336
        %v407 = vunpack.c.h.b16 %v336
        %v408 = vunpack.c.l.b16 %v337
        %v409 = vunpack.c.l.b16 %v338
        %v410 = vunpack.c.h.b16 %v338
        %v411 = vunpack.c.l.b16 %v339
        %v412 = vunpack.c.l.b16 %v340
        %v413 = vunpack.c.h.b16 %v340
        %v414 = vunpack.c.l.b16 %v341
        %v415 = vunpack.c.l.b16 %v342
        %v416 = vunpack.c.h.b16 %v342
        %v417 = vunpack.c.l.b16 %v343
        %v418 = vunpack.c.l.b16 %v344
        %v419 = vunpack.c.h.b16 %v344
        %v420 = vunpack.c.l.b16 %v345
        %v421 = vunpack.c.l.b16 %v346
        %v422 = vunpack.c.h.b16 %v346
        %v423 = vunpack.c.l.b16 %v347
        %v424 = vunpack.c.l.b16 %v348
        %v425 = vunpack.c.h.b16 %v348
        %v426 = vunpack.c.l.b16 %v349
        %v427 = vunpack.c.l.b16 %v350
        %v428 = vunpack.c.h.b16 %v350
        %v429 = vunpack.c.l.b16 %v351
        %v430 = vunpack.c.l.b16 %v352
        %v431 = vunpack.c.h.b16 %v352
        %v432 = vunpack.c.l.b16 %v353
        %v433 = vunpack.c.l.b16 %v354
        %v434 = vunpack.c.h.b16 %v354
        %v435 = vunpack.c.l.b16 %v355
        %v436 = vpack.c.b16 %v391, %v388
        %v437 = vpack.c.b16 %v392, %v389
        %v438 = vpack.c.b16 %v393, %v390
        %v439 = vpack.c.b16 %v397, %v394
        %v440 = vpack.c.b16 %v398, %v395
        %v441 = vpack.c.b16 %v399, %v396
        %v442 = vpack.c.b16 %v403, %v400
        %v443 = vpack.c.b16 %v404, %v401
        %v444 = vpack.c.b16 %v405, %v402
        %v445 = vpack.c.b16 %v409, %v406
        %v446 = vpack.c.b16 %v410, %v407
        %v447 = vpack.c.b16 %v411, %v408
        %v448 = vpack.c.b16 %v415, %v412
        %v449 = vpack.c.b16 %v416, %v413
        %v450 = vpack.c.b16 %v417, %v414
        %v451 = vpack.c.b16 %v421, %v418
        %v452 = vpack.c.b16 %v422, %v419
        %v453 = vpack.c.b16 %v423, %v420
        %v454 = vpack.c.b16 %v427, %v424
        %v455 = vpack.c.b16 %v428, %v425
        %v456 = vpack.c.b16 %v429, %v426
        %v457 = vpack.c.b16 %v433, %v430
        %v458 = vpack.c.b16 %v434, %v431
        %v459 = vpack.c.b16 %v435, %v432
        %484 = vmatprep.subr.bf16.mxu0 %v437
        %485 = vmatpush1.bf16.msra.mxu0 %v436
        %486 = vmatprep.subr.bf16.mxu0 %v440
        %487 = vmatpush1.bf16.msra.mxu0 %v439
        %488 = vmatprep.subr.bf16.mxu0 %v443
        %489 = vmatpush1.bf16.msra.mxu0 %v442
        %490 = vmatprep.subr.bf16.mxu0 %v446
        %491 = vmatpush1.bf16.msra.mxu0 %v445
        %492 = vmatprep.subr.bf16.mxu0 %v449
        %493 = vmatpush1.bf16.msra.mxu0 %v448
        %494 = vmatprep.subr.bf16.mxu0 %v452
        %495 = vmatpush1.bf16.msra.mxu0 %v451
        %496 = vmatprep.subr.bf16.mxu0 %v455
        %497 = vmatpush1.bf16.msra.mxu0 %v454
        %498 = vmatprep.subr.bf16.mxu0 %v458
        %499 = vmatpush1.bf16.msra.mxu0 %v457
        %500 = vmatprep.subr.bf16.mxu0 0
        %501 = vmatpush1.bf16.msra.mxu0 0
        %502 = vmatprep.subr.bf16.mxu0 0
        %503 = vmatpush1.bf16.msra.mxu0 0
        %504 = vmatprep.subr.bf16.mxu0 0
        %505 = vmatpush1.bf16.msra.mxu0 0
        %506 = vmatprep.subr.bf16.mxu0 0
        %507 = vmatpush1.bf16.msra.mxu0 0
        %508 = vmatprep.subr.bf16.mxu0 0
        %509 = vmatpush1.bf16.msra.mxu0 0
        %510 = vmatprep.subr.bf16.mxu0 0
        %511 = vmatpush1.bf16.msra.mxu0 0
        %512 = vmatprep.subr.bf16.mxu0 0
        %513 = vmatpush1.bf16.msra.mxu0 0
        %514 = vmatprep.subr.bf16.mxu0 0
        %515 = vmatpush1.bf16.msra.mxu0 0
        %516 = vmatprep.mubr.bf16.mxu0 0
        %517 = vmatmul.mubr.bf16.gmra.mrb[0].mxu0 %v323
        %v518 = vpop.f32.mrb[0].mxu0
        %v519 = vadd.f32 0.0, %v518
        %v520 = vpop.f32.mrb[0].mxu0
        %v521 = vadd.f32 0.0, %v520
        %v522 = vpop.f32.mrb[0].mxu0
        %v523 = vpop.f32.mrb[0].mxu0
        %524 = vdwg.mxu0
        %525 = vmatprep.subr.bf16.mxu0 0
        %526 = vmatpush1.bf16.msra.mxu0 %v438
        %527 = vmatprep.subr.bf16.mxu0 0
        %528 = vmatpush1.bf16.msra.mxu0 %v441
        %529 = vmatprep.subr.bf16.mxu0 0
        %530 = vmatpush1.bf16.msra.mxu0 %v444
        %531 = vmatprep.subr.bf16.mxu0 0
        %532 = vmatpush1.bf16.msra.mxu0 %v447
        %533 = vmatprep.subr.bf16.mxu0 0
        %534 = vmatpush1.bf16.msra.mxu0 %v450
        %535 = vmatprep.subr.bf16.mxu0 0
        %536 = vmatpush1.bf16.msra.mxu0 %v453
        %537 = vmatprep.subr.bf16.mxu0 0
        %538 = vmatpush1.bf16.msra.mxu0 %v456
        %539 = vmatprep.subr.bf16.mxu0 0
        %540 = vmatpush1.bf16.msra.mxu0 %v459
        %541 = vmatprep.subr.bf16.mxu0 0
        %542 = vmatpush1.bf16.msra.mxu0 0
        %543 = vmatprep.subr.bf16.mxu0 0
        %544 = vmatpush1.bf16.msra.mxu0 0
        %545 = vmatprep.subr.bf16.mxu0 0
        %546 = vmatpush1.bf16.msra.mxu0 0
        %547 = vmatprep.subr.bf16.mxu0 0
        %548 = vmatpush1.bf16.msra.mxu0 0
        %549 = vmatprep.subr.bf16.mxu0 0
        %550 = vmatpush1.bf16.msra.mxu0 0
        %551 = vmatprep.subr.bf16.mxu0 0
        %552 = vmatpush1.bf16.msra.mxu0 0
        %553 = vmatprep.subr.bf16.mxu0 0
        %554 = vmatpush1.bf16.msra.mxu0 0
        %555 = vmatprep.subr.bf16.mxu0 0
        %556 = vmatpush1.bf16.msra.mxu0 0
        %557 = vmatprep.mubr.bf16.mxu0 0
        %558 = vmatmul.mubr.bf16.gmra.mrb[0].mxu0 %v323
        %v559 = vpop.f32.mrb[0].mxu0
        %v560 = vadd.f32 0.0, %v559
        %v561 = vpop.f32.mrb[0].mxu0
        %v562 = vpop.f32.mrb[0].mxu0
        %v563 = vpop.f32.mrb[0].mxu0
        %564 = vdwg.mxu0
        %v565 = vld [vmem:[#allocation2] sm:$0xff]
        %v566 = vpack.c.bf16 %v565, %v565
        %v567 = vld [vmem:[%s4] sm:$0xff]
        %v568 = vld [vmem:[%s4 + $0x8] sm:$0xf]
        %v569 = vld [vmem:[%s4 + $0xc] sm:$0xff]
        %v570 = vld [vmem:[%s4 + $0x14] sm:$0xf]
        %v571 = vld [vmem:[%s4 + $0x18] sm:$0xff]
        %v572 = vld [vmem:[%s4 + $0x20] sm:$0xf]
        %v573 = vld [vmem:[%s4 + $0x24] sm:$0xff]
        %v574 = vld [vmem:[%s4 + $0x2c] sm:$0xf]
        %v575 = vld [vmem:[%s4 + $0x30] sm:$0xff]
        %v576 = vld [vmem:[%s4 + $0x38] sm:$0xf]
        %v577 = vld [vmem:[%s4 + $0x3c] sm:$0xff]
        %v578 = vld [vmem:[%s4 + $0x44] sm:$0xf]
        %v579 = vld [vmem:[%s4 + $0x48] sm:$0xff]
        %v580 = vld [vmem:[%s4 + $0x50] sm:$0xf]
        %v581 = vld [vmem:[%s4 + $0x54] sm:$0xff]
        %v582 = vld [vmem:[%s4 + $0x5c] sm:$0xf]
        %v583 = vld [vmem:[%s4 + $0x60] sm:$0xff]
        %v584 = vld [vmem:[%s4 + $0x68] sm:$0xf]
        %v585 = vld [vmem:[%s4 + $0x6c] sm:$0xff]
        %v586 = vld [vmem:[%s4 + $0x74] sm:$0xf]
        %v587 = vld [vmem:[%s4 + $0x78] sm:$0xff]
        %v588 = vld [vmem:[%s4 + $0x80] sm:$0xf]
        %v589 = vld [vmem:[%s4 + $0x84] sm:$0xff]
        %v590 = vld [vmem:[%s4 + $0x8c] sm:$0xf]
        %v591 = vld [vmem:[%s4 + $0x90] sm:$0xff]
        %v592 = vld [vmem:[%s4 + $0x98] sm:$0xf]
        %v593 = vld [vmem:[%s4 + $0x9c] sm:$0xff]
        %v594 = vld [vmem:[%s4 + $0xa4] sm:$0xf]
        %v595 = vld [vmem:[%s4 + $0xa8] sm:$0xff]
        %v596 = vld [vmem:[%s4 + $0xb0] sm:$0xf]
        %v597 = vld [vmem:[%s4 + $0xb4] sm:$0xff]
        %v598 = vld [vmem:[%s4 + $0xbc] sm:$0xf]
        %v599 = vld [vmem:[%s5] sm:$0x7]
        %v601 = vlaneseq
        %v602 = vshrl.u32 %v601, 7
        %v603 = vsub.s32 0, %v602
        %v604 = vrot.slane %v599, %v603
        %v605 = vlaneseq
        %v606 = vshrl.u32 %v605, 7
        %v607 = vsub.s32 1, %v606
        %v608 = vrot.slane %v599, %v607
        %v609 = vlaneseq
        %v610 = vshrl.u32 %v609, 7
        %v611 = vsub.s32 2, %v610
        %v612 = vrot.slane %v599, %v611
        %v648 = vunpack.c.l.b16 %v567
        %v649 = vunpack.c.h.b16 %v567
        %v650 = vunpack.c.l.b16 %v568
        %v651 = vunpack.c.l.b16 %v569
        %v652 = vunpack.c.h.b16 %v569
        %v653 = vunpack.c.l.b16 %v570
        %v654 = vunpack.c.l.b16 %v571
        %v655 = vunpack.c.h.b16 %v571
        %v656 = vunpack.c.l.b16 %v572
        %v657 = vunpack.c.l.b16 %v573
        %v658 = vunpack.c.h.b16 %v573
        %v659 = vunpack.c.l.b16 %v574
        %v660 = vunpack.c.l.b16 %v575
        %v661 = vunpack.c.h.b16 %v575
        %v662 = vunpack.c.l.b16 %v576
        %v663 = vunpack.c.l.b16 %v577
        %v664 = vunpack.c.h.b16 %v577
        %v665 = vunpack.c.l.b16 %v578
        %v666 = vunpack.c.l.b16 %v579
        %v667 = vunpack.c.h.b16 %v579
        %v668 = vunpack.c.l.b16 %v580
        %v669 = vunpack.c.l.b16 %v581
        %v670 = vunpack.c.h.b16 %v581
        %v671 = vunpack.c.l.b16 %v582
        %v672 = vunpack.c.l.b16 %v583
        %v673 = vunpack.c.h.b16 %v583
        %v674 = vunpack.c.l.b16 %v584
        %v675 = vunpack.c.l.b16 %v585
        %v676 = vunpack.c.h.b16 %v585
        %v677 = vunpack.c.l.b16 %v586
        %v678 = vunpack.c.l.b16 %v587
        %v679 = vunpack.c.h.b16 %v587
        %v680 = vunpack.c.l.b16 %v588
        %v681 = vunpack.c.l.b16 %v589
        %v682 = vunpack.c.h.b16 %v589
        %v683 = vunpack.c.l.b16 %v590
        %v684 = vunpack.c.l.b16 %v591
        %v685 = vunpack.c.h.b16 %v591
        %v686 = vunpack.c.l.b16 %v592
        %v687 = vunpack.c.l.b16 %v593
        %v688 = vunpack.c.h.b16 %v593
        %v689 = vunpack.c.l.b16 %v594
        %v690 = vunpack.c.l.b16 %v595
        %v691 = vunpack.c.h.b16 %v595
        %v692 = vunpack.c.l.b16 %v596
        %v693 = vunpack.c.l.b16 %v597
        %v694 = vunpack.c.h.b16 %v597
        %v695 = vunpack.c.l.b16 %v598
        %v696 = vpack.c.b16 %v651, %v648
        %v697 = vpack.c.b16 %v652, %v649
        %v698 = vpack.c.b16 %v653, %v650
        %v699 = vpack.c.b16 %v657, %v654
        %v700 = vpack.c.b16 %v658, %v655
        %v701 = vpack.c.b16 %v659, %v656
        %v702 = vpack.c.b16 %v663, %v660
        %v703 = vpack.c.b16 %v664, %v661
        %v704 = vpack.c.b16 %v665, %v662
        %v705 = vpack.c.b16 %v669, %v666
        %v706 = vpack.c.b16 %v670, %v667
        %v707 = vpack.c.b16 %v671, %v668
        %v708 = vpack.c.b16 %v675, %v672
        %v709 = vpack.c.b16 %v676, %v673
        %v710 = vpack.c.b16 %v677, %v674
        %v711 = vpack.c.b16 %v681, %v678
        %v712 = vpack.c.b16 %v682, %v679
        %v713 = vpack.c.b16 %v683, %v680
        %v714 = vpack.c.b16 %v687, %v684
        %v715 = vpack.c.b16 %v688, %v685
        %v716 = vpack.c.b16 %v689, %v686
        %v717 = vpack.c.b16 %v693, %v690
        %v718 = vpack.c.b16 %v694, %v691
        %v719 = vpack.c.b16 %v695, %v692
        %744 = vmatprep.subr.bf16.mxu0 %v697
        %745 = vmatpush1.bf16.msra.mxu0 %v696
        %746 = vmatprep.subr.bf16.mxu0 %v700
        %747 = vmatpush1.bf16.msra.mxu0 %v699
        %748 = vmatprep.subr.bf16.mxu0 %v703
        %749 = vmatpush1.bf16.msra.mxu0 %v702
        %750 = vmatprep.subr.bf16.mxu0 %v706
        %751 = vmatpush1.bf16.msra.mxu0 %v705
        %752 = vmatprep.subr.bf16.mxu0 %v709
        %753 = vmatpush1.bf16.msra.mxu0 %v708
        %754 = vmatprep.subr.bf16.mxu0 %v712
        %755 = vmatpush1.bf16.msra.mxu0 %v711
        %756 = vmatprep.subr.bf16.mxu0 %v715
        %757 = vmatpush1.bf16.msra.mxu0 %v714
        %758 = vmatprep.subr.bf16.mxu0 %v718
        %759 = vmatpush1.bf16.msra.mxu0 %v717
        %760 = vmatprep.subr.bf16.mxu0 0
        %761 = vmatpush1.bf16.msra.mxu0 0
        %762 = vmatprep.subr.bf16.mxu0 0
        %763 = vmatpush1.bf16.msra.mxu0 0
        %764 = vmatprep.subr.bf16.mxu0 0
        %765 = vmatpush1.bf16.msra.mxu0 0
        %766 = vmatprep.subr.bf16.mxu0 0
        %767 = vmatpush1.bf16.msra.mxu0 0
        %768 = vmatprep.subr.bf16.mxu0 0
        %769 = vmatpush1.bf16.msra.mxu0 0
        %770 = vmatprep.subr.bf16.mxu0 0
        %771 = vmatpush1.bf16.msra.mxu0 0
        %772 = vmatprep.subr.bf16.mxu0 0
        %773 = vmatpush1.bf16.msra.mxu0 0
        %774 = vmatprep.subr.bf16.mxu0 0
        %775 = vmatpush1.bf16.msra.mxu0 0
        %776 = vmatprep.mubr.bf16.mxu0 0
        %777 = vmatmul.mubr.bf16.gmra.mrb[0].mxu0 %v566
        %v778 = vpop.f32.mrb[0].mxu0
        %v779 = vadd.f32 %v604, %v778
        %v780 = vpop.f32.mrb[0].mxu0
        %v781 = vadd.f32 %v608, %v780
        %v782 = vpop.f32.mrb[0].mxu0
        %v783 = vpop.f32.mrb[0].mxu0
        %784 = vdwg.mxu0
        %785 = vmatprep.subr.bf16.mxu0 0
        %786 = vmatpush1.bf16.msra.mxu0 %v698
        %787 = vmatprep.subr.bf16.mxu0 0
        %788 = vmatpush1.bf16.msra.mxu0 %v701
        %789 = vmatprep.subr.bf16.mxu0 0
        %790 = vmatpush1.bf16.msra.mxu0 %v704
        %791 = vmatprep.subr.bf16.mxu0 0
        %792 = vmatpush1.bf16.msra.mxu0 %v707
        %793 = vmatprep.subr.bf16.mxu0 0
        %794 = vmatpush1.bf16.msra.mxu0 %v710
        %795 = vmatprep.subr.bf16.mxu0 0
        %796 = vmatpush1.bf16.msra.mxu0 %v713
        %797 = vmatprep.subr.bf16.mxu0 0
        %798 = vmatpush1.bf16.msra.mxu0 %v716
        %799 = vmatprep.subr.bf16.mxu0 0
        %800 = vmatpush1.bf16.msra.mxu0 %v719
        %801 = vmatprep.subr.bf16.mxu0 0
        %802 = vmatpush1.bf16.msra.mxu0 0
        %803 = vmatprep.subr.bf16.mxu0 0
        %804 = vmatpush1.bf16.msra.mxu0 0
        %805 = vmatprep.subr.bf16.mxu0 0
        %806 = vmatpush1.bf16.msra.mxu0 0
        %807 = vmatprep.subr.bf16.mxu0 0
        %808 = vmatpush1.bf16.msra.mxu0 0
        %809 = vmatprep.subr.bf16.mxu0 0
        %810 = vmatpush1.bf16.msra.mxu0 0
        %811 = vmatprep.subr.bf16.mxu0 0
        %812 = vmatpush1.bf16.msra.mxu0 0
        %813 = vmatprep.subr.bf16.mxu0 0
        %814 = vmatpush1.bf16.msra.mxu0 0
        %815 = vmatprep.subr.bf16.mxu0 0
        %816 = vmatpush1.bf16.msra.mxu0 0
        %817 = vmatprep.mubr.bf16.mxu0 0
        %818 = vmatmul.mubr.bf16.gmra.mrb[0].mxu0 %v566
        %v819 = vpop.f32.mrb[0].mxu0
        %v820 = vadd.f32 %v612, %v819
        %v821 = vpop.f32.mrb[0].mxu0
        %v822 = vpop.f32.mrb[0].mxu0
        %v823 = vpop.f32.mrb[0].mxu0
        %824 = vdwg.mxu0
        %v825 = vadd.f32 %v519, %v779
        %v826 = vxor.u32 %v825, 2147483648
        %v827 = vmul.f32 %v826, 1.442695
        %v828 = vpow.pop %v827
        %v829 = vadd.f32 %v828, 1.0
        %v830 = vrcp.pop %v829
        %v831 = vmul.f32 1.0, %v830
        %v832 = vadd.f32 %v521, %v781
        %v833 = vxor.u32 %v832, 2147483648
        %v834 = vmul.f32 %v833, 1.442695
        %v835 = vpow.pop %v834
        %v836 = vadd.f32 %v835, 1.0
        %v837 = vrcp.pop %v836
        %v838 = vmul.f32 1.0, %v837
        %v839 = vmul.f32 %v831, %v820
        %v840 = vadd.f32 %v560, %v839
        %v841 = vtanh.pop %v840
        %v842 = vsub.f32 1.0, %v838
        %v843 = vmul.f32 %v842, %v841
        %v844 = vmul.f32 %v838, %v565
        %v845 = vadd.f32 %v843, %v844
        %846 = vst [vmem:[#allocation2] sm:$0xff] %v845
        %v847 = vpack.c.bf16 %v845, %v845
        %v848 = vld [vmem:[%s6] sm:$0xf]
        %v849 = vld [vmem:[%s6 + $0x4] sm:$0xf]
        %v850 = vld [vmem:[%s6 + $0x8] sm:$0xf]
        %v851 = vld [vmem:[%s6 + $0xc] sm:$0xf]
        %v852 = vld [vmem:[%s6 + $0x10] sm:$0xf]
        %v853 = vld [vmem:[%s6 + $0x14] sm:$0xf]
        %v854 = vld [vmem:[%s6 + $0x18] sm:$0xf]
        %v855 = vld [vmem:[%s6 + $0x1c] sm:$0xf]
        %v856 = vld [vmem:[%s6 + $0x20] sm:$0xf]
        %v857 = vld [vmem:[%s6 + $0x24] sm:$0xf]
        %v858 = vld [vmem:[%s6 + $0x28] sm:$0xf]
        %v859 = vld [vmem:[%s6 + $0x2c] sm:$0xf]
        %v860 = vld [vmem:[%s6 + $0x30] sm:$0xf]
        %v861 = vld [vmem:[%s6 + $0x34] sm:$0xf]
        %v862 = vld [vmem:[%s6 + $0x38] sm:$0xf]
        %v863 = vld [vmem:[%s6 + $0x3c] sm:$0xf]
        %v864 = vld [vmem:[%s7] sm:$0x1]
        %v866 = vlaneseq
        %v867 = vshrl.u32 %v866, 7
        %v868 = vsub.s32 0, %v867
        %v869 = vrot.slane %v864, %v868
        %v887 = vunpack.c.l.b16 %v848
        %v888 = vunpack.c.l.b16 %v849
        %v889 = vunpack.c.l.b16 %v850
        %v890 = vunpack.c.l.b16 %v851
        %v891 = vunpack.c.l.b16 %v852
        %v892 = vunpack.c.l.b16 %v853
        %v893 = vunpack.c.l.b16 %v854
        %v894 = vunpack.c.l.b16 %v855
        %v895 = vunpack.c.l.b16 %v856
        %v896 = vunpack.c.l.b16 %v857
        %v897 = vunpack.c.l.b16 %v858
        %v898 = vunpack.c.l.b16 %v859
        %v899 = vunpack.c.l.b16 %v860
        %v900 = vunpack.c.l.b16 %v861
        %v901 = vunpack.c.l.b16 %v862
        %v902 = vunpack.c.l.b16 %v863
        %v903 = vpack.c.b16 %v888, %v887
        %v904 = vpack.c.b16 %v890, %v889
        %v905 = vpack.c.b16 %v892, %v891
        %v906 = vpack.c.b16 %v894, %v893
        %v907 = vpack.c.b16 %v896, %v895
        %v908 = vpack.c.b16 %v898, %v897
        %v909 = vpack.c.b16 %v900, %v899
        %v910 = vpack.c.b16 %v902, %v901
        %919 = vmatprep.subr.bf16.mxu0 0
        %920 = vmatpush1.bf16.msra.mxu0 %v903
        %921 = vmatprep.subr.bf16.mxu0 0
        %922 = vmatpush1.bf16.msra.mxu0 %v904
        %923 = vmatprep.subr.bf16.mxu0 0
        %924 = vmatpush1.bf16.msra.mxu0 %v905
        %925 = vmatprep.subr.bf16.mxu0 0
        %926 = vmatpush1.bf16.msra.mxu0 %v906
        %927 = vmatprep.subr.bf16.mxu0 0
        %928 = vmatpush1.bf16.msra.mxu0 %v907
        %929 = vmatprep.subr.bf16.mxu0 0
        %930 = vmatpush1.bf16.msra.mxu0 %v908
        %931 = vmatprep.subr.bf16.mxu0 0
        %932 = vmatpush1.bf16.msra.mxu0 %v909
        %933 = vmatprep.subr.bf16.mxu0 0
        %934 = vmatpush1.bf16.msra.mxu0 %v910
        %935 = vmatprep.subr.bf16.mxu0 0
        %936 = vmatpush1.bf16.msra.mxu0 0
        %937 = vmatprep.subr.bf16.mxu0 0
        %938 = vmatpush1.bf16.msra.mxu0 0
        %939 = vmatprep.subr.bf16.mxu0 0
        %940 = vmatpush1.bf16.msra.mxu0 0
        %941 = vmatprep.subr.bf16.mxu0 0
        %942 = vmatpush1.bf16.msra.mxu0 0
        %943 = vmatprep.subr.bf16.mxu0 0
        %944 = vmatpush1.bf16.msra.mxu0 0
        %945 = vmatprep.subr.bf16.mxu0 0
        %946 = vmatpush1.bf16.msra.mxu0 0
        %947 = vmatprep.subr.bf16.mxu0 0
        %948 = vmatpush1.bf16.msra.mxu0 0
        %949 = vmatprep.subr.bf16.mxu0 0
        %950 = vmatpush1.bf16.msra.mxu0 0
        %951 = vmatprep.mubr.bf16.mxu0 0
        %952 = vmatmul.mubr.bf16.gmra.mrb[0].mxu0 %v847
        %v953 = vpop.f32.mrb[0].mxu0
        %v954 = vadd.f32 %v869, %v953
        %v955 = vpop.f32.mrb[0].mxu0
        %v956 = vpop.f32.mrb[0].mxu0
        %v957 = vpop.f32.mrb[0].mxu0
        %958 = vdwg.mxu0
        %959 = vst [vmem:[%s287] sm:$0xff] %v954
        %960 = vmax.xlane.f32.xlu0 %v954
        %v961 = vpop.xlane.xlu0 %960
        %vm962 = vcmp.eq.f32.partialorder %v954, %v961
        %v963 = vsel %vm962, %v317, 128
        %v964 = vand.u32 %v963, 65535
        %v965 = vshra.s32 %v963, 16
        %v966 = vcvt.s32.f32 %v964
        %v967 = vcvt.s32.f32 %v965
        %968 = vmin.xlane.f32.xlu0 %v967
        %v969 = vpop.xlane.xlu0 %968
        %vm970 = vcmp.eq.f32.partialorder %v967, %v969
        %v971 = vsel %vm970, %v966, inf
        %972 = vmin.xlane.f32.xlu0 %v971
        %v973 = vpop.xlane.xlu0 %972
        %v974 = vcvt.f32.s32 %v973
        %v975 = vcvt.f32.s32 %v969
        %v976 = vshll.u32 %v975, 16
        %v977 = vadd.s32 %v976, %v974
        %vm978 = vcmask 7168
        %979 = vst.msk [vmem:[#allocation3] sm:$0xff] %vm978, %v977
        %v980 = vstv %s31
        %vm981 = vcmp.eq.s32.totalorder %v317, %v980
        %v982 = vld [vmem:[#allocation4] sm:$0xff]
        %v983 = vsel %vm981, %v977, %v982
        %984 = vst [vmem:[#allocation4] sm:$0xff] %v983
        %p985 = scmp.eq.s32.totalorder %s31, 6
        // Predicated region
        $region53: #{_forward_core.3} parent=47 // pred_check
          %p986 = pneg %p985
        $region54: #{_forward_core.3} parent=47 // pred_check_branch
          %988 = sbr.rel (%p986) target = $region56
        $region55: #{_forward_core.3} parent=47 // pred_region
          %v989 = vld [vmem:[#allocation4] sm:$0xff]
          %990 = vst [vmem:[#allocation9] sm:$0xff] %v989
        $region56: #{_forward_core.3} parent=47 // pred_fallthru
          _
        %s991 = sand.u32 %s186, 1
        %s992 = scalar_lea.sflag [#allocation8], %s991
        %s993 = sand.u32 %s186, 1
        %s994 = smul.addr %s993, 8
        %s995 = scalar_lea.vmem [#allocation7], %s994
        // Predicated region
        $region57: #{_forward_core.3} parent=47 // pred_check
          %p996 = pneg %p196
        $region58: #{_forward_core.3} parent=47 // pred_check_branch
          %998 = sbr.rel (%p996) target = $region60
        $region59: #{_forward_core.3} parent=47 // pred_region
          %s1000 = ssub.s32 128, 128
          %1001 = vsyncadd %s992, %s1000
          %s1002 = smul.addr %s31, 128
          %s1003 = scalar_lea.hbm %s8, %s1002
          %s1005 = sshll.u32 %s995, 4
          %s1006 = int_to_ptr.vmem [resolvable:$true] %s1005
          %1008 = dma.vmem_to_hbm [thread:$0]  %s1006, 128, %s1003, %s992
        $region60: #{_forward_core.3} parent=47 // pred_fallthru
          _
        // Predicated region
        $region61: #{_forward_core.3} parent=47 // pred_check
          %p1009 = pneg %p217
        $region62: #{_forward_core.3} parent=47 // pred_check_branch
          %1011 = sbr.rel (%p1009) target = $region64
        $region63: #{_forward_core.3} parent=47 // pred_region
          %s1013 = ssub.s32 128, 128
          %1014 = vsyncadd [#allocation10], %s1013
          %s1016 = sshll.u32 [#allocation9], 4
          %s1017 = int_to_ptr.vmem [resolvable:$true] %s1016
          %1019 = dma.vmem_to_hbm [thread:$0]  %s1017, 128, %s9, [#allocation10]
        $region64: #{_forward_core.3} parent=47 // pred_fallthru
          _
        // Predicated region
        $region65: #{_forward_core.3} parent=47 // pred_check
          %p1020 = pneg %p217
        $region66: #{_forward_core.3} parent=47 // pred_check_branch
          %1022 = sbr.rel (%p1020) target = $region68
        $region67: #{_forward_core.3} parent=47 // pred_region
          %1023 = dma.done [#allocation10], 128
        $region68: #{_forward_core.3} parent=47 // pred_fallthru
          _
      $region48: #{_forward_core.3} parent=5 // pred_fallthru
        _
      %p1024 = scmp.le.s32.totalorder 2, %s26
      // Predicated region
      $region69: #{_forward_core.3} parent=5 // pred_check
        %p1025 = pneg %p1024
      $region70: #{_forward_core.3} parent=5 // pred_check_branch
        %1027 = sbr.rel (%p1025) target = $region72
      $region71: #{_forward_core.3} parent=5 // pred_region
        %s1028 = ssub.s32 %s26, 2
        // Predicated region
        $region73: #{_forward_core.3} parent=71 // pred_check
          %p1029 = pneg %p202
        $region74: #{_forward_core.3} parent=71 // pred_check_branch
          %1031 = sbr.rel (%p1029) target = $region76
        $region75: #{_forward_core.3} parent=71 // pred_region
          %s1032 = sand.u32 %s187, 1
          %s1033 = scalar_lea.sflag [#allocation8], %s1032
          %s1034 = sand.u32 %s187, 1
          %s1035 = smul.addr %s1034, 8
          %s1036 = scalar_lea.vmem [#allocation7], %s1035
          %1037 = dma.done %s1033, 128
        $region76: #{_forward_core.3} parent=71 // pred_fallthru
          _
      $region72: #{_forward_core.3} parent=5 // pred_fallthru
        _
    $region6: #{_forward_core.3} parent=1 // loop_footer
      %s30 = sadd.s32 1, %s26
    $region7: #{_forward_core.3} parent=1 // loop_footer_branch
      %25 = sbr.rel target = $region3
    $region8: #{_forward_core.3} parent=1 // loop_exit
      _
    %1038 = vsyncpa [#allocation8], 1
    %s1039 = scalar_lea.sflag [#allocation8], 1
    %1040 = vsyncpa %s1039, 1
    %1041 = vsyncpa [#allocation10], 1

// kernel: _forward_core.2
$region0: #{_forward_core.2}
  #allocation0 [shape = 'u32[]', space=smem, size = 0x4, offset = 0x4, fixed_abs, tag = 'smem constant byte address 0x4 - core index']
  #allocation1 [shape = 'u32[144,128]{1,0:T(1,128)}', space=vmem, size = 0x12000, scoped, tag = 'internal scratch']
  #allocation2 [shape = 'f32[2,8,128]{2,1,0:T(8,128)}', space=vmem, size = 0x2000, scoped, tag = 'scratch operand']
  %s0 = inlined_call_operand.vmem [shape: bf16[2,64,16], index: 0, kind: input, shape index: {}]
  %s1 = inlined_call_operand.vmem [shape: bf16[2,16,384], index: 1, kind: input, shape index: {}]
  %s2 = inlined_call_operand.vmem [shape: f32[2,1,384], index: 2, kind: input, shape index: {}]
  %s3 = inlined_call_operand.vmem [shape: bf16[2,128,384], index: 3, kind: input, shape index: {}]
  %s4 = inlined_call_operand.vmem [shape: f32[2,1,384], index: 4, kind: input, shape index: {}]
  %s5 = inlined_call_operand.vmem [shape: f32[2,8,128], index: 5, kind: output, shape index: {}]
  %s6 = sld [smem:[#allocation0]]
  $region38: #{_forward_core.2} parent=0
    _
  %s8 = ssub.s32 1, %s6
  %s9 = scalar_select 0, %s8, %s6
  // Predicated region
  $region2: #{_forward_core.2} parent=0 // pred_check
    _
  $region3: #{_forward_core.2} parent=0 // pred_check_branch
    %11 = sbr.rel (0) target = $region5
  $region4: #{_forward_core.2} parent=0 // pred_region
    _
  $region5: #{_forward_core.2} parent=0 // pred_fallthru
    _
  // Predicated region
  $region6: #{_forward_core.2} parent=0 // pred_check
    _
  $region7: #{_forward_core.2} parent=0 // pred_check_branch
    %13 = sbr.rel (0) target = $region9
  $region8: #{_forward_core.2} parent=0 // pred_region
    _
  $region9: #{_forward_core.2} parent=0 // pred_fallthru
    _
  // Predicated region
  $region10: #{_forward_core.2} parent=0 // pred_check
    _
  $region11: #{_forward_core.2} parent=0 // pred_check_branch
    %15 = sbr.rel (0) target = $region13
  $region12: #{_forward_core.2} parent=0 // pred_region
    _
  $region13: #{_forward_core.2} parent=0 // pred_fallthru
    _
  // Predicated region
  $region14: #{_forward_core.2} parent=0 // pred_check
    _
  $region15: #{_forward_core.2} parent=0 // pred_check_branch
    %17 = sbr.rel (0) target = $region17
  $region16: #{_forward_core.2} parent=0 // pred_region
    _
  $region17: #{_forward_core.2} parent=0 // pred_fallthru
    _
  // Predicated region
  $region18: #{_forward_core.2} parent=0 // pred_check
    _
  $region19: #{_forward_core.2} parent=0 // pred_check_branch
    %19 = sbr.rel (0) target = $region21
  $region20: #{_forward_core.2} parent=0 // pred_region
    _
  $region21: #{_forward_core.2} parent=0 // pred_fallthru
    _
  %p21 = scmp.eq.s32.totalorder 0, 0
  // Predicated region
  $region22: #{_forward_core.2} parent=0 // pred_check
    %p22 = pneg %p21
  $region23: #{_forward_core.2} parent=0 // pred_check_branch
    %24 = sbr.rel (%p22) target = $region25
  $region24: #{_forward_core.2} parent=0 // pred_region
    %25 = vst [vmem:[#allocation2] sm:$0xff] 0.0
    %26 = vst [vmem:[#allocation2 + $0x8] sm:$0xff] 0.0
  $region25: #{_forward_core.2} parent=0 // pred_fallthru
    _
  %v27 = vld [vmem:[%s0] sm:$0xf]
  %v28 = vld [vmem:[%s0 + $0x4] sm:$0xf]
  %v29 = vld [vmem:[%s0 + $0x8] sm:$0xf]
  %v30 = vld [vmem:[%s0 + $0xc] sm:$0xf]
  %v31 = vld [vmem:[%s0 + $0x10] sm:$0xf]
  %v32 = vld [vmem:[%s0 + $0x14] sm:$0xf]
  %v33 = vld [vmem:[%s0 + $0x18] sm:$0xf]
  %v34 = vld [vmem:[%s0 + $0x1c] sm:$0xf]
  %v35 = vld [vmem:[%s1] sm:$0xff]
  %v36 = vld [vmem:[%s1 + $0x8] sm:$0xf]
  %v37 = vld [vmem:[%s1 + $0xc] sm:$0xff]
  %v38 = vld [vmem:[%s1 + $0x14] sm:$0xf]
  %v39 = vld [vmem:[%s2] sm:$0x7]
  %v41 = vlaneseq
  %v42 = vshrl.u32 %v41, 7
  %v43 = vsub.s32 0, %v42
  %v44 = vrot.slane %v39, %v43
  %v45 = vlaneseq
  %v46 = vshrl.u32 %v45, 7
  %v47 = vsub.s32 1, %v46
  %v48 = vrot.slane %v39, %v47
  %v49 = vlaneseq
  %v50 = vshrl.u32 %v49, 7
  %v51 = vsub.s32 2, %v50
  %v52 = vrot.slane %v39, %v51
  %v64 = vunpack.c.l.b16 %v27
  %v65 = vunpack.c.l.b16 %v28
  %v66 = vunpack.c.l.b16 %v29
  %v67 = vunpack.c.l.b16 %v30
  %v68 = vunpack.c.l.b16 %v31
  %v69 = vunpack.c.l.b16 %v32
  %v70 = vunpack.c.l.b16 %v33
  %v71 = vunpack.c.l.b16 %v34
  %v72 = vpack.c.b16 %v65, %v64
  %v73 = vpack.c.b16 %v67, %v66
  %v74 = vpack.c.b16 %v69, %v68
  %v75 = vpack.c.b16 %v71, %v70
  %v80 = vunpack.c.l.b16 %v35
  %v81 = vunpack.c.h.b16 %v35
  %v82 = vunpack.c.l.b16 %v36
  %v83 = vunpack.c.l.b16 %v37
  %v84 = vunpack.c.h.b16 %v37
  %v85 = vunpack.c.l.b16 %v38
  %v86 = vpack.c.b16 %v83, %v80
  %v87 = vpack.c.b16 %v84, %v81
  %v88 = vpack.c.b16 %v85, %v82
  %vm92 = vcmask 130048
  %v94 = vsel %vm92, %v72, 0
  %v97 = vsel %vm92, %v73, 0
  %v100 = vsel %vm92, %v74, 0
  %v103 = vsel %vm92, %v75, 0
  %105 = vmatprep.subr.bf16.mxu0 %v87
  %106 = vmatpush1.bf16.msra.mxu0 %v86
  %107 = vmatprep.subr.bf16.mxu0 0
  %108 = vmatpush1.bf16.msra.mxu0 0
  %109 = vmatprep.subr.bf16.mxu0 0
  %110 = vmatpush1.bf16.msra.mxu0 0
  %111 = vmatprep.subr.bf16.mxu0 0
  %112 = vmatpush1.bf16.msra.mxu0 0
  %113 = vmatprep.subr.bf16.mxu0 0
  %114 = vmatpush1.bf16.msra.mxu0 0
  %115 = vmatprep.subr.bf16.mxu0 0
  %116 = vmatpush1.bf16.msra.mxu0 0
  %117 = vmatprep.subr.bf16.mxu0 0
  %118 = vmatpush1.bf16.msra.mxu0 0
  %119 = vmatprep.subr.bf16.mxu0 0
  %120 = vmatpush1.bf16.msra.mxu0 0
  %121 = vmatprep.subr.bf16.mxu0 0
  %122 = vmatpush1.bf16.msra.mxu0 0
  %123 = vmatprep.subr.bf16.mxu0 0
  %124 = vmatpush1.bf16.msra.mxu0 0
  %125 = vmatprep.subr.bf16.mxu0 0
  %126 = vmatpush1.bf16.msra.mxu0 0
  %127 = vmatprep.subr.bf16.mxu0 0
  %128 = vmatpush1.bf16.msra.mxu0 0
  %129 = vmatprep.subr.bf16.mxu0 0
  %130 = vmatpush1.bf16.msra.mxu0 0
  %131 = vmatprep.subr.bf16.mxu0 0
  %132 = vmatpush1.bf16.msra.mxu0 0
  %133 = vmatprep.subr.bf16.mxu0 0
  %134 = vmatpush1.bf16.msra.mxu0 0
  %135 = vmatprep.subr.bf16.mxu0 0
  %136 = vmatpush1.bf16.msra.mxu0 0
  %137 = vmatprep.mubr.bf16.mxu0 0
  %138 = vmatmul.mubr.bf16.gmra.mrb[0].mxu0 %v94
  %v139 = vpop.f32.mrb[0].mxu0
  %v140 = vadd.f32 %v44, %v139
  %v141 = vpop.f32.mrb[0].mxu0
  %v142 = vadd.f32 %v48, %v141
  %v143 = vpop.f32.mrb[0].mxu0
  %v144 = vadd.f32 %v44, %v143
  %v145 = vpop.f32.mrb[0].mxu0
  %v146 = vadd.f32 %v48, %v145
  %147 = vmatprep.mubr.bf16.mxu0 0
  %148 = vmatmul.mubr.bf16.gmra.mrb[0].mxu0 %v97
  %v149 = vpop.f32.mrb[0].mxu0
  %v150 = vadd.f32 %v44, %v149
  %v151 = vpop.f32.mrb[0].mxu0
  %v152 = vadd.f32 %v48, %v151
  %v153 = vpop.f32.mrb[0].mxu0
  %v154 = vadd.f32 %v44, %v153
  %v155 = vpop.f32.mrb[0].mxu0
  %v156 = vadd.f32 %v48, %v155
  %157 = vmatprep.mubr.bf16.mxu0 0
  %158 = vmatmul.mubr.bf16.gmra.mrb[0].mxu0 %v100
  %v159 = vpop.f32.mrb[0].mxu0
  %v160 = vadd.f32 %v44, %v159
  %v161 = vpop.f32.mrb[0].mxu0
  %v162 = vadd.f32 %v48, %v161
  %v163 = vpop.f32.mrb[0].mxu0
  %v164 = vadd.f32 %v44, %v163
  %v165 = vpop.f32.mrb[0].mxu0
  %v166 = vadd.f32 %v48, %v165
  %167 = vmatprep.mubr.bf16.mxu0 0
  %168 = vmatmul.mubr.bf16.gmra.mrb[0].mxu0 %v103
  %v169 = vpop.f32.mrb[0].mxu0
  %v170 = vadd.f32 %v44, %v169
  %v171 = vpop.f32.mrb[0].mxu0
  %v172 = vadd.f32 %v48, %v171
  %v173 = vpop.f32.mrb[0].mxu0
  %v174 = vadd.f32 %v44, %v173
  %v175 = vpop.f32.mrb[0].mxu0
  %v176 = vadd.f32 %v48, %v175
  %177 = vdwg.mxu0
  %178 = vmatprep.subr.bf16.mxu0 0
  %179 = vmatpush1.bf16.msra.mxu0 %v88
  %180 = vmatprep.subr.bf16.mxu0 0
  %181 = vmatpush1.bf16.msra.mxu0 0
  %182 = vmatprep.subr.bf16.mxu0 0
  %183 = vmatpush1.bf16.msra.mxu0 0
  %184 = vmatprep.subr.bf16.mxu0 0
  %185 = vmatpush1.bf16.msra.mxu0 0
  %186 = vmatprep.subr.bf16.mxu0 0
  %187 = vmatpush1.bf16.msra.mxu0 0
  %188 = vmatprep.subr.bf16.mxu0 0
  %189 = vmatpush1.bf16.msra.mxu0 0
  %190 = vmatprep.subr.bf16.mxu0 0
  %191 = vmatpush1.bf16.msra.mxu0 0
  %192 = vmatprep.subr.bf16.mxu0 0
  %193 = vmatpush1.bf16.msra.mxu0 0
  %194 = vmatprep.subr.bf16.mxu0 0
  %195 = vmatpush1.bf16.msra.mxu0 0
  %196 = vmatprep.subr.bf16.mxu0 0
  %197 = vmatpush1.bf16.msra.mxu0 0
  %198 = vmatprep.subr.bf16.mxu0 0
  %199 = vmatpush1.bf16.msra.mxu0 0
  %200 = vmatprep.subr.bf16.mxu0 0
  %201 = vmatpush1.bf16.msra.mxu0 0
  %202 = vmatprep.subr.bf16.mxu0 0
  %203 = vmatpush1.bf16.msra.mxu0 0
  %204 = vmatprep.subr.bf16.mxu0 0
  %205 = vmatpush1.bf16.msra.mxu0 0
  %206 = vmatprep.subr.bf16.mxu0 0
  %207 = vmatpush1.bf16.msra.mxu0 0
  %208 = vmatprep.subr.bf16.mxu0 0
  %209 = vmatpush1.bf16.msra.mxu0 0
  %210 = vmatprep.mubr.bf16.mxu0 0
  %211 = vmatmul.mubr.bf16.gmra.mrb[0].mxu0 %v94
  %v212 = vpop.f32.mrb[0].mxu0
  %v213 = vadd.f32 %v52, %v212
  %v214 = vpop.f32.mrb[0].mxu0
  %v215 = vpop.f32.mrb[0].mxu0
  %v216 = vadd.f32 %v52, %v215
  %v217 = vpop.f32.mrb[0].mxu0
  %218 = vmatprep.mubr.bf16.mxu0 0
  %219 = vmatmul.mubr.bf16.gmra.mrb[0].mxu0 %v97
  %v220 = vpop.f32.mrb[0].mxu0
  %v221 = vadd.f32 %v52, %v220
  %v222 = vpop.f32.mrb[0].mxu0
  %v223 = vpop.f32.mrb[0].mxu0
  %v224 = vadd.f32 %v52, %v223
  %v225 = vpop.f32.mrb[0].mxu0
  %226 = vmatprep.mubr.bf16.mxu0 0
  %227 = vmatmul.mubr.bf16.gmra.mrb[0].mxu0 %v100
  %v228 = vpop.f32.mrb[0].mxu0
  %v229 = vadd.f32 %v52, %v228
  %v230 = vpop.f32.mrb[0].mxu0
  %v231 = vpop.f32.mrb[0].mxu0
  %v232 = vadd.f32 %v52, %v231
  %v233 = vpop.f32.mrb[0].mxu0
  %234 = vmatprep.mubr.bf16.mxu0 0
  %235 = vmatmul.mubr.bf16.gmra.mrb[0].mxu0 %v103
  %v236 = vpop.f32.mrb[0].mxu0
  %v237 = vadd.f32 %v52, %v236
  %v238 = vpop.f32.mrb[0].mxu0
  %v239 = vpop.f32.mrb[0].mxu0
  %v240 = vadd.f32 %v52, %v239
  %v241 = vpop.f32.mrb[0].mxu0
  %242 = vdwg.mxu0
  %s243 = scalar_lea.vmem %s0, 32
  %v244 = vld [vmem:[%s243] sm:$0xf]
  %v245 = vld [vmem:[%s243 + $0x4] sm:$0xf]
  %v246 = vld [vmem:[%s243 + $0x8] sm:$0xf]
  %v247 = vld [vmem:[%s243 + $0xc] sm:$0xf]
  %v248 = vld [vmem:[%s243 + $0x10] sm:$0xf]
  %v249 = vld [vmem:[%s243 + $0x14] sm:$0xf]
  %v250 = vld [vmem:[%s243 + $0x18] sm:$0xf]
  %v251 = vld [vmem:[%s243 + $0x1c] sm:$0xf]
  %s252 = scalar_lea.vmem %s1, 24
  %v253 = vld [vmem:[%s252] sm:$0xff]
  %v254 = vld [vmem:[%s252 + $0x8] sm:$0xf]
  %v255 = vld [vmem:[%s252 + $0xc] sm:$0xff]
  %v256 = vld [vmem:[%s252 + $0x14] sm:$0xf]
  %s257 = scalar_lea.vmem %s2, 3
  %v258 = vld [vmem:[%s257] sm:$0x7]
  %v260 = vlaneseq
  %v261 = vshrl.u32 %v260, 7
  %v262 = vsub.s32 0, %v261
  %v263 = vrot.slane %v258, %v262
  %v264 = vlaneseq
  %v265 = vshrl.u32 %v264, 7
  %v266 = vsub.s32 1, %v265
  %v267 = vrot.slane %v258, %v266
  %v268 = vlaneseq
  %v269 = vshrl.u32 %v268, 7
  %v270 = vsub.s32 2, %v269
  %v271 = vrot.slane %v258, %v270
  %v283 = vunpack.c.l.b16 %v244
  %v284 = vunpack.c.l.b16 %v245
  %v285 = vunpack.c.l.b16 %v246
  %v286 = vunpack.c.l.b16 %v247
  %v287 = vunpack.c.l.b16 %v248
  %v288 = vunpack.c.l.b16 %v249
  %v289 = vunpack.c.l.b16 %v250
  %v290 = vunpack.c.l.b16 %v251
  %v291 = vpack.c.b16 %v284, %v283
  %v292 = vpack.c.b16 %v286, %v285
  %v293 = vpack.c.b16 %v288, %v287
  %v294 = vpack.c.b16 %v290, %v289
  %v299 = vunpack.c.l.b16 %v253
  %v300 = vunpack.c.h.b16 %v253
  %v301 = vunpack.c.l.b16 %v254
  %v302 = vunpack.c.l.b16 %v255
  %v303 = vunpack.c.h.b16 %v255
  %v304 = vunpack.c.l.b16 %v256
  %v305 = vpack.c.b16 %v302, %v299
  %v306 = vpack.c.b16 %v303, %v300
  %v307 = vpack.c.b16 %v304, %v301
  %v312 = vsel %vm92, %v291, 0
  %v315 = vsel %vm92, %v292, 0
  %v318 = vsel %vm92, %v293, 0
  %v321 = vsel %vm92, %v294, 0
  %323 = vmatprep.subr.bf16.mxu0 %v306
  %324 = vmatpush1.bf16.msra.mxu0 %v305
  %325 = vmatprep.subr.bf16.mxu0 0
  %326 = vmatpush1.bf16.msra.mxu0 0
  %327 = vmatprep.subr.bf16.mxu0 0
  %328 = vmatpush1.bf16.msra.mxu0 0
  %329 = vmatprep.subr.bf16.mxu0 0
  %330 = vmatpush1.bf16.msra.mxu0 0
  %331 = vmatprep.subr.bf16.mxu0 0
  %332 = vmatpush1.bf16.msra.mxu0 0
  %333 = vmatprep.subr.bf16.mxu0 0
  %334 = vmatpush1.bf16.msra.mxu0 0
  %335 = vmatprep.subr.bf16.mxu0 0
  %336 = vmatpush1.bf16.msra.mxu0 0
  %337 = vmatprep.subr.bf16.mxu0 0
  %338 = vmatpush1.bf16.msra.mxu0 0
  %339 = vmatprep.subr.bf16.mxu0 0
  %340 = vmatpush1.bf16.msra.mxu0 0
  %341 = vmatprep.subr.bf16.mxu0 0
  %342 = vmatpush1.bf16.msra.mxu0 0
  %343 = vmatprep.subr.bf16.mxu0 0
  %344 = vmatpush1.bf16.msra.mxu0 0
  %345 = vmatprep.subr.bf16.mxu0 0
  %346 = vmatpush1.bf16.msra.mxu0 0
  %347 = vmatprep.subr.bf16.mxu0 0
  %348 = vmatpush1.bf16.msra.mxu0 0
  %349 = vmatprep.subr.bf16.mxu0 0
  %350 = vmatpush1.bf16.msra.mxu0 0
  %351 = vmatprep.subr.bf16.mxu0 0
  %352 = vmatpush1.bf16.msra.mxu0 0
  %353 = vmatprep.subr.bf16.mxu0 0
  %354 = vmatpush1.bf16.msra.mxu0 0
  %355 = vmatprep.mubr.bf16.mxu0 0
  %356 = vmatmul.mubr.bf16.gmra.mrb[0].mxu0 %v312
  %v357 = vpop.f32.mrb[0].mxu0
  %v358 = vadd.f32 %v263, %v357
  %v359 = vpop.f32.mrb[0].mxu0
  %v360 = vadd.f32 %v267, %v359
  %v361 = vpop.f32.mrb[0].mxu0
  %v362 = vadd.f32 %v263, %v361
  %v363 = vpop.f32.mrb[0].mxu0
  %v364 = vadd.f32 %v267, %v363
  %365 = vmatprep.mubr.bf16.mxu0 0
  %366 = vmatmul.mubr.bf16.gmra.mrb[0].mxu0 %v315
  %v367 = vpop.f32.mrb[0].mxu0
  %v368 = vadd.f32 %v263, %v367
  %v369 = vpop.f32.mrb[0].mxu0
  %v370 = vadd.f32 %v267, %v369
  %v371 = vpop.f32.mrb[0].mxu0
  %v372 = vadd.f32 %v263, %v371
  %v373 = vpop.f32.mrb[0].mxu0
  %v374 = vadd.f32 %v267, %v373
  %375 = vmatprep.mubr.bf16.mxu0 0
  %376 = vmatmul.mubr.bf16.gmra.mrb[0].mxu0 %v318
  %v377 = vpop.f32.mrb[0].mxu0
  %v378 = vadd.f32 %v263, %v377
  %v379 = vpop.f32.mrb[0].mxu0
  %v380 = vadd.f32 %v267, %v379
  %v381 = vpop.f32.mrb[0].mxu0
  %v382 = vadd.f32 %v263, %v381
  %v383 = vpop.f32.mrb[0].mxu0
  %v384 = vadd.f32 %v267, %v383
  %385 = vmatprep.mubr.bf16.mxu0 0
  %386 = vmatmul.mubr.bf16.gmra.mrb[0].mxu0 %v321
  %v387 = vpop.f32.mrb[0].mxu0
  %v388 = vadd.f32 %v263, %v387
  %v389 = vpop.f32.mrb[0].mxu0
  %v390 = vadd.f32 %v267, %v389
  %v391 = vpop.f32.mrb[0].mxu0
  %v392 = vadd.f32 %v263, %v391
  %v393 = vpop.f32.mrb[0].mxu0
  %v394 = vadd.f32 %v267, %v393
  %395 = vdwg.mxu0
  %396 = vmatprep.subr.bf16.mxu0 0
  %397 = vmatpush1.bf16.msra.mxu0 %v307
  %398 = vmatprep.subr.bf16.mxu0 0
  %399 = vmatpush1.bf16.msra.mxu0 0
  %400 = vmatprep.subr.bf16.mxu0 0
  %401 = vmatpush1.bf16.msra.mxu0 0
  %402 = vmatprep.subr.bf16.mxu0 0
  %403 = vmatpush1.bf16.msra.mxu0 0
  %404 = vmatprep.subr.bf16.mxu0 0
  %405 = vmatpush1.bf16.msra.mxu0 0
  %406 = vmatprep.subr.bf16.mxu0 0
  %407 = vmatpush1.bf16.msra.mxu0 0
  %408 = vmatprep.subr.bf16.mxu0 0
  %409 = vmatpush1.bf16.msra.mxu0 0
  %410 = vmatprep.subr.bf16.mxu0 0
  %411 = vmatpush1.bf16.msra.mxu0 0
  %412 = vmatprep.subr.bf16.mxu0 0
  %413 = vmatpush1.bf16.msra.mxu0 0
  %414 = vmatprep.subr.bf16.mxu0 0
  %415 = vmatpush1.bf16.msra.mxu0 0
  %416 = vmatprep.subr.bf16.mxu0 0
  %417 = vmatpush1.bf16.msra.mxu0 0
  %418 = vmatprep.subr.bf16.mxu0 0
  %419 = vmatpush1.bf16.msra.mxu0 0
  %420 = vmatprep.subr.bf16.mxu0 0
  %421 = vmatpush1.bf16.msra.mxu0 0
  %422 = vmatprep.subr.bf16.mxu0 0
  %423 = vmatpush1.bf16.msra.mxu0 0
  %424 = vmatprep.subr.bf16.mxu0 0
  %425 = vmatpush1.bf16.msra.mxu0 0
  %426 = vmatprep.subr.bf16.mxu0 0
  %427 = vmatpush1.bf16.msra.mxu0 0
  %428 = vmatprep.mubr.bf16.mxu0 0
  %429 = vmatmul.mubr.bf16.gmra.mrb[0].mxu0 %v312
  %v430 = vpop.f32.mrb[0].mxu0
  %v431 = vadd.f32 %v271, %v430
  %v432 = vpop.f32.mrb[0].mxu0
  %v433 = vpop.f32.mrb[0].mxu0
  %v434 = vadd.f32 %v271, %v433
  %v435 = vpop.f32.mrb[0].mxu0
  %436 = vmatprep.mubr.bf16.mxu0 0
  %437 = vmatmul.mubr.bf16.gmra.mrb[0].mxu0 %v315
  %v438 = vpop.f32.mrb[0].mxu0
  %v439 = vadd.f32 %v271, %v438
  %v440 = vpop.f32.mrb[0].mxu0
  %v441 = vpop.f32.mrb[0].mxu0
  %v442 = vadd.f32 %v271, %v441
  %v443 = vpop.f32.mrb[0].mxu0
  %444 = vmatprep.mubr.bf16.mxu0 0
  %445 = vmatmul.mubr.bf16.gmra.mrb[0].mxu0 %v318
  %v446 = vpop.f32.mrb[0].mxu0
  %v447 = vadd.f32 %v271, %v446
  %v448 = vpop.f32.mrb[0].mxu0
  %v449 = vpop.f32.mrb[0].mxu0
  %v450 = vadd.f32 %v271, %v449
  %v451 = vpop.f32.mrb[0].mxu0
  %452 = vmatprep.mubr.bf16.mxu0 0
  %453 = vmatmul.mubr.bf16.gmra.mrb[0].mxu0 %v321
  %v454 = vpop.f32.mrb[0].mxu0
  %v455 = vadd.f32 %v271, %v454
  %v456 = vpop.f32.mrb[0].mxu0
  %v457 = vpop.f32.mrb[0].mxu0
  %v458 = vadd.f32 %v271, %v457
  %v459 = vpop.f32.mrb[0].mxu0
  %460 = vdwg.mxu0
  %v461 = vld [vmem:[%s3] sm:$0xff]
  %v462 = vld [vmem:[%s3 + $0x8] sm:$0xf]
  %v463 = vld [vmem:[%s3 + $0xc] sm:$0xff]
  %v464 = vld [vmem:[%s3 + $0x14] sm:$0xf]
  %v465 = vld [vmem:[%s3 + $0x18] sm:$0xff]
  %v466 = vld [vmem:[%s3 + $0x20] sm:$0xf]
  %v467 = vld [vmem:[%s3 + $0x24] sm:$0xff]
  %v468 = vld [vmem:[%s3 + $0x2c] sm:$0xf]
  %v469 = vld [vmem:[%s3 + $0x30] sm:$0xff]
  %v470 = vld [vmem:[%s3 + $0x38] sm:$0xf]
  %v471 = vld [vmem:[%s3 + $0x3c] sm:$0xff]
  %v472 = vld [vmem:[%s3 + $0x44] sm:$0xf]
  %v473 = vld [vmem:[%s3 + $0x48] sm:$0xff]
  %v474 = vld [vmem:[%s3 + $0x50] sm:$0xf]
  %v475 = vld [vmem:[%s3 + $0x54] sm:$0xff]
  %v476 = vld [vmem:[%s3 + $0x5c] sm:$0xf]
  %v477 = vld [vmem:[%s3 + $0x60] sm:$0xff]
  %v478 = vld [vmem:[%s3 + $0x68] sm:$0xf]
  %v479 = vld [vmem:[%s3 + $0x6c] sm:$0xff]
  %v480 = vld [vmem:[%s3 + $0x74] sm:$0xf]
  %v481 = vld [vmem:[%s3 + $0x78] sm:$0xff]
  %v482 = vld [vmem:[%s3 + $0x80] sm:$0xf]
  %v483 = vld [vmem:[%s3 + $0x84] sm:$0xff]
  %v484 = vld [vmem:[%s3 + $0x8c] sm:$0xf]
  %v485 = vld [vmem:[%s3 + $0x90] sm:$0xff]
  %v486 = vld [vmem:[%s3 + $0x98] sm:$0xf]
  %v487 = vld [vmem:[%s3 + $0x9c] sm:$0xff]
  %v488 = vld [vmem:[%s3 + $0xa4] sm:$0xf]
  %v489 = vld [vmem:[%s3 + $0xa8] sm:$0xff]
  %v490 = vld [vmem:[%s3 + $0xb0] sm:$0xf]
  %v491 = vld [vmem:[%s3 + $0xb4] sm:$0xff]
  %v492 = vld [vmem:[%s3 + $0xbc] sm:$0xf]
  %s493 = scalar_lea.vmem %s3, 192
  %v494 = vld [vmem:[%s493] sm:$0xff]
  %v495 = vld [vmem:[%s493 + $0x8] sm:$0xf]
  %v496 = vld [vmem:[%s493 + $0xc] sm:$0xff]
  %v497 = vld [vmem:[%s493 + $0x14] sm:$0xf]
  %v498 = vld [vmem:[%s493 + $0x18] sm:$0xff]
  %v499 = vld [vmem:[%s493 + $0x20] sm:$0xf]
  %v500 = vld [vmem:[%s493 + $0x24] sm:$0xff]
  %v501 = vld [vmem:[%s493 + $0x2c] sm:$0xf]
  %v502 = vld [vmem:[%s493 + $0x30] sm:$0xff]
  %v503 = vld [vmem:[%s493 + $0x38] sm:$0xf]
  %v504 = vld [vmem:[%s493 + $0x3c] sm:$0xff]
  %v505 = vld [vmem:[%s493 + $0x44] sm:$0xf]
  %v506 = vld [vmem:[%s493 + $0x48] sm:$0xff]
  %v507 = vld [vmem:[%s493 + $0x50] sm:$0xf]
  %v508 = vld [vmem:[%s493 + $0x54] sm:$0xff]
  %v509 = vld [vmem:[%s493 + $0x5c] sm:$0xf]
  %v510 = vld [vmem:[%s493 + $0x60] sm:$0xff]
  %v511 = vld [vmem:[%s493 + $0x68] sm:$0xf]
  %v512 = vld [vmem:[%s493 + $0x6c] sm:$0xff]
  %v513 = vld [vmem:[%s493 + $0x74] sm:$0xf]
  %v514 = vld [vmem:[%s493 + $0x78] sm:$0xff]
  %v515 = vld [vmem:[%s493 + $0x80] sm:$0xf]
  %v516 = vld [vmem:[%s493 + $0x84] sm:$0xff]
  %v517 = vld [vmem:[%s493 + $0x8c] sm:$0xf]
  %v518 = vld [vmem:[%s493 + $0x90] sm:$0xff]
  %v519 = vld [vmem:[%s493 + $0x98] sm:$0xf]
  %v520 = vld [vmem:[%s493 + $0x9c] sm:$0xff]
  %v521 = vld [vmem:[%s493 + $0xa4] sm:$0xf]
  %v522 = vld [vmem:[%s493 + $0xa8] sm:$0xff]
  %v523 = vld [vmem:[%s493 + $0xb0] sm:$0xf]
  %v524 = vld [vmem:[%s493 + $0xb4] sm:$0xff]
  %v525 = vld [vmem:[%s493 + $0xbc] sm:$0xf]
  %v526 = vld [vmem:[%s4] sm:$0x7]
  %s527 = scalar_lea.vmem %s4, 3
  %v528 = vld [vmem:[%s527] sm:$0x7]
  %v529 = vld [vmem:[#allocation2] sm:$0xff]
  %s530 = scalar_lea.vmem [#allocation2], 8
  %v531 = vld [vmem:[%s530] sm:$0xff]
  %v532 = vpack.c.bf16 %v529, %v529
  %v534 = vlaneseq
  %v535 = vshrl.u32 %v534, 7
  %v536 = vsub.s32 0, %v535
  %v537 = vrot.slane %v526, %v536
  %v538 = vlaneseq
  %v539 = vshrl.u32 %v538, 7
  %v540 = vsub.s32 1, %v539
  %v541 = vrot.slane %v526, %v540
  %v542 = vlaneseq
  %v543 = vshrl.u32 %v542, 7
  %v544 = vsub.s32 2, %v543
  %v545 = vrot.slane %v526, %v544
  %v581 = vunpack.c.l.b16 %v461
  %v582 = vunpack.c.h.b16 %v461
  %v583 = vunpack.c.l.b16 %v462
  %v584 = vunpack.c.l.b16 %v463
  %v585 = vunpack.c.h.b16 %v463
  %v586 = vunpack.c.l.b16 %v464
  %v587 = vunpack.c.l.b16 %v465
  %v588 = vunpack.c.h.b16 %v465
  %v589 = vunpack.c.l.b16 %v466
  %v590 = vunpack.c.l.b16 %v467
  %v591 = vunpack.c.h.b16 %v467
  %v592 = vunpack.c.l.b16 %v468
  %v593 = vunpack.c.l.b16 %v469
  %v594 = vunpack.c.h.b16 %v469
  %v595 = vunpack.c.l.b16 %v470
  %v596 = vunpack.c.l.b16 %v471
  %v597 = vunpack.c.h.b16 %v471
  %v598 = vunpack.c.l.b16 %v472
  %v599 = vunpack.c.l.b16 %v473
  %v600 = vunpack.c.h.b16 %v473
  %v601 = vunpack.c.l.b16 %v474
  %v602 = vunpack.c.l.b16 %v475
  %v603 = vunpack.c.h.b16 %v475
  %v604 = vunpack.c.l.b16 %v476
  %v605 = vunpack.c.l.b16 %v477
  %v606 = vunpack.c.h.b16 %v477
  %v607 = vunpack.c.l.b16 %v478
  %v608 = vunpack.c.l.b16 %v479
  %v609 = vunpack.c.h.b16 %v479
  %v610 = vunpack.c.l.b16 %v480
  %v611 = vunpack.c.l.b16 %v481
  %v612 = vunpack.c.h.b16 %v481
  %v613 = vunpack.c.l.b16 %v482
  %v614 = vunpack.c.l.b16 %v483
  %v615 = vunpack.c.h.b16 %v483
  %v616 = vunpack.c.l.b16 %v484
  %v617 = vunpack.c.l.b16 %v485
  %v618 = vunpack.c.h.b16 %v485
  %v619 = vunpack.c.l.b16 %v486
  %v620 = vunpack.c.l.b16 %v487
  %v621 = vunpack.c.h.b16 %v487
  %v622 = vunpack.c.l.b16 %v488
  %v623 = vunpack.c.l.b16 %v489
  %v624 = vunpack.c.h.b16 %v489
  %v625 = vunpack.c.l.b16 %v490
  %v626 = vunpack.c.l.b16 %v491
  %v627 = vunpack.c.h.b16 %v491
  %v628 = vunpack.c.l.b16 %v492
  %v629 = vpack.c.b16 %v584, %v581
  %v630 = vpack.c.b16 %v585, %v582
  %v631 = vpack.c.b16 %v586, %v583
  %v632 = vpack.c.b16 %v590, %v587
  %v633 = vpack.c.b16 %v591, %v588
  %v634 = vpack.c.b16 %v592, %v589
  %v635 = vpack.c.b16 %v596, %v593
  %v636 = vpack.c.b16 %v597, %v594
  %v637 = vpack.c.b16 %v598, %v595
  %v638 = vpack.c.b16 %v602, %v599
  %v639 = vpack.c.b16 %v603, %v600
  %v640 = vpack.c.b16 %v604, %v601
  %v641 = vpack.c.b16 %v608, %v605
  %v642 = vpack.c.b16 %v609, %v606
  %v643 = vpack.c.b16 %v610, %v607
  %v644 = vpack.c.b16 %v614, %v611
  %v645 = vpack.c.b16 %v615, %v612
  %v646 = vpack.c.b16 %v616, %v613
  %v647 = vpack.c.b16 %v620, %v617
  %v648 = vpack.c.b16 %v621, %v618
  %v649 = vpack.c.b16 %v622, %v619
  %v650 = vpack.c.b16 %v626, %v623
  %v651 = vpack.c.b16 %v627, %v624
  %v652 = vpack.c.b16 %v628, %v625
  %677 = vmatprep.subr.bf16.mxu0 %v630
  %678 = vmatpush1.bf16.msra.mxu0 %v629
  %679 = vmatprep.subr.bf16.mxu0 %v633
  %680 = vmatpush1.bf16.msra.mxu0 %v632
  %681 = vmatprep.subr.bf16.mxu0 %v636
  %682 = vmatpush1.bf16.msra.mxu0 %v635
  %683 = vmatprep.subr.bf16.mxu0 %v639
  %684 = vmatpush1.bf16.msra.mxu0 %v638
  %685 = vmatprep.subr.bf16.mxu0 %v642
  %686 = vmatpush1.bf16.msra.mxu0 %v641
  %687 = vmatprep.subr.bf16.mxu0 %v645
  %688 = vmatpush1.bf16.msra.mxu0 %v644
  %689 = vmatprep.subr.bf16.mxu0 %v648
  %690 = vmatpush1.bf16.msra.mxu0 %v647
  %691 = vmatprep.subr.bf16.mxu0 %v651
  %692 = vmatpush1.bf16.msra.mxu0 %v650
  %693 = vmatprep.subr.bf16.mxu0 0
  %694 = vmatpush1.bf16.msra.mxu0 0
  %695 = vmatprep.subr.bf16.mxu0 0
  %696 = vmatpush1.bf16.msra.mxu0 0
  %697 = vmatprep.subr.bf16.mxu0 0
  %698 = vmatpush1.bf16.msra.mxu0 0
  %699 = vmatprep.subr.bf16.mxu0 0
  %700 = vmatpush1.bf16.msra.mxu0 0
  %701 = vmatprep.subr.bf16.mxu0 0
  %702 = vmatpush1.bf16.msra.mxu0 0
  %703 = vmatprep.subr.bf16.mxu0 0
  %704 = vmatpush1.bf16.msra.mxu0 0
  %705 = vmatprep.subr.bf16.mxu0 0
  %706 = vmatpush1.bf16.msra.mxu0 0
  %707 = vmatprep.subr.bf16.mxu0 0
  %708 = vmatpush1.bf16.msra.mxu0 0
  %709 = vmatprep.mubr.bf16.mxu0 0
  %710 = vmatmul.mubr.bf16.gmra.mrb[0].mxu0 %v532
  %v711 = vpop.f32.mrb[0].mxu0
  %v712 = vadd.f32 %v537, %v711
  %v713 = vpop.f32.mrb[0].mxu0
  %v714 = vadd.f32 %v541, %v713
  %v715 = vpop.f32.mrb[0].mxu0
  %v716 = vpop.f32.mrb[0].mxu0
  %717 = vdwg.mxu0
  %718 = vmatprep.subr.bf16.mxu0 0
  %719 = vmatpush1.bf16.msra.mxu0 %v631
  %720 = vmatprep.subr.bf16.mxu0 0
  %721 = vmatpush1.bf16.msra.mxu0 %v634
  %722 = vmatprep.subr.bf16.mxu0 0
  %723 = vmatpush1.bf16.msra.mxu0 %v637
  %724 = vmatprep.subr.bf16.mxu0 0
  %725 = vmatpush1.bf16.msra.mxu0 %v640
  %726 = vmatprep.subr.bf16.mxu0 0
  %727 = vmatpush1.bf16.msra.mxu0 %v643
  %728 = vmatprep.subr.bf16.mxu0 0
  %729 = vmatpush1.bf16.msra.mxu0 %v646
  %730 = vmatprep.subr.bf16.mxu0 0
  %731 = vmatpush1.bf16.msra.mxu0 %v649
  %732 = vmatprep.subr.bf16.mxu0 0
  %733 = vmatpush1.bf16.msra.mxu0 %v652
  %734 = vmatprep.subr.bf16.mxu0 0
  %735 = vmatpush1.bf16.msra.mxu0 0
  %736 = vmatprep.subr.bf16.mxu0 0
  %737 = vmatpush1.bf16.msra.mxu0 0
  %738 = vmatprep.subr.bf16.mxu0 0
  %739 = vmatpush1.bf16.msra.mxu0 0
  %740 = vmatprep.subr.bf16.mxu0 0
  %741 = vmatpush1.bf16.msra.mxu0 0
  %742 = vmatprep.subr.bf16.mxu0 0
  %743 = vmatpush1.bf16.msra.mxu0 0
  %744 = vmatprep.subr.bf16.mxu0 0
  %745 = vmatpush1.bf16.msra.mxu0 0
  %746 = vmatprep.subr.bf16.mxu0 0
  %747 = vmatpush1.bf16.msra.mxu0 0
  %748 = vmatprep.subr.bf16.mxu0 0
  %749 = vmatpush1.bf16.msra.mxu0 0
  %750 = vmatprep.mubr.bf16.mxu0 0
  %751 = vmatmul.mubr.bf16.gmra.mrb[0].mxu0 %v532
  %v752 = vpop.f32.mrb[0].mxu0
  %v753 = vadd.f32 %v545, %v752
  %v754 = vpop.f32.mrb[0].mxu0
  %v755 = vpop.f32.mrb[0].mxu0
  %v756 = vpop.f32.mrb[0].mxu0
  %757 = vdwg.mxu0
  %v758 = vadd.f32 %v140, %v712
  %v759 = vxor.u32 %v758, 2147483648
  %v760 = vmul.f32 %v759, 1.442695
  %v761 = vpow.pop %v760
  %v762 = vadd.f32 %v761, 1.0
  %v763 = vrcp.pop %v762
  %v764 = vmul.f32 1.0, %v763
  %v765 = vadd.f32 %v142, %v714
  %v766 = vxor.u32 %v765, 2147483648
  %v767 = vmul.f32 %v766, 1.442695
  %v768 = vpow.pop %v767
  %v769 = vadd.f32 %v768, 1.0
  %v770 = vrcp.pop %v769
  %v771 = vmul.f32 1.0, %v770
  %v772 = vmul.f32 %v764, %v753
  %v773 = vadd.f32 %v213, %v772
  %v774 = vtanh.pop %v773
  %v775 = vsub.f32 1.0, %v771
  %v776 = vmul.f32 %v775, %v774
  %v777 = vmul.f32 %v771, %v529
  %v778 = vadd.f32 %v776, %v777
  %v779 = vpack.c.bf16 %v531, %v531
  %v781 = vlaneseq
  %v782 = vshrl.u32 %v781, 7
  %v783 = vsub.s32 0, %v782
  %v784 = vrot.slane %v528, %v783
  %v785 = vlaneseq
  %v786 = vshrl.u32 %v785, 7
  %v787 = vsub.s32 1, %v786
  %v788 = vrot.slane %v528, %v787
  %v789 = vlaneseq
  %v790 = vshrl.u32 %v789, 7
  %v791 = vsub.s32 2, %v790
  %v792 = vrot.slane %v528, %v791
  %v828 = vunpack.c.l.b16 %v494
  %v829 = vunpack.c.h.b16 %v494
  %v830 = vunpack.c.l.b16 %v495
  %v831 = vunpack.c.l.b16 %v496
  %v832 = vunpack.c.h.b16 %v496
  %v833 = vunpack.c.l.b16 %v497
  %v834 = vunpack.c.l.b16 %v498
  %v835 = vunpack.c.h.b16 %v498
  %v836 = vunpack.c.l.b16 %v499
  %v837 = vunpack.c.l.b16 %v500
  %v838 = vunpack.c.h.b16 %v500
  %v839 = vunpack.c.l.b16 %v501
  %v840 = vunpack.c.l.b16 %v502
  %v841 = vunpack.c.h.b16 %v502
  %v842 = vunpack.c.l.b16 %v503
  %v843 = vunpack.c.l.b16 %v504
  %v844 = vunpack.c.h.b16 %v504
  %v845 = vunpack.c.l.b16 %v505
  %v846 = vunpack.c.l.b16 %v506
  %v847 = vunpack.c.h.b16 %v506
  %v848 = vunpack.c.l.b16 %v507
  %v849 = vunpack.c.l.b16 %v508
  %v850 = vunpack.c.h.b16 %v508
  %v851 = vunpack.c.l.b16 %v509
  %v852 = vunpack.c.l.b16 %v510
  %v853 = vunpack.c.h.b16 %v510
  %v854 = vunpack.c.l.b16 %v511
  %v855 = vunpack.c.l.b16 %v512
  %v856 = vunpack.c.h.b16 %v512
  %v857 = vunpack.c.l.b16 %v513
  %v858 = vunpack.c.l.b16 %v514
  %v859 = vunpack.c.h.b16 %v514
  %v860 = vunpack.c.l.b16 %v515
  %v861 = vunpack.c.l.b16 %v516
  %v862 = vunpack.c.h.b16 %v516
  %v863 = vunpack.c.l.b16 %v517
  %v864 = vunpack.c.l.b16 %v518
  %v865 = vunpack.c.h.b16 %v518
  %v866 = vunpack.c.l.b16 %v519
  %v867 = vunpack.c.l.b16 %v520
  %v868 = vunpack.c.h.b16 %v520
  %v869 = vunpack.c.l.b16 %v521
  %v870 = vunpack.c.l.b16 %v522
  %v871 = vunpack.c.h.b16 %v522
  %v872 = vunpack.c.l.b16 %v523
  %v873 = vunpack.c.l.b16 %v524
  %v874 = vunpack.c.h.b16 %v524
  %v875 = vunpack.c.l.b16 %v525
  %v876 = vpack.c.b16 %v831, %v828
  %v877 = vpack.c.b16 %v832, %v829
  %v878 = vpack.c.b16 %v833, %v830
  %v879 = vpack.c.b16 %v837, %v834
  %v880 = vpack.c.b16 %v838, %v835
  %v881 = vpack.c.b16 %v839, %v836
  %v882 = vpack.c.b16 %v843, %v840
  %v883 = vpack.c.b16 %v844, %v841
  %v884 = vpack.c.b16 %v845, %v842
  %v885 = vpack.c.b16 %v849, %v846
  %v886 = vpack.c.b16 %v850, %v847
  %v887 = vpack.c.b16 %v851, %v848
  %v888 = vpack.c.b16 %v855, %v852
  %v889 = vpack.c.b16 %v856, %v853
  %v890 = vpack.c.b16 %v857, %v854
  %v891 = vpack.c.b16 %v861, %v858
  %v892 = vpack.c.b16 %v862, %v859
  %v893 = vpack.c.b16 %v863, %v860
  %v894 = vpack.c.b16 %v867, %v864
  %v895 = vpack.c.b16 %v868, %v865
  %v896 = vpack.c.b16 %v869, %v866
  %v897 = vpack.c.b16 %v873, %v870
  %v898 = vpack.c.b16 %v874, %v871
  %v899 = vpack.c.b16 %v875, %v872
  %924 = vmatprep.subr.bf16.mxu0 %v877
  %925 = vmatpush1.bf16.msra.mxu0 %v876
  %926 = vmatprep.subr.bf16.mxu0 %v880
  %927 = vmatpush1.bf16.msra.mxu0 %v879
  %928 = vmatprep.subr.bf16.mxu0 %v883
  %929 = vmatpush1.bf16.msra.mxu0 %v882
  %930 = vmatprep.subr.bf16.mxu0 %v886
  %931 = vmatpush1.bf16.msra.mxu0 %v885
  %932 = vmatprep.subr.bf16.mxu0 %v889
  %933 = vmatpush1.bf16.msra.mxu0 %v888
  %934 = vmatprep.subr.bf16.mxu0 %v892
  %935 = vmatpush1.bf16.msra.mxu0 %v891
  %936 = vmatprep.subr.bf16.mxu0 %v895
  %937 = vmatpush1.bf16.msra.mxu0 %v894
  %938 = vmatprep.subr.bf16.mxu0 %v898
  %939 = vmatpush1.bf16.msra.mxu0 %v897
  %940 = vmatprep.subr.bf16.mxu0 0
  %941 = vmatpush1.bf16.msra.mxu0 0
  %942 = vmatprep.subr.bf16.mxu0 0
  %943 = vmatpush1.bf16.msra.mxu0 0
  %944 = vmatprep.subr.bf16.mxu0 0
  %945 = vmatpush1.bf16.msra.mxu0 0
  %946 = vmatprep.subr.bf16.mxu0 0
  %947 = vmatpush1.bf16.msra.mxu0 0
  %948 = vmatprep.subr.bf16.mxu0 0
  %949 = vmatpush1.bf16.msra.mxu0 0
  %950 = vmatprep.subr.bf16.mxu0 0
  %951 = vmatpush1.bf16.msra.mxu0 0
  %952 = vmatprep.subr.bf16.mxu0 0
  %953 = vmatpush1.bf16.msra.mxu0 0
  %954 = vmatprep.subr.bf16.mxu0 0
  %955 = vmatpush1.bf16.msra.mxu0 0
  %956 = vmatprep.mubr.bf16.mxu0 0
  %957 = vmatmul.mubr.bf16.gmra.mrb[0].mxu0 %v779
  %v958 = vpop.f32.mrb[0].mxu0
  %v959 = vadd.f32 %v784, %v958
  %v960 = vpop.f32.mrb[0].mxu0
  %v961 = vadd.f32 %v788, %v960
  %v962 = vpop.f32.mrb[0].mxu0
  %v963 = vpop.f32.mrb[0].mxu0
  %964 = vdwg.mxu0
  %965 = vmatprep.subr.bf16.mxu0 0
  %966 = vmatpush1.bf16.msra.mxu0 %v878
  %967 = vmatprep.subr.bf16.mxu0 0
  %968 = vmatpush1.bf16.msra.mxu0 %v881
  %969 = vmatprep.subr.bf16.mxu0 0
  %970 = vmatpush1.bf16.msra.mxu0 %v884
  %971 = vmatprep.subr.bf16.mxu0 0
  %972 = vmatpush1.bf16.msra.mxu0 %v887
  %973 = vmatprep.subr.bf16.mxu0 0
  %974 = vmatpush1.bf16.msra.mxu0 %v890
  %975 = vmatprep.subr.bf16.mxu0 0
  %976 = vmatpush1.bf16.msra.mxu0 %v893
  %977 = vmatprep.subr.bf16.mxu0 0
  %978 = vmatpush1.bf16.msra.mxu0 %v896
  %979 = vmatprep.subr.bf16.mxu0 0
  %980 = vmatpush1.bf16.msra.mxu0 %v899
  %981 = vmatprep.subr.bf16.mxu0 0
  %982 = vmatpush1.bf16.msra.mxu0 0
  %983 = vmatprep.subr.bf16.mxu0 0
  %984 = vmatpush1.bf16.msra.mxu0 0
  %985 = vmatprep.subr.bf16.mxu0 0
  %986 = vmatpush1.bf16.msra.mxu0 0
  %987 = vmatprep.subr.bf16.mxu0 0
  %988 = vmatpush1.bf16.msra.mxu0 0
  %989 = vmatprep.subr.bf16.mxu0 0
  %990 = vmatpush1.bf16.msra.mxu0 0
  %991 = vmatprep.subr.bf16.mxu0 0
  %992 = vmatpush1.bf16.msra.mxu0 0
  %993 = vmatprep.subr.bf16.mxu0 0
  %994 = vmatpush1.bf16.msra.mxu0 0
  %995 = vmatprep.subr.bf16.mxu0 0
  %996 = vmatpush1.bf16.msra.mxu0 0
  %997 = vmatprep.mubr.bf16.mxu0 0
  %998 = vmatmul.mubr.bf16.gmra.mrb[0].mxu0 %v779
  %v999 = vpop.f32.mrb[0].mxu0
  %v1000 = vadd.f32 %v792, %v999
  %v1001 = vpop.f32.mrb[0].mxu0
  %v1002 = vpop.f32.mrb[0].mxu0
  %v1003 = vpop.f32.mrb[0].mxu0
  %1004 = vdwg.mxu0
  %v1005 = vadd.f32 %v358, %v959
  %v1006 = vxor.u32 %v1005, 2147483648
  %v1007 = vmul.f32 %v1006, 1.442695
  %v1008 = vpow.pop %v1007
  %v1009 = vadd.f32 %v1008, 1.0
  %v1010 = vrcp.pop %v1009
  %v1011 = vmul.f32 1.0, %v1010
  %v1012 = vadd.f32 %v360, %v961
  %v1013 = vxor.u32 %v1012, 2147483648
  %v1014 = vmul.f32 %v1013, 1.442695
  %v1015 = vpow.pop %v1014
  %v1016 = vadd.f32 %v1015, 1.0
  %v1017 = vrcp.pop %v1016
  %v1018 = vmul.f32 1.0, %v1017
  %v1019 = vmul.f32 %v1011, %v1000
  %v1020 = vadd.f32 %v431, %v1019
  %v1021 = vtanh.pop %v1020
  %v1022 = vsub.f32 1.0, %v1018
  %v1023 = vmul.f32 %v1022, %v1021
  %v1024 = vmul.f32 %v1018, %v531
  %v1025 = vadd.f32 %v1023, %v1024
  %v1026 = vpack.c.bf16 %v778, %v778
  %1027 = vmatprep.subr.bf16.mxu0 %v630
  %1028 = vmatpush1.bf16.msra.mxu0 %v629
  %1029 = vmatprep.subr.bf16.mxu0 %v633
  %1030 = vmatpush1.bf16.msra.mxu0 %v632
  %1031 = vmatprep.subr.bf16.mxu0 %v636
  %1032 = vmatpush1.bf16.msra.mxu0 %v635
  %1033 = vmatprep.subr.bf16.mxu0 %v639
  %1034 = vmatpush1.bf16.msra.mxu0 %v638
  %1035 = vmatprep.subr.bf16.mxu0 %v642
  %1036 = vmatpush1.bf16.msra.mxu0 %v641
  %1037 = vmatprep.subr.bf16.mxu0 %v645
  %1038 = vmatpush1.bf16.msra.mxu0 %v644
  %1039 = vmatprep.subr.bf16.mxu0 %v648
  %1040 = vmatpush1.bf16.msra.mxu0 %v647
  %1041 = vmatprep.subr.bf16.mxu0 %v651
  %1042 = vmatpush1.bf16.msra.mxu0 %v650
  %1043 = vmatprep.subr.bf16.mxu0 0
  %1044 = vmatpush1.bf16.msra.mxu0 0
  %1045 = vmatprep.subr.bf16.mxu0 0
  %1046 = vmatpush1.bf16.msra.mxu0 0
  %1047 = vmatprep.subr.bf16.mxu0 0
  %1048 = vmatpush1.bf16.msra.mxu0 0
  %1049 = vmatprep.subr.bf16.mxu0 0
  %1050 = vmatpush1.bf16.msra.mxu0 0
  %1051 = vmatprep.subr.bf16.mxu0 0
  %1052 = vmatpush1.bf16.msra.mxu0 0
  %1053 = vmatprep.subr.bf16.mxu0 0
  %1054 = vmatpush1.bf16.msra.mxu0 0
  %1055 = vmatprep.subr.bf16.mxu0 0
  %1056 = vmatpush1.bf16.msra.mxu0 0
  %1057 = vmatprep.subr.bf16.mxu0 0
  %1058 = vmatpush1.bf16.msra.mxu0 0
  %1059 = vmatprep.mubr.bf16.mxu0 0
  %1060 = vmatmul.mubr.bf16.gmra.mrb[0].mxu0 %v1026
  %v1061 = vpop.f32.mrb[0].mxu0
  %v1062 = vadd.f32 %v537, %v1061
  %v1063 = vpop.f32.mrb[0].mxu0
  %v1064 = vadd.f32 %v541, %v1063
  %v1065 = vpop.f32.mrb[0].mxu0
  %v1066 = vpop.f32.mrb[0].mxu0
  %1067 = vdwg.mxu0
  %1068 = vmatprep.subr.bf16.mxu0 0
  %1069 = vmatpush1.bf16.msra.mxu0 %v631
  %1070 = vmatprep.subr.bf16.mxu0 0
  %1071 = vmatpush1.bf16.msra.mxu0 %v634
  %1072 = vmatprep.subr.bf16.mxu0 0
  %1073 = vmatpush1.bf16.msra.mxu0 %v637
  %1074 = vmatprep.subr.bf16.mxu0 0
  %1075 = vmatpush1.bf16.msra.mxu0 %v640
  %1076 = vmatprep.subr.bf16.mxu0 0
  %1077 = vmatpush1.bf16.msra.mxu0 %v643
  %1078 = vmatprep.subr.bf16.mxu0 0
  %1079 = vmatpush1.bf16.msra.mxu0 %v646
  %1080 = vmatprep.subr.bf16.mxu0 0
  %1081 = vmatpush1.bf16.msra.mxu0 %v649
  %1082 = vmatprep.subr.bf16.mxu0 0
  %1083 = vmatpush1.bf16.msra.mxu0 %v652
  %1084 = vmatprep.subr.bf16.mxu0 0
  %1085 = vmatpush1.bf16.msra.mxu0 0
  %1086 = vmatprep.subr.bf16.mxu0 0
  %1087 = vmatpush1.bf16.msra.mxu0 0
  %1088 = vmatprep.subr.bf16.mxu0 0
  %1089 = vmatpush1.bf16.msra.mxu0 0
  %1090 = vmatprep.subr.bf16.mxu0 0
  %1091 = vmatpush1.bf16.msra.mxu0 0
  %1092 = vmatprep.subr.bf16.mxu0 0
  %1093 = vmatpush1.bf16.msra.mxu0 0
  %1094 = vmatprep.subr.bf16.mxu0 0
  %1095 = vmatpush1.bf16.msra.mxu0 0
  %1096 = vmatprep.subr.bf16.mxu0 0
  %1097 = vmatpush1.bf16.msra.mxu0 0
  %1098 = vmatprep.subr.bf16.mxu0 0
  %1099 = vmatpush1.bf16.msra.mxu0 0
  %1100 = vmatprep.mubr.bf16.mxu0 0
  %1101 = vmatmul.mubr.bf16.gmra.mrb[0].mxu0 %v1026
  %v1102 = vpop.f32.mrb[0].mxu0
  %v1103 = vadd.f32 %v545, %v1102
  %v1104 = vpop.f32.mrb[0].mxu0
  %v1105 = vpop.f32.mrb[0].mxu0
  %v1106 = vpop.f32.mrb[0].mxu0
  %1107 = vdwg.mxu0
  %v1108 = vadd.f32 %v144, %v1062
  %v1109 = vxor.u32 %v1108, 2147483648
  %v1110 = vmul.f32 %v1109, 1.442695
  %v1111 = vpow.pop %v1110
  %v1112 = vadd.f32 %v1111, 1.0
  %v1113 = vrcp.pop %v1112
  %v1114 = vmul.f32 1.0, %v1113
  %v1115 = vadd.f32 %v146, %v1064
  %v1116 = vxor.u32 %v1115, 2147483648
  %v1117 = vmul.f32 %v1116, 1.442695
  %v1118 = vpow.pop %v1117
  %v1119 = vadd.f32 %v1118, 1.0
  %v1120 = vrcp.pop %v1119
  %v1121 = vmul.f32 1.0, %v1120
  %v1122 = vmul.f32 %v1114, %v1103
  %v1123 = vadd.f32 %v216, %v1122
  %v1124 = vtanh.pop %v1123
  %v1125 = vsub.f32 1.0, %v1121
  %v1126 = vmul.f32 %v1125, %v1124
  %v1127 = vmul.f32 %v1121, %v778
  %v1128 = vadd.f32 %v1126, %v1127
  %v1129 = vpack.c.bf16 %v1025, %v1025
  %1130 = vmatprep.subr.bf16.mxu0 %v877
  %1131 = vmatpush1.bf16.msra.mxu0 %v876
  %1132 = vmatprep.subr.bf16.mxu0 %v880
  %1133 = vmatpush1.bf16.msra.mxu0 %v879
  %1134 = vmatprep.subr.bf16.mxu0 %v883
  %1135 = vmatpush1.bf16.msra.mxu0 %v882
  %1136 = vmatprep.subr.bf16.mxu0 %v886
  %1137 = vmatpush1.bf16.msra.mxu0 %v885
  %1138 = vmatprep.subr.bf16.mxu0 %v889
  %1139 = vmatpush1.bf16.msra.mxu0 %v888
  %1140 = vmatprep.subr.bf16.mxu0 %v892
  %1141 = vmatpush1.bf16.msra.mxu0 %v891
  %1142 = vmatprep.subr.bf16.mxu0 %v895
  %1143 = vmatpush1.bf16.msra.mxu0 %v894
  %1144 = vmatprep.subr.bf16.mxu0 %v898
  %1145 = vmatpush1.bf16.msra.mxu0 %v897
  %1146 = vmatprep.subr.bf16.mxu0 0
  %1147 = vmatpush1.bf16.msra.mxu0 0
  %1148 = vmatprep.subr.bf16.mxu0 0
  %1149 = vmatpush1.bf16.msra.mxu0 0
  %1150 = vmatprep.subr.bf16.mxu0 0
  %1151 = vmatpush1.bf16.msra.mxu0 0
  %1152 = vmatprep.subr.bf16.mxu0 0
  %1153 = vmatpush1.bf16.msra.mxu0 0
  %1154 = vmatprep.subr.bf16.mxu0 0
  %1155 = vmatpush1.bf16.msra.mxu0 0
  %1156 = vmatprep.subr.bf16.mxu0 0
  %1157 = vmatpush1.bf16.msra.mxu0 0
  %1158 = vmatprep.subr.bf16.mxu0 0
  %1159 = vmatpush1.bf16.msra.mxu0 0
  %1160 = vmatprep.subr.bf16.mxu0 0
  %1161 = vmatpush1.bf16.msra.mxu0 0
  %1162 = vmatprep.mubr.bf16.mxu0 0
  %1163 = vmatmul.mubr.bf16.gmra.mrb[0].mxu0 %v1129
  %v1164 = vpop.f32.mrb[0].mxu0
  %v1165 = vadd.f32 %v784, %v1164
  %v1166 = vpop.f32.mrb[0].mxu0
  %v1167 = vadd.f32 %v788, %v1166
  %v1168 = vpop.f32.mrb[0].mxu0
  %v1169 = vpop.f32.mrb[0].mxu0
  %1170 = vdwg.mxu0
  %1171 = vmatprep.subr.bf16.mxu0 0
  %1172 = vmatpush1.bf16.msra.mxu0 %v878
  %1173 = vmatprep.subr.bf16.mxu0 0
  %1174 = vmatpush1.bf16.msra.mxu0 %v881
  %1175 = vmatprep.subr.bf16.mxu0 0
  %1176 = vmatpush1.bf16.msra.mxu0 %v884
  %1177 = vmatprep.subr.bf16.mxu0 0
  %1178 = vmatpush1.bf16.msra.mxu0 %v887
  %1179 = vmatprep.subr.bf16.mxu0 0
  %1180 = vmatpush1.bf16.msra.mxu0 %v890
  %1181 = vmatprep.subr.bf16.mxu0 0
  %1182 = vmatpush1.bf16.msra.mxu0 %v893
  %1183 = vmatprep.subr.bf16.mxu0 0
  %1184 = vmatpush1.bf16.msra.mxu0 %v896
  %1185 = vmatprep.subr.bf16.mxu0 0
  %1186 = vmatpush1.bf16.msra.mxu0 %v899
  %1187 = vmatprep.subr.bf16.mxu0 0
  %1188 = vmatpush1.bf16.msra.mxu0 0
  %1189 = vmatprep.subr.bf16.mxu0 0
  %1190 = vmatpush1.bf16.msra.mxu0 0
  %1191 = vmatprep.subr.bf16.mxu0 0
  %1192 = vmatpush1.bf16.msra.mxu0 0
  %1193 = vmatprep.subr.bf16.mxu0 0
  %1194 = vmatpush1.bf16.msra.mxu0 0
  %1195 = vmatprep.subr.bf16.mxu0 0
  %1196 = vmatpush1.bf16.msra.mxu0 0
  %1197 = vmatprep.subr.bf16.mxu0 0
  %1198 = vmatpush1.bf16.msra.mxu0 0
  %1199 = vmatprep.subr.bf16.mxu0 0
  %1200 = vmatpush1.bf16.msra.mxu0 0
  %1201 = vmatprep.subr.bf16.mxu0 0
  %1202 = vmatpush1.bf16.msra.mxu0 0
  %1203 = vmatprep.mubr.bf16.mxu0 0
  %1204 = vmatmul.mubr.bf16.gmra.mrb[0].mxu0 %v1129
  %v1205 = vpop.f32.mrb[0].mxu0
  %v1206 = vadd.f32 %v792, %v1205
  %v1207 = vpop.f32.mrb[0].mxu0
  %v1208 = vpop.f32.mrb[0].mxu0
  %v1209 = vpop.f32.mrb[0].mxu0
  %1210 = vdwg.mxu0
  %v1211 = vadd.f32 %v362, %v1165
  %v1212 = vxor.u32 %v1211, 2147483648
  %v1213 = vmul.f32 %v1212, 1.442695
  %v1214 = vpow.pop %v1213
  %v1215 = vadd.f32 %v1214, 1.0
  %v1216 = vrcp.pop %v1215
  %v1217 = vmul.f32 1.0, %v1216
  %v1218 = vadd.f32 %v364, %v1167
  %v1219 = vxor.u32 %v1218, 2147483648
  %v1220 = vmul.f32 %v1219, 1.442695
  %v1221 = vpow.pop %v1220
  %v1222 = vadd.f32 %v1221, 1.0
  %v1223 = vrcp.pop %v1222
  %v1224 = vmul.f32 1.0, %v1223
  %v1225 = vmul.f32 %v1217, %v1206
  %v1226 = vadd.f32 %v434, %v1225
  %v1227 = vtanh.pop %v1226
  %v1228 = vsub.f32 1.0, %v1224
  %v1229 = vmul.f32 %v1228, %v1227
  %v1230 = vmul.f32 %v1224, %v1025
  %v1231 = vadd.f32 %v1229, %v1230
  %v1232 = vpack.c.bf16 %v1128, %v1128
  %1233 = vmatprep.subr.bf16.mxu0 %v630
  %1234 = vmatpush1.bf16.msra.mxu0 %v629
  %1235 = vmatprep.subr.bf16.mxu0 %v633
  %1236 = vmatpush1.bf16.msra.mxu0 %v632
  %1237 = vmatprep.subr.bf16.mxu0 %v636
  %1238 = vmatpush1.bf16.msra.mxu0 %v635
  %1239 = vmatprep.subr.bf16.mxu0 %v639
  %1240 = vmatpush1.bf16.msra.mxu0 %v638
  %1241 = vmatprep.subr.bf16.mxu0 %v642
  %1242 = vmatpush1.bf16.msra.mxu0 %v641
  %1243 = vmatprep.subr.bf16.mxu0 %v645
  %1244 = vmatpush1.bf16.msra.mxu0 %v644
  %1245 = vmatprep.subr.bf16.mxu0 %v648
  %1246 = vmatpush1.bf16.msra.mxu0 %v647
  %1247 = vmatprep.subr.bf16.mxu0 %v651
  %1248 = vmatpush1.bf16.msra.mxu0 %v650
  %1249 = vmatprep.subr.bf16.mxu0 0
  %1250 = vmatpush1.bf16.msra.mxu0 0
  %1251 = vmatprep.subr.bf16.mxu0 0
  %1252 = vmatpush1.bf16.msra.mxu0 0
  %1253 = vmatprep.subr.bf16.mxu0 0
  %1254 = vmatpush1.bf16.msra.mxu0 0
  %1255 = vmatprep.subr.bf16.mxu0 0
  %1256 = vmatpush1.bf16.msra.mxu0 0
  %1257 = vmatprep.subr.bf16.mxu0 0
  %1258 = vmatpush1.bf16.msra.mxu0 0
  %1259 = vmatprep.subr.bf16.mxu0 0
  %1260 = vmatpush1.bf16.msra.mxu0 0
  %1261 = vmatprep.subr.bf16.mxu0 0
  %1262 = vmatpush1.bf16.msra.mxu0 0
  %1263 = vmatprep.subr.bf16.mxu0 0
  %1264 = vmatpush1.bf16.msra.mxu0 0
  %1265 = vmatprep.mubr.bf16.mxu0 0
  %1266 = vmatmul.mubr.bf16.gmra.mrb[0].mxu0 %v1232
  %v1267 = vpop.f32.mrb[0].mxu0
  %v1268 = vadd.f32 %v537, %v1267
  %v1269 = vpop.f32.mrb[0].mxu0
  %v1270 = vadd.f32 %v541, %v1269
  %v1271 = vpop.f32.mrb[0].mxu0
  %v1272 = vpop.f32.mrb[0].mxu0
  %1273 = vdwg.mxu0
  %1274 = vmatprep.subr.bf16.mxu0 0
  %1275 = vmatpush1.bf16.msra.mxu0 %v631
  %1276 = vmatprep.subr.bf16.mxu0 0
  %1277 = vmatpush1.bf16.msra.mxu0 %v634
  %1278 = vmatprep.subr.bf16.mxu0 0
  %1279 = vmatpush1.bf16.msra.mxu0 %v637
  %1280 = vmatprep.subr.bf16.mxu0 0
  %1281 = vmatpush1.bf16.msra.mxu0 %v640
  %1282 = vmatprep.subr.bf16.mxu0 0
  %1283 = vmatpush1.bf16.msra.mxu0 %v643
  %1284 = vmatprep.subr.bf16.mxu0 0
  %1285 = vmatpush1.bf16.msra.mxu0 %v646
  %1286 = vmatprep.subr.bf16.mxu0 0
  %1287 = vmatpush1.bf16.msra.mxu0 %v649
  %1288 = vmatprep.subr.bf16.mxu0 0
  %1289 = vmatpush1.bf16.msra.mxu0 %v652
  %1290 = vmatprep.subr.bf16.mxu0 0
  %1291 = vmatpush1.bf16.msra.mxu0 0
  %1292 = vmatprep.subr.bf16.mxu0 0
  %1293 = vmatpush1.bf16.msra.mxu0 0
  %1294 = vmatprep.subr.bf16.mxu0 0
  %1295 = vmatpush1.bf16.msra.mxu0 0
  %1296 = vmatprep.subr.bf16.mxu0 0
  %1297 = vmatpush1.bf16.msra.mxu0 0
  %1298 = vmatprep.subr.bf16.mxu0 0
  %1299 = vmatpush1.bf16.msra.mxu0 0
  %1300 = vmatprep.subr.bf16.mxu0 0
  %1301 = vmatpush1.bf16.msra.mxu0 0
  %1302 = vmatprep.subr.bf16.mxu0 0
  %1303 = vmatpush1.bf16.msra.mxu0 0
  %1304 = vmatprep.subr.bf16.mxu0 0
  %1305 = vmatpush1.bf16.msra.mxu0 0
  %1306 = vmatprep.mubr.bf16.mxu0 0
  %1307 = vmatmul.mubr.bf16.gmra.mrb[0].mxu0 %v1232
  %v1308 = vpop.f32.mrb[0].mxu0
  %v1309 = vadd.f32 %v545, %v1308
  %v1310 = vpop.f32.mrb[0].mxu0
  %v1311 = vpop.f32.mrb[0].mxu0
  %v1312 = vpop.f32.mrb[0].mxu0
  %1313 = vdwg.mxu0
  %v1314 = vadd.f32 %v150, %v1268
  %v1315 = vxor.u32 %v1314, 2147483648
  %v1316 = vmul.f32 %v1315, 1.442695
  %v1317 = vpow.pop %v1316
  %v1318 = vadd.f32 %v1317, 1.0
  %v1319 = vrcp.pop %v1318
  %v1320 = vmul.f32 1.0, %v1319
  %v1321 = vadd.f32 %v152, %v1270
  %v1322 = vxor.u32 %v1321, 2147483648
  %v1323 = vmul.f32 %v1322, 1.442695
  %v1324 = vpow.pop %v1323
  %v1325 = vadd.f32 %v1324, 1.0
  %v1326 = vrcp.pop %v1325
  %v1327 = vmul.f32 1.0, %v1326
  %v1328 = vmul.f32 %v1320, %v1309
  %v1329 = vadd.f32 %v221, %v1328
  %v1330 = vtanh.pop %v1329
  %v1331 = vsub.f32 1.0, %v1327
  %v1332 = vmul.f32 %v1331, %v1330
  %v1333 = vmul.f32 %v1327, %v1128
  %v1334 = vadd.f32 %v1332, %v1333
  %v1335 = vpack.c.bf16 %v1231, %v1231
  %1336 = vmatprep.subr.bf16.mxu0 %v877
  %1337 = vmatpush1.bf16.msra.mxu0 %v876
  %1338 = vmatprep.subr.bf16.mxu0 %v880
  %1339 = vmatpush1.bf16.msra.mxu0 %v879
  %1340 = vmatprep.subr.bf16.mxu0 %v883
  %1341 = vmatpush1.bf16.msra.mxu0 %v882
  %1342 = vmatprep.subr.bf16.mxu0 %v886
  %1343 = vmatpush1.bf16.msra.mxu0 %v885
  %1344 = vmatprep.subr.bf16.mxu0 %v889
  %1345 = vmatpush1.bf16.msra.mxu0 %v888
  %1346 = vmatprep.subr.bf16.mxu0 %v892
  %1347 = vmatpush1.bf16.msra.mxu0 %v891
  %1348 = vmatprep.subr.bf16.mxu0 %v895
  %1349 = vmatpush1.bf16.msra.mxu0 %v894
  %1350 = vmatprep.subr.bf16.mxu0 %v898
  %1351 = vmatpush1.bf16.msra.mxu0 %v897
  %1352 = vmatprep.subr.bf16.mxu0 0
  %1353 = vmatpush1.bf16.msra.mxu0 0
  %1354 = vmatprep.subr.bf16.mxu0 0
  %1355 = vmatpush1.bf16.msra.mxu0 0
  %1356 = vmatprep.subr.bf16.mxu0 0
  %1357 = vmatpush1.bf16.msra.mxu0 0
  %1358 = vmatprep.subr.bf16.mxu0 0
  %1359 = vmatpush1.bf16.msra.mxu0 0
  %1360 = vmatprep.subr.bf16.mxu0 0
  %1361 = vmatpush1.bf16.msra.mxu0 0
  %1362 = vmatprep.subr.bf16.mxu0 0
  %1363 = vmatpush1.bf16.msra.mxu0 0
  %1364 = vmatprep.subr.bf16.mxu0 0
  %1365 = vmatpush1.bf16.msra.mxu0 0
  %1366 = vmatprep.subr.bf16.mxu0 0
  %1367 = vmatpush1.bf16.msra.mxu0 0
  %1368 = vmatprep.mubr.bf16.mxu0 0
  %1369 = vmatmul.mubr.bf16.gmra.mrb[0].mxu0 %v1335
  %v1370 = vpop.f32.mrb[0].mxu0
  %v1371 = vadd.f32 %v784, %v1370
  %v1372 = vpop.f32.mrb[0].mxu0
  %v1373 = vadd.f32 %v788, %v1372
  %v1374 = vpop.f32.mrb[0].mxu0
  %v1375 = vpop.f32.mrb[0].mxu0
  %1376 = vdwg.mxu0
  %1377 = vmatprep.subr.bf16.mxu0 0
  %1378 = vmatpush1.bf16.msra.mxu0 %v878
  %1379 = vmatprep.subr.bf16.mxu0 0
  %1380 = vmatpush1.bf16.msra.mxu0 %v881
  %1381 = vmatprep.subr.bf16.mxu0 0
  %1382 = vmatpush1.bf16.msra.mxu0 %v884
  %1383 = vmatprep.subr.bf16.mxu0 0
  %1384 = vmatpush1.bf16.msra.mxu0 %v887
  %1385 = vmatprep.subr.bf16.mxu0 0
  %1386 = vmatpush1.bf16.msra.mxu0 %v890
  %1387 = vmatprep.subr.bf16.mxu0 0
  %1388 = vmatpush1.bf16.msra.mxu0 %v893
  %1389 = vmatprep.subr.bf16.mxu0 0
  %1390 = vmatpush1.bf16.msra.mxu0 %v896
  %1391 = vmatprep.subr.bf16.mxu0 0
  %1392 = vmatpush1.bf16.msra.mxu0 %v899
  %1393 = vmatprep.subr.bf16.mxu0 0
  %1394 = vmatpush1.bf16.msra.mxu0 0
  %1395 = vmatprep.subr.bf16.mxu0 0
  %1396 = vmatpush1.bf16.msra.mxu0 0
  %1397 = vmatprep.subr.bf16.mxu0 0
  %1398 = vmatpush1.bf16.msra.mxu0 0
  %1399 = vmatprep.subr.bf16.mxu0 0
  %1400 = vmatpush1.bf16.msra.mxu0 0
  %1401 = vmatprep.subr.bf16.mxu0 0
  %1402 = vmatpush1.bf16.msra.mxu0 0
  %1403 = vmatprep.subr.bf16.mxu0 0
  %1404 = vmatpush1.bf16.msra.mxu0 0
  %1405 = vmatprep.subr.bf16.mxu0 0
  %1406 = vmatpush1.bf16.msra.mxu0 0
  %1407 = vmatprep.subr.bf16.mxu0 0
  %1408 = vmatpush1.bf16.msra.mxu0 0
  %1409 = vmatprep.mubr.bf16.mxu0 0
  %1410 = vmatmul.mubr.bf16.gmra.mrb[0].mxu0 %v1335
  %v1411 = vpop.f32.mrb[0].mxu0
  %v1412 = vadd.f32 %v792, %v1411
  %v1413 = vpop.f32.mrb[0].mxu0
  %v1414 = vpop.f32.mrb[0].mxu0
  %v1415 = vpop.f32.mrb[0].mxu0
  %1416 = vdwg.mxu0
  %v1417 = vadd.f32 %v368, %v1371
  %v1418 = vxor.u32 %v1417, 2147483648
  %v1419 = vmul.f32 %v1418, 1.442695
  %v1420 = vpow.pop %v1419
  %v1421 = vadd.f32 %v1420, 1.0
  %v1422 = vrcp.pop %v1421
  %v1423 = vmul.f32 1.0, %v1422
  %v1424 = vadd.f32 %v370, %v1373
  %v1425 = vxor.u32 %v1424, 2147483648
  %v1426 = vmul.f32 %v1425, 1.442695
  %v1427 = vpow.pop %v1426
  %v1428 = vadd.f32 %v1427, 1.0
  %v1429 = vrcp.pop %v1428
  %v1430 = vmul.f32 1.0, %v1429
  %v1431 = vmul.f32 %v1423, %v1412
  %v1432 = vadd.f32 %v439, %v1431
  %v1433 = vtanh.pop %v1432
  %v1434 = vsub.f32 1.0, %v1430
  %v1435 = vmul.f32 %v1434, %v1433
  %v1436 = vmul.f32 %v1430, %v1231
  %v1437 = vadd.f32 %v1435, %v1436
  %v1438 = vpack.c.bf16 %v1334, %v1334
  %1439 = vmatprep.subr.bf16.mxu0 %v630
  %1440 = vmatpush1.bf16.msra.mxu0 %v629
  %1441 = vmatprep.subr.bf16.mxu0 %v633
  %1442 = vmatpush1.bf16.msra.mxu0 %v632
  %1443 = vmatprep.subr.bf16.mxu0 %v636
  %1444 = vmatpush1.bf16.msra.mxu0 %v635
  %1445 = vmatprep.subr.bf16.mxu0 %v639
  %1446 = vmatpush1.bf16.msra.mxu0 %v638
  %1447 = vmatprep.subr.bf16.mxu0 %v642
  %1448 = vmatpush1.bf16.msra.mxu0 %v641
  %1449 = vmatprep.subr.bf16.mxu0 %v645
  %1450 = vmatpush1.bf16.msra.mxu0 %v644
  %1451 = vmatprep.subr.bf16.mxu0 %v648
  %1452 = vmatpush1.bf16.msra.mxu0 %v647
  %1453 = vmatprep.subr.bf16.mxu0 %v651
  %1454 = vmatpush1.bf16.msra.mxu0 %v650
  %1455 = vmatprep.subr.bf16.mxu0 0
  %1456 = vmatpush1.bf16.msra.mxu0 0
  %1457 = vmatprep.subr.bf16.mxu0 0
  %1458 = vmatpush1.bf16.msra.mxu0 0
  %1459 = vmatprep.subr.bf16.mxu0 0
  %1460 = vmatpush1.bf16.msra.mxu0 0
  %1461 = vmatprep.subr.bf16.mxu0 0
  %1462 = vmatpush1.bf16.msra.mxu0 0
  %1463 = vmatprep.subr.bf16.mxu0 0
  %1464 = vmatpush1.bf16.msra.mxu0 0
  %1465 = vmatprep.subr.bf16.mxu0 0
  %1466 = vmatpush1.bf16.msra.mxu0 0
  %1467 = vmatprep.subr.bf16.mxu0 0
  %1468 = vmatpush1.bf16.msra.mxu0 0
  %1469 = vmatprep.subr.bf16.mxu0 0
  %1470 = vmatpush1.bf16.msra.mxu0 0
  %1471 = vmatprep.mubr.bf16.mxu0 0
  %1472 = vmatmul.mubr.bf16.gmra.mrb[0].mxu0 %v1438
  %v1473 = vpop.f32.mrb[0].mxu0
  %v1474 = vadd.f32 %v537, %v1473
  %v1475 = vpop.f32.mrb[0].mxu0
  %v1476 = vadd.f32 %v541, %v1475
  %v1477 = vpop.f32.mrb[0].mxu0
  %v1478 = vpop.f32.mrb[0].mxu0
  %1479 = vdwg.mxu0
  %1480 = vmatprep.subr.bf16.mxu0 0
  %1481 = vmatpush1.bf16.msra.mxu0 %v631
  %1482 = vmatprep.subr.bf16.mxu0 0
  %1483 = vmatpush1.bf16.msra.mxu0 %v634
  %1484 = vmatprep.subr.bf16.mxu0 0
  %1485 = vmatpush1.bf16.msra.mxu0 %v637
  %1486 = vmatprep.subr.bf16.mxu0 0
  %1487 = vmatpush1.bf16.msra.mxu0 %v640
  %1488 = vmatprep.subr.bf16.mxu0 0
  %1489 = vmatpush1.bf16.msra.mxu0 %v643
  %1490 = vmatprep.subr.bf16.mxu0 0
  %1491 = vmatpush1.bf16.msra.mxu0 %v646
  %1492 = vmatprep.subr.bf16.mxu0 0
  %1493 = vmatpush1.bf16.msra.mxu0 %v649
  %1494 = vmatprep.subr.bf16.mxu0 0
  %1495 = vmatpush1.bf16.msra.mxu0 %v652
  %1496 = vmatprep.subr.bf16.mxu0 0
  %1497 = vmatpush1.bf16.msra.mxu0 0
  %1498 = vmatprep.subr.bf16.mxu0 0
  %1499 = vmatpush1.bf16.msra.mxu0 0
  %1500 = vmatprep.subr.bf16.mxu0 0
  %1501 = vmatpush1.bf16.msra.mxu0 0
  %1502 = vmatprep.subr.bf16.mxu0 0
  %1503 = vmatpush1.bf16.msra.mxu0 0
  %1504 = vmatprep.subr.bf16.mxu0 0
  %1505 = vmatpush1.bf16.msra.mxu0 0
  %1506 = vmatprep.subr.bf16.mxu0 0
  %1507 = vmatpush1.bf16.msra.mxu0 0
  %1508 = vmatprep.subr.bf16.mxu0 0
  %1509 = vmatpush1.bf16.msra.mxu0 0
  %1510 = vmatprep.subr.bf16.mxu0 0
  %1511 = vmatpush1.bf16.msra.mxu0 0
  %1512 = vmatprep.mubr.bf16.mxu0 0
  %1513 = vmatmul.mubr.bf16.gmra.mrb[0].mxu0 %v1438
  %v1514 = vpop.f32.mrb[0].mxu0
  %v1515 = vadd.f32 %v545, %v1514
  %v1516 = vpop.f32.mrb[0].mxu0
  %v1517 = vpop.f32.mrb[0].mxu0
  %v1518 = vpop.f32.mrb[0].mxu0
  %1519 = vdwg.mxu0
  %v1520 = vadd.f32 %v154, %v1474
  %v1521 = vxor.u32 %v1520, 2147483648
  %v1522 = vmul.f32 %v1521, 1.442695
  %v1523 = vpow.pop %v1522
  %v1524 = vadd.f32 %v1523, 1.0
  %v1525 = vrcp.pop %v1524
  %v1526 = vmul.f32 1.0, %v1525
  %v1527 = vadd.f32 %v156, %v1476
  %v1528 = vxor.u32 %v1527, 2147483648
  %v1529 = vmul.f32 %v1528, 1.442695
  %v1530 = vpow.pop %v1529
  %v1531 = vadd.f32 %v1530, 1.0
  %v1532 = vrcp.pop %v1531
  %v1533 = vmul.f32 1.0, %v1532
  %v1534 = vmul.f32 %v1526, %v1515
  %v1535 = vadd.f32 %v224, %v1534
  %v1536 = vtanh.pop %v1535
  %v1537 = vsub.f32 1.0, %v1533
  %v1538 = vmul.f32 %v1537, %v1536
  %v1539 = vmul.f32 %v1533, %v1334
  %v1540 = vadd.f32 %v1538, %v1539
  %v1541 = vpack.c.bf16 %v1437, %v1437
  %1542 = vmatprep.subr.bf16.mxu0 %v877
  %1543 = vmatpush1.bf16.msra.mxu0 %v876
  %1544 = vmatprep.subr.bf16.mxu0 %v880
  %1545 = vmatpush1.bf16.msra.mxu0 %v879
  %1546 = vmatprep.subr.bf16.mxu0 %v883
  %1547 = vmatpush1.bf16.msra.mxu0 %v882
  %1548 = vmatprep.subr.bf16.mxu0 %v886
  %1549 = vmatpush1.bf16.msra.mxu0 %v885
  %1550 = vmatprep.subr.bf16.mxu0 %v889
  %1551 = vmatpush1.bf16.msra.mxu0 %v888
  %1552 = vmatprep.subr.bf16.mxu0 %v892
  %1553 = vmatpush1.bf16.msra.mxu0 %v891
  %1554 = vmatprep.subr.bf16.mxu0 %v895
  %1555 = vmatpush1.bf16.msra.mxu0 %v894
  %1556 = vmatprep.subr.bf16.mxu0 %v898
  %1557 = vmatpush1.bf16.msra.mxu0 %v897
  %1558 = vmatprep.subr.bf16.mxu0 0
  %1559 = vmatpush1.bf16.msra.mxu0 0
  %1560 = vmatprep.subr.bf16.mxu0 0
  %1561 = vmatpush1.bf16.msra.mxu0 0
  %1562 = vmatprep.subr.bf16.mxu0 0
  %1563 = vmatpush1.bf16.msra.mxu0 0
  %1564 = vmatprep.subr.bf16.mxu0 0
  %1565 = vmatpush1.bf16.msra.mxu0 0
  %1566 = vmatprep.subr.bf16.mxu0 0
  %1567 = vmatpush1.bf16.msra.mxu0 0
  %1568 = vmatprep.subr.bf16.mxu0 0
  %1569 = vmatpush1.bf16.msra.mxu0 0
  %1570 = vmatprep.subr.bf16.mxu0 0
  %1571 = vmatpush1.bf16.msra.mxu0 0
  %1572 = vmatprep.subr.bf16.mxu0 0
  %1573 = vmatpush1.bf16.msra.mxu0 0
  %1574 = vmatprep.mubr.bf16.mxu0 0
  %1575 = vmatmul.mubr.bf16.gmra.mrb[0].mxu0 %v1541
  %v1576 = vpop.f32.mrb[0].mxu0
  %v1577 = vadd.f32 %v784, %v1576
  %v1578 = vpop.f32.mrb[0].mxu0
  %v1579 = vadd.f32 %v788, %v1578
  %v1580 = vpop.f32.mrb[0].mxu0
  %v1581 = vpop.f32.mrb[0].mxu0
  %1582 = vdwg.mxu0
  %1583 = vmatprep.subr.bf16.mxu0 0
  %1584 = vmatpush1.bf16.msra.mxu0 %v878
  %1585 = vmatprep.subr.bf16.mxu0 0
  %1586 = vmatpush1.bf16.msra.mxu0 %v881
  %1587 = vmatprep.subr.bf16.mxu0 0
  %1588 = vmatpush1.bf16.msra.mxu0 %v884
  %1589 = vmatprep.subr.bf16.mxu0 0
  %1590 = vmatpush1.bf16.msra.mxu0 %v887
  %1591 = vmatprep.subr.bf16.mxu0 0
  %1592 = vmatpush1.bf16.msra.mxu0 %v890
  %1593 = vmatprep.subr.bf16.mxu0 0
  %1594 = vmatpush1.bf16.msra.mxu0 %v893
  %1595 = vmatprep.subr.bf16.mxu0 0
  %1596 = vmatpush1.bf16.msra.mxu0 %v896
  %1597 = vmatprep.subr.bf16.mxu0 0
  %1598 = vmatpush1.bf16.msra.mxu0 %v899
  %1599 = vmatprep.subr.bf16.mxu0 0
  %1600 = vmatpush1.bf16.msra.mxu0 0
  %1601 = vmatprep.subr.bf16.mxu0 0
  %1602 = vmatpush1.bf16.msra.mxu0 0
  %1603 = vmatprep.subr.bf16.mxu0 0
  %1604 = vmatpush1.bf16.msra.mxu0 0
  %1605 = vmatprep.subr.bf16.mxu0 0
  %1606 = vmatpush1.bf16.msra.mxu0 0
  %1607 = vmatprep.subr.bf16.mxu0 0
  %1608 = vmatpush1.bf16.msra.mxu0 0
  %1609 = vmatprep.subr.bf16.mxu0 0
  %1610 = vmatpush1.bf16.msra.mxu0 0
  %1611 = vmatprep.subr.bf16.mxu0 0
  %1612 = vmatpush1.bf16.msra.mxu0 0
  %1613 = vmatprep.subr.bf16.mxu0 0
  %1614 = vmatpush1.bf16.msra.mxu0 0
  %1615 = vmatprep.mubr.bf16.mxu0 0
  %1616 = vmatmul.mubr.bf16.gmra.mrb[0].mxu0 %v1541
  %v1617 = vpop.f32.mrb[0].mxu0
  %v1618 = vadd.f32 %v792, %v1617
  %v1619 = vpop.f32.mrb[0].mxu0
  %v1620 = vpop.f32.mrb[0].mxu0
  %v1621 = vpop.f32.mrb[0].mxu0
  %1622 = vdwg.mxu0
  %v1623 = vadd.f32 %v372, %v1577
  %v1624 = vxor.u32 %v1623, 2147483648
  %v1625 = vmul.f32 %v1624, 1.442695
  %v1626 = vpow.pop %v1625
  %v1627 = vadd.f32 %v1626, 1.0
  %v1628 = vrcp.pop %v1627
  %v1629 = vmul.f32 1.0, %v1628
  %v1630 = vadd.f32 %v374, %v1579
  %v1631 = vxor.u32 %v1630, 2147483648
  %v1632 = vmul.f32 %v1631, 1.442695
  %v1633 = vpow.pop %v1632
  %v1634 = vadd.f32 %v1633, 1.0
  %v1635 = vrcp.pop %v1634
  %v1636 = vmul.f32 1.0, %v1635
  %v1637 = vmul.f32 %v1629, %v1618
  %v1638 = vadd.f32 %v442, %v1637
  %v1639 = vtanh.pop %v1638
  %v1640 = vsub.f32 1.0, %v1636
  %v1641 = vmul.f32 %v1640, %v1639
  %v1642 = vmul.f32 %v1636, %v1437
  %v1643 = vadd.f32 %v1641, %v1642
  %v1644 = vpack.c.bf16 %v1540, %v1540
  %1645 = vmatprep.subr.bf16.mxu0 %v630
  %1646 = vmatpush1.bf16.msra.mxu0 %v629
  %1647 = vmatprep.subr.bf16.mxu0 %v633
  %1648 = vmatpush1.bf16.msra.mxu0 %v632
  %1649 = vmatprep.subr.bf16.mxu0 %v636
  %1650 = vmatpush1.bf16.msra.mxu0 %v635
  %1651 = vmatprep.subr.bf16.mxu0 %v639
  %1652 = vmatpush1.bf16.msra.mxu0 %v638
  %1653 = vmatprep.subr.bf16.mxu0 %v642
  %1654 = vmatpush1.bf16.msra.mxu0 %v641
  %1655 = vmatprep.subr.bf16.mxu0 %v645
  %1656 = vmatpush1.bf16.msra.mxu0 %v644
  %1657 = vmatprep.subr.bf16.mxu0 %v648
  %1658 = vmatpush1.bf16.msra.mxu0 %v647
  %1659 = vmatprep.subr.bf16.mxu0 %v651
  %1660 = vmatpush1.bf16.msra.mxu0 %v650
  %1661 = vmatprep.subr.bf16.mxu0 0
  %1662 = vmatpush1.bf16.msra.mxu0 0
  %1663 = vmatprep.subr.bf16.mxu0 0
  %1664 = vmatpush1.bf16.msra.mxu0 0
  %1665 = vmatprep.subr.bf16.mxu0 0
  %1666 = vmatpush1.bf16.msra.mxu0 0
  %1667 = vmatprep.subr.bf16.mxu0 0
  %1668 = vmatpush1.bf16.msra.mxu0 0
  %1669 = vmatprep.subr.bf16.mxu0 0
  %1670 = vmatpush1.bf16.msra.mxu0 0
  %1671 = vmatprep.subr.bf16.mxu0 0
  %1672 = vmatpush1.bf16.msra.mxu0 0
  %1673 = vmatprep.subr.bf16.mxu0 0
  %1674 = vmatpush1.bf16.msra.mxu0 0
  %1675 = vmatprep.subr.bf16.mxu0 0
  %1676 = vmatpush1.bf16.msra.mxu0 0
  %1677 = vmatprep.mubr.bf16.mxu0 0
  %1678 = vmatmul.mubr.bf16.gmra.mrb[0].mxu0 %v1644
  %v1679 = vpop.f32.mrb[0].mxu0
  %v1680 = vadd.f32 %v537, %v1679
  %v1681 = vpop.f32.mrb[0].mxu0
  %v1682 = vadd.f32 %v541, %v1681
  %v1683 = vpop.f32.mrb[0].mxu0
  %v1684 = vpop.f32.mrb[0].mxu0
  %1685 = vdwg.mxu0
  %1686 = vmatprep.subr.bf16.mxu0 0
  %1687 = vmatpush1.bf16.msra.mxu0 %v631
  %1688 = vmatprep.subr.bf16.mxu0 0
  %1689 = vmatpush1.bf16.msra.mxu0 %v634
  %1690 = vmatprep.subr.bf16.mxu0 0
  %1691 = vmatpush1.bf16.msra.mxu0 %v637
  %1692 = vmatprep.subr.bf16.mxu0 0
  %1693 = vmatpush1.bf16.msra.mxu0 %v640
  %1694 = vmatprep.subr.bf16.mxu0 0
  %1695 = vmatpush1.bf16.msra.mxu0 %v643
  %1696 = vmatprep.subr.bf16.mxu0 0
  %1697 = vmatpush1.bf16.msra.mxu0 %v646
  %1698 = vmatprep.subr.bf16.mxu0 0
  %1699 = vmatpush1.bf16.msra.mxu0 %v649
  %1700 = vmatprep.subr.bf16.mxu0 0
  %1701 = vmatpush1.bf16.msra.mxu0 %v652
  %1702 = vmatprep.subr.bf16.mxu0 0
  %1703 = vmatpush1.bf16.msra.mxu0 0
  %1704 = vmatprep.subr.bf16.mxu0 0
  %1705 = vmatpush1.bf16.msra.mxu0 0
  %1706 = vmatprep.subr.bf16.mxu0 0
  %1707 = vmatpush1.bf16.msra.mxu0 0
  %1708 = vmatprep.subr.bf16.mxu0 0
  %1709 = vmatpush1.bf16.msra.mxu0 0
  %1710 = vmatprep.subr.bf16.mxu0 0
  %1711 = vmatpush1.bf16.msra.mxu0 0
  %1712 = vmatprep.subr.bf16.mxu0 0
  %1713 = vmatpush1.bf16.msra.mxu0 0
  %1714 = vmatprep.subr.bf16.mxu0 0
  %1715 = vmatpush1.bf16.msra.mxu0 0
  %1716 = vmatprep.subr.bf16.mxu0 0
  %1717 = vmatpush1.bf16.msra.mxu0 0
  %1718 = vmatprep.mubr.bf16.mxu0 0
  %1719 = vmatmul.mubr.bf16.gmra.mrb[0].mxu0 %v1644
  %v1720 = vpop.f32.mrb[0].mxu0
  %v1721 = vadd.f32 %v545, %v1720
  %v1722 = vpop.f32.mrb[0].mxu0
  %v1723 = vpop.f32.mrb[0].mxu0
  %v1724 = vpop.f32.mrb[0].mxu0
  %1725 = vdwg.mxu0
  %v1726 = vadd.f32 %v160, %v1680
  %v1727 = vxor.u32 %v1726, 2147483648
  %v1728 = vmul.f32 %v1727, 1.442695
  %v1729 = vpow.pop %v1728
  %v1730 = vadd.f32 %v1729, 1.0
  %v1731 = vrcp.pop %v1730
  %v1732 = vmul.f32 1.0, %v1731
  %v1733 = vadd.f32 %v162, %v1682
  %v1734 = vxor.u32 %v1733, 2147483648
  %v1735 = vmul.f32 %v1734, 1.442695
  %v1736 = vpow.pop %v1735
  %v1737 = vadd.f32 %v1736, 1.0
  %v1738 = vrcp.pop %v1737
  %v1739 = vmul.f32 1.0, %v1738
  %v1740 = vmul.f32 %v1732, %v1721
  %v1741 = vadd.f32 %v229, %v1740
  %v1742 = vtanh.pop %v1741
  %v1743 = vsub.f32 1.0, %v1739
  %v1744 = vmul.f32 %v1743, %v1742
  %v1745 = vmul.f32 %v1739, %v1540
  %v1746 = vadd.f32 %v1744, %v1745
  %v1747 = vpack.c.bf16 %v1643, %v1643
  %1748 = vmatprep.subr.bf16.mxu0 %v877
  %1749 = vmatpush1.bf16.msra.mxu0 %v876
  %1750 = vmatprep.subr.bf16.mxu0 %v880
  %1751 = vmatpush1.bf16.msra.mxu0 %v879
  %1752 = vmatprep.subr.bf16.mxu0 %v883
  %1753 = vmatpush1.bf16.msra.mxu0 %v882
  %1754 = vmatprep.subr.bf16.mxu0 %v886
  %1755 = vmatpush1.bf16.msra.mxu0 %v885
  %1756 = vmatprep.subr.bf16.mxu0 %v889
  %1757 = vmatpush1.bf16.msra.mxu0 %v888
  %1758 = vmatprep.subr.bf16.mxu0 %v892
  %1759 = vmatpush1.bf16.msra.mxu0 %v891
  %1760 = vmatprep.subr.bf16.mxu0 %v895
  %1761 = vmatpush1.bf16.msra.mxu0 %v894
  %1762 = vmatprep.subr.bf16.mxu0 %v898
  %1763 = vmatpush1.bf16.msra.mxu0 %v897
  %1764 = vmatprep.subr.bf16.mxu0 0
  %1765 = vmatpush1.bf16.msra.mxu0 0
  %1766 = vmatprep.subr.bf16.mxu0 0
  %1767 = vmatpush1.bf16.msra.mxu0 0
  %1768 = vmatprep.subr.bf16.mxu0 0
  %1769 = vmatpush1.bf16.msra.mxu0 0
  %1770 = vmatprep.subr.bf16.mxu0 0
  %1771 = vmatpush1.bf16.msra.mxu0 0
  %1772 = vmatprep.subr.bf16.mxu0 0
  %1773 = vmatpush1.bf16.msra.mxu0 0
  %1774 = vmatprep.subr.bf16.mxu0 0
  %1775 = vmatpush1.bf16.msra.mxu0 0
  %1776 = vmatprep.subr.bf16.mxu0 0
  %1777 = vmatpush1.bf16.msra.mxu0 0
  %1778 = vmatprep.subr.bf16.mxu0 0
  %1779 = vmatpush1.bf16.msra.mxu0 0
  %1780 = vmatprep.mubr.bf16.mxu0 0
  %1781 = vmatmul.mubr.bf16.gmra.mrb[0].mxu0 %v1747
  %v1782 = vpop.f32.mrb[0].mxu0
  %v1783 = vadd.f32 %v784, %v1782
  %v1784 = vpop.f32.mrb[0].mxu0
  %v1785 = vadd.f32 %v788, %v1784
  %v1786 = vpop.f32.mrb[0].mxu0
  %v1787 = vpop.f32.mrb[0].mxu0
  %1788 = vdwg.mxu0
  %1789 = vmatprep.subr.bf16.mxu0 0
  %1790 = vmatpush1.bf16.msra.mxu0 %v878
  %1791 = vmatprep.subr.bf16.mxu0 0
  %1792 = vmatpush1.bf16.msra.mxu0 %v881
  %1793 = vmatprep.subr.bf16.mxu0 0
  %1794 = vmatpush1.bf16.msra.mxu0 %v884
  %1795 = vmatprep.subr.bf16.mxu0 0
  %1796 = vmatpush1.bf16.msra.mxu0 %v887
  %1797 = vmatprep.subr.bf16.mxu0 0
  %1798 = vmatpush1.bf16.msra.mxu0 %v890
  %1799 = vmatprep.subr.bf16.mxu0 0
  %1800 = vmatpush1.bf16.msra.mxu0 %v893
  %1801 = vmatprep.subr.bf16.mxu0 0
  %1802 = vmatpush1.bf16.msra.mxu0 %v896
  %1803 = vmatprep.subr.bf16.mxu0 0
  %1804 = vmatpush1.bf16.msra.mxu0 %v899
  %1805 = vmatprep.subr.bf16.mxu0 0
  %1806 = vmatpush1.bf16.msra.mxu0 0
  %1807 = vmatprep.subr.bf16.mxu0 0
  %1808 = vmatpush1.bf16.msra.mxu0 0
  %1809 = vmatprep.subr.bf16.mxu0 0
  %1810 = vmatpush1.bf16.msra.mxu0 0
  %1811 = vmatprep.subr.bf16.mxu0 0
  %1812 = vmatpush1.bf16.msra.mxu0 0
  %1813 = vmatprep.subr.bf16.mxu0 0
  %1814 = vmatpush1.bf16.msra.mxu0 0
  %1815 = vmatprep.subr.bf16.mxu0 0
  %1816 = vmatpush1.bf16.msra.mxu0 0
  %1817 = vmatprep.subr.bf16.mxu0 0
  %1818 = vmatpush1.bf16.msra.mxu0 0
  %1819 = vmatprep.subr.bf16.mxu0 0
  %1820 = vmatpush1.bf16.msra.mxu0 0
  %1821 = vmatprep.mubr.bf16.mxu0 0
  %1822 = vmatmul.mubr.bf16.gmra.mrb[0].mxu0 %v1747
  %v1823 = vpop.f32.mrb[0].mxu0
  %v1824 = vadd.f32 %v792, %v1823
  %v1825 = vpop.f32.mrb[0].mxu0
  %v1826 = vpop.f32.mrb[0].mxu0
  %v1827 = vpop.f32.mrb[0].mxu0
  %1828 = vdwg.mxu0
  %v1829 = vadd.f32 %v378, %v1783
  %v1830 = vxor.u32 %v1829, 2147483648
  %v1831 = vmul.f32 %v1830, 1.442695
  %v1832 = vpow.pop %v1831
  %v1833 = vadd.f32 %v1832, 1.0
  %v1834 = vrcp.pop %v1833
  %v1835 = vmul.f32 1.0, %v1834
  %v1836 = vadd.f32 %v380, %v1785
  %v1837 = vxor.u32 %v1836, 2147483648
  %v1838 = vmul.f32 %v1837, 1.442695
  %v1839 = vpow.pop %v1838
  %v1840 = vadd.f32 %v1839, 1.0
  %v1841 = vrcp.pop %v1840
  %v1842 = vmul.f32 1.0, %v1841
  %v1843 = vmul.f32 %v1835, %v1824
  %v1844 = vadd.f32 %v447, %v1843
  %v1845 = vtanh.pop %v1844
  %v1846 = vsub.f32 1.0, %v1842
  %v1847 = vmul.f32 %v1846, %v1845
  %v1848 = vmul.f32 %v1842, %v1643
  %v1849 = vadd.f32 %v1847, %v1848
  %v1850 = vpack.c.bf16 %v1746, %v1746
  %1851 = vmatprep.subr.bf16.mxu0 %v630
  %1852 = vmatpush1.bf16.msra.mxu0 %v629
  %1853 = vmatprep.subr.bf16.mxu0 %v633
  %1854 = vmatpush1.bf16.msra.mxu0 %v632
  %1855 = vmatprep.subr.bf16.mxu0 %v636
  %1856 = vmatpush1.bf16.msra.mxu0 %v635
  %1857 = vmatprep.subr.bf16.mxu0 %v639
  %1858 = vmatpush1.bf16.msra.mxu0 %v638
  %1859 = vmatprep.subr.bf16.mxu0 %v642
  %1860 = vmatpush1.bf16.msra.mxu0 %v641
  %1861 = vmatprep.subr.bf16.mxu0 %v645
  %1862 = vmatpush1.bf16.msra.mxu0 %v644
  %1863 = vmatprep.subr.bf16.mxu0 %v648
  %1864 = vmatpush1.bf16.msra.mxu0 %v647
  %1865 = vmatprep.subr.bf16.mxu0 %v651
  %1866 = vmatpush1.bf16.msra.mxu0 %v650
  %1867 = vmatprep.subr.bf16.mxu0 0
  %1868 = vmatpush1.bf16.msra.mxu0 0
  %1869 = vmatprep.subr.bf16.mxu0 0
  %1870 = vmatpush1.bf16.msra.mxu0 0
  %1871 = vmatprep.subr.bf16.mxu0 0
  %1872 = vmatpush1.bf16.msra.mxu0 0
  %1873 = vmatprep.subr.bf16.mxu0 0
  %1874 = vmatpush1.bf16.msra.mxu0 0
  %1875 = vmatprep.subr.bf16.mxu0 0
  %1876 = vmatpush1.bf16.msra.mxu0 0
  %1877 = vmatprep.subr.bf16.mxu0 0
  %1878 = vmatpush1.bf16.msra.mxu0 0
  %1879 = vmatprep.subr.bf16.mxu0 0
  %1880 = vmatpush1.bf16.msra.mxu0 0
  %1881 = vmatprep.subr.bf16.mxu0 0
  %1882 = vmatpush1.bf16.msra.mxu0 0
  %1883 = vmatprep.mubr.bf16.mxu0 0
  %1884 = vmatmul.mubr.bf16.gmra.mrb[0].mxu0 %v1850
  %v1885 = vpop.f32.mrb[0].mxu0
  %v1886 = vadd.f32 %v537, %v1885
  %v1887 = vpop.f32.mrb[0].mxu0
  %v1888 = vadd.f32 %v541, %v1887
  %v1889 = vpop.f32.mrb[0].mxu0
  %v1890 = vpop.f32.mrb[0].mxu0
  %1891 = vdwg.mxu0
  %1892 = vmatprep.subr.bf16.mxu0 0
  %1893 = vmatpush1.bf16.msra.mxu0 %v631
  %1894 = vmatprep.subr.bf16.mxu0 0
  %1895 = vmatpush1.bf16.msra.mxu0 %v634
  %1896 = vmatprep.subr.bf16.mxu0 0
  %1897 = vmatpush1.bf16.msra.mxu0 %v637
  %1898 = vmatprep.subr.bf16.mxu0 0
  %1899 = vmatpush1.bf16.msra.mxu0 %v640
  %1900 = vmatprep.subr.bf16.mxu0 0
  %1901 = vmatpush1.bf16.msra.mxu0 %v643
  %1902 = vmatprep.subr.bf16.mxu0 0
  %1903 = vmatpush1.bf16.msra.mxu0 %v646
  %1904 = vmatprep.subr.bf16.mxu0 0
  %1905 = vmatpush1.bf16.msra.mxu0 %v649
  %1906 = vmatprep.subr.bf16.mxu0 0
  %1907 = vmatpush1.bf16.msra.mxu0 %v652
  %1908 = vmatprep.subr.bf16.mxu0 0
  %1909 = vmatpush1.bf16.msra.mxu0 0
  %1910 = vmatprep.subr.bf16.mxu0 0
  %1911 = vmatpush1.bf16.msra.mxu0 0
  %1912 = vmatprep.subr.bf16.mxu0 0
  %1913 = vmatpush1.bf16.msra.mxu0 0
  %1914 = vmatprep.subr.bf16.mxu0 0
  %1915 = vmatpush1.bf16.msra.mxu0 0
  %1916 = vmatprep.subr.bf16.mxu0 0
  %1917 = vmatpush1.bf16.msra.mxu0 0
  %1918 = vmatprep.subr.bf16.mxu0 0
  %1919 = vmatpush1.bf16.msra.mxu0 0
  %1920 = vmatprep.subr.bf16.mxu0 0
  %1921 = vmatpush1.bf16.msra.mxu0 0
  %1922 = vmatprep.subr.bf16.mxu0 0
  %1923 = vmatpush1.bf16.msra.mxu0 0
  %1924 = vmatprep.mubr.bf16.mxu0 0
  %1925 = vmatmul.mubr.bf16.gmra.mrb[0].mxu0 %v1850
  %v1926 = vpop.f32.mrb[0].mxu0
  %v1927 = vadd.f32 %v545, %v1926
  %v1928 = vpop.f32.mrb[0].mxu0
  %v1929 = vpop.f32.mrb[0].mxu0
  %v1930 = vpop.f32.mrb[0].mxu0
  %1931 = vdwg.mxu0
  %v1932 = vadd.f32 %v164, %v1886
  %v1933 = vxor.u32 %v1932, 2147483648
  %v1934 = vmul.f32 %v1933, 1.442695
  %v1935 = vpow.pop %v1934
  %v1936 = vadd.f32 %v1935, 1.0
  %v1937 = vrcp.pop %v1936
  %v1938 = vmul.f32 1.0, %v1937
  %v1939 = vadd.f32 %v166, %v1888
  %v1940 = vxor.u32 %v1939, 2147483648
  %v1941 = vmul.f32 %v1940, 1.442695
  %v1942 = vpow.pop %v1941
  %v1943 = vadd.f32 %v1942, 1.0
  %v1944 = vrcp.pop %v1943
  %v1945 = vmul.f32 1.0, %v1944
  %v1946 = vmul.f32 %v1938, %v1927
  %v1947 = vadd.f32 %v232, %v1946
  %v1948 = vtanh.pop %v1947
  %v1949 = vsub.f32 1.0, %v1945
  %v1950 = vmul.f32 %v1949, %v1948
  %v1951 = vmul.f32 %v1945, %v1746
  %v1952 = vadd.f32 %v1950, %v1951
  %v1953 = vpack.c.bf16 %v1849, %v1849
  %1954 = vmatprep.subr.bf16.mxu0 %v877
  %1955 = vmatpush1.bf16.msra.mxu0 %v876
  %1956 = vmatprep.subr.bf16.mxu0 %v880
  %1957 = vmatpush1.bf16.msra.mxu0 %v879
  %1958 = vmatprep.subr.bf16.mxu0 %v883
  %1959 = vmatpush1.bf16.msra.mxu0 %v882
  %1960 = vmatprep.subr.bf16.mxu0 %v886
  %1961 = vmatpush1.bf16.msra.mxu0 %v885
  %1962 = vmatprep.subr.bf16.mxu0 %v889
  %1963 = vmatpush1.bf16.msra.mxu0 %v888
  %1964 = vmatprep.subr.bf16.mxu0 %v892
  %1965 = vmatpush1.bf16.msra.mxu0 %v891
  %1966 = vmatprep.subr.bf16.mxu0 %v895
  %1967 = vmatpush1.bf16.msra.mxu0 %v894
  %1968 = vmatprep.subr.bf16.mxu0 %v898
  %1969 = vmatpush1.bf16.msra.mxu0 %v897
  %1970 = vmatprep.subr.bf16.mxu0 0
  %1971 = vmatpush1.bf16.msra.mxu0 0
  %1972 = vmatprep.subr.bf16.mxu0 0
  %1973 = vmatpush1.bf16.msra.mxu0 0
  %1974 = vmatprep.subr.bf16.mxu0 0
  %1975 = vmatpush1.bf16.msra.mxu0 0
  %1976 = vmatprep.subr.bf16.mxu0 0
  %1977 = vmatpush1.bf16.msra.mxu0 0
  %1978 = vmatprep.subr.bf16.mxu0 0
  %1979 = vmatpush1.bf16.msra.mxu0 0
  %1980 = vmatprep.subr.bf16.mxu0 0
  %1981 = vmatpush1.bf16.msra.mxu0 0
  %1982 = vmatprep.subr.bf16.mxu0 0
  %1983 = vmatpush1.bf16.msra.mxu0 0
  %1984 = vmatprep.subr.bf16.mxu0 0
  %1985 = vmatpush1.bf16.msra.mxu0 0
  %1986 = vmatprep.mubr.bf16.mxu0 0
  %1987 = vmatmul.mubr.bf16.gmra.mrb[0].mxu0 %v1953
  %v1988 = vpop.f32.mrb[0].mxu0
  %v1989 = vadd.f32 %v784, %v1988
  %v1990 = vpop.f32.mrb[0].mxu0
  %v1991 = vadd.f32 %v788, %v1990
  %v1992 = vpop.f32.mrb[0].mxu0
  %v1993 = vpop.f32.mrb[0].mxu0
  %1994 = vdwg.mxu0
  %1995 = vmatprep.subr.bf16.mxu0 0
  %1996 = vmatpush1.bf16.msra.mxu0 %v878
  %1997 = vmatprep.subr.bf16.mxu0 0
  %1998 = vmatpush1.bf16.msra.mxu0 %v881
  %1999 = vmatprep.subr.bf16.mxu0 0
  %2000 = vmatpush1.bf16.msra.mxu0 %v884
  %2001 = vmatprep.subr.bf16.mxu0 0
  %2002 = vmatpush1.bf16.msra.mxu0 %v887
  %2003 = vmatprep.subr.bf16.mxu0 0
  %2004 = vmatpush1.bf16.msra.mxu0 %v890
  %2005 = vmatprep.subr.bf16.mxu0 0
  %2006 = vmatpush1.bf16.msra.mxu0 %v893
  %2007 = vmatprep.subr.bf16.mxu0 0
  %2008 = vmatpush1.bf16.msra.mxu0 %v896
  %2009 = vmatprep.subr.bf16.mxu0 0
  %2010 = vmatpush1.bf16.msra.mxu0 %v899
  %2011 = vmatprep.subr.bf16.mxu0 0
  %2012 = vmatpush1.bf16.msra.mxu0 0
  %2013 = vmatprep.subr.bf16.mxu0 0
  %2014 = vmatpush1.bf16.msra.mxu0 0
  %2015 = vmatprep.subr.bf16.mxu0 0
  %2016 = vmatpush1.bf16.msra.mxu0 0
  %2017 = vmatprep.subr.bf16.mxu0 0
  %2018 = vmatpush1.bf16.msra.mxu0 0
  %2019 = vmatprep.subr.bf16.mxu0 0
  %2020 = vmatpush1.bf16.msra.mxu0 0
  %2021 = vmatprep.subr.bf16.mxu0 0
  %2022 = vmatpush1.bf16.msra.mxu0 0
  %2023 = vmatprep.subr.bf16.mxu0 0
  %2024 = vmatpush1.bf16.msra.mxu0 0
  %2025 = vmatprep.subr.bf16.mxu0 0
  %2026 = vmatpush1.bf16.msra.mxu0 0
  %2027 = vmatprep.mubr.bf16.mxu0 0
  %2028 = vmatmul.mubr.bf16.gmra.mrb[0].mxu0 %v1953
  %v2029 = vpop.f32.mrb[0].mxu0
  %v2030 = vadd.f32 %v792, %v2029
  %v2031 = vpop.f32.mrb[0].mxu0
  %v2032 = vpop.f32.mrb[0].mxu0
  %v2033 = vpop.f32.mrb[0].mxu0
  %2034 = vdwg.mxu0
  %v2035 = vadd.f32 %v382, %v1989
  %v2036 = vxor.u32 %v2035, 2147483648
  %v2037 = vmul.f32 %v2036, 1.442695
  %v2038 = vpow.pop %v2037
  %v2039 = vadd.f32 %v2038, 1.0
  %v2040 = vrcp.pop %v2039
  %v2041 = vmul.f32 1.0, %v2040
  %v2042 = vadd.f32 %v384, %v1991
  %v2043 = vxor.u32 %v2042, 2147483648
  %v2044 = vmul.f32 %v2043, 1.442695
  %v2045 = vpow.pop %v2044
  %v2046 = vadd.f32 %v2045, 1.0
  %v2047 = vrcp.pop %v2046
  %v2048 = vmul.f32 1.0, %v2047
  %v2049 = vmul.f32 %v2041, %v2030
  %v2050 = vadd.f32 %v450, %v2049
  %v2051 = vtanh.pop %v2050
  %v2052 = vsub.f32 1.0, %v2048
  %v2053 = vmul.f32 %v2052, %v2051
  %v2054 = vmul.f32 %v2048, %v1849
  %v2055 = vadd.f32 %v2053, %v2054
  %v2056 = vpack.c.bf16 %v1952, %v1952
  %2057 = vmatprep.subr.bf16.mxu0 %v630
  %2058 = vmatpush1.bf16.msra.mxu0 %v629
  %2059 = vmatprep.subr.bf16.mxu0 %v633
  %2060 = vmatpush1.bf16.msra.mxu0 %v632
  %2061 = vmatprep.subr.bf16.mxu0 %v636
  %2062 = vmatpush1.bf16.msra.mxu0 %v635
  %2063 = vmatprep.subr.bf16.mxu0 %v639
  %2064 = vmatpush1.bf16.msra.mxu0 %v638
  %2065 = vmatprep.subr.bf16.mxu0 %v642
  %2066 = vmatpush1.bf16.msra.mxu0 %v641
  %2067 = vmatprep.subr.bf16.mxu0 %v645
  %2068 = vmatpush1.bf16.msra.mxu0 %v644
  %2069 = vmatprep.subr.bf16.mxu0 %v648
  %2070 = vmatpush1.bf16.msra.mxu0 %v647
  %2071 = vmatprep.subr.bf16.mxu0 %v651
  %2072 = vmatpush1.bf16.msra.mxu0 %v650
  %2073 = vmatprep.subr.bf16.mxu0 0
  %2074 = vmatpush1.bf16.msra.mxu0 0
  %2075 = vmatprep.subr.bf16.mxu0 0
  %2076 = vmatpush1.bf16.msra.mxu0 0
  %2077 = vmatprep.subr.bf16.mxu0 0
  %2078 = vmatpush1.bf16.msra.mxu0 0
  %2079 = vmatprep.subr.bf16.mxu0 0
  %2080 = vmatpush1.bf16.msra.mxu0 0
  %2081 = vmatprep.subr.bf16.mxu0 0
  %2082 = vmatpush1.bf16.msra.mxu0 0
  %2083 = vmatprep.subr.bf16.mxu0 0
  %2084 = vmatpush1.bf16.msra.mxu0 0
  %2085 = vmatprep.subr.bf16.mxu0 0
  %2086 = vmatpush1.bf16.msra.mxu0 0
  %2087 = vmatprep.subr.bf16.mxu0 0
  %2088 = vmatpush1.bf16.msra.mxu0 0
  %2089 = vmatprep.mubr.bf16.mxu0 0
  %2090 = vmatmul.mubr.bf16.gmra.mrb[0].mxu0 %v2056
  %v2091 = vpop.f32.mrb[0].mxu0
  %v2092 = vadd.f32 %v537, %v2091
  %v2093 = vpop.f32.mrb[0].mxu0
  %v2094 = vadd.f32 %v541, %v2093
  %v2095 = vpop.f32.mrb[0].mxu0
  %v2096 = vpop.f32.mrb[0].mxu0
  %2097 = vdwg.mxu0
  %2098 = vmatprep.subr.bf16.mxu0 0
  %2099 = vmatpush1.bf16.msra.mxu0 %v631
  %2100 = vmatprep.subr.bf16.mxu0 0
  %2101 = vmatpush1.bf16.msra.mxu0 %v634
  %2102 = vmatprep.subr.bf16.mxu0 0
  %2103 = vmatpush1.bf16.msra.mxu0 %v637
  %2104 = vmatprep.subr.bf16.mxu0 0
  %2105 = vmatpush1.bf16.msra.mxu0 %v640
  %2106 = vmatprep.subr.bf16.mxu0 0
  %2107 = vmatpush1.bf16.msra.mxu0 %v643
  %2108 = vmatprep.subr.bf16.mxu0 0
  %2109 = vmatpush1.bf16.msra.mxu0 %v646
  %2110 = vmatprep.subr.bf16.mxu0 0
  %2111 = vmatpush1.bf16.msra.mxu0 %v649
  %2112 = vmatprep.subr.bf16.mxu0 0
  %2113 = vmatpush1.bf16.msra.mxu0 %v652
  %2114 = vmatprep.subr.bf16.mxu0 0
  %2115 = vmatpush1.bf16.msra.mxu0 0
  %2116 = vmatprep.subr.bf16.mxu0 0
  %2117 = vmatpush1.bf16.msra.mxu0 0
  %2118 = vmatprep.subr.bf16.mxu0 0
  %2119 = vmatpush1.bf16.msra.mxu0 0
  %2120 = vmatprep.subr.bf16.mxu0 0
  %2121 = vmatpush1.bf16.msra.mxu0 0
  %2122 = vmatprep.subr.bf16.mxu0 0
  %2123 = vmatpush1.bf16.msra.mxu0 0
  %2124 = vmatprep.subr.bf16.mxu0 0
  %2125 = vmatpush1.bf16.msra.mxu0 0
  %2126 = vmatprep.subr.bf16.mxu0 0
  %2127 = vmatpush1.bf16.msra.mxu0 0
  %2128 = vmatprep.subr.bf16.mxu0 0
  %2129 = vmatpush1.bf16.msra.mxu0 0
  %2130 = vmatprep.mubr.bf16.mxu0 0
  %2131 = vmatmul.mubr.bf16.gmra.mrb[0].mxu0 %v2056
  %v2132 = vpop.f32.mrb[0].mxu0
  %v2133 = vadd.f32 %v545, %v2132
  %v2134 = vpop.f32.mrb[0].mxu0
  %v2135 = vpop.f32.mrb[0].mxu0
  %v2136 = vpop.f32.mrb[0].mxu0
  %2137 = vdwg.mxu0
  %v2138 = vadd.f32 %v170, %v2092
  %v2139 = vxor.u32 %v2138, 2147483648
  %v2140 = vmul.f32 %v2139, 1.442695
  %v2141 = vpow.pop %v2140
  %v2142 = vadd.f32 %v2141, 1.0
  %v2143 = vrcp.pop %v2142
  %v2144 = vmul.f32 1.0, %v2143
  %v2145 = vadd.f32 %v172, %v2094
  %v2146 = vxor.u32 %v2145, 2147483648
  %v2147 = vmul.f32 %v2146, 1.442695
  %v2148 = vpow.pop %v2147
  %v2149 = vadd.f32 %v2148, 1.0
  %v2150 = vrcp.pop %v2149
  %v2151 = vmul.f32 1.0, %v2150
  %v2152 = vmul.f32 %v2144, %v2133
  %v2153 = vadd.f32 %v237, %v2152
  %v2154 = vtanh.pop %v2153
  %v2155 = vsub.f32 1.0, %v2151
  %v2156 = vmul.f32 %v2155, %v2154
  %v2157 = vmul.f32 %v2151, %v1952
  %v2158 = vadd.f32 %v2156, %v2157
  %v2159 = vpack.c.bf16 %v2055, %v2055
  %2160 = vmatprep.subr.bf16.mxu0 %v877
  %2161 = vmatpush1.bf16.msra.mxu0 %v876
  %2162 = vmatprep.subr.bf16.mxu0 %v880
  %2163 = vmatpush1.bf16.msra.mxu0 %v879
  %2164 = vmatprep.subr.bf16.mxu0 %v883
  %2165 = vmatpush1.bf16.msra.mxu0 %v882
  %2166 = vmatprep.subr.bf16.mxu0 %v886
  %2167 = vmatpush1.bf16.msra.mxu0 %v885
  %2168 = vmatprep.subr.bf16.mxu0 %v889
  %2169 = vmatpush1.bf16.msra.mxu0 %v888
  %2170 = vmatprep.subr.bf16.mxu0 %v892
  %2171 = vmatpush1.bf16.msra.mxu0 %v891
  %2172 = vmatprep.subr.bf16.mxu0 %v895
  %2173 = vmatpush1.bf16.msra.mxu0 %v894
  %2174 = vmatprep.subr.bf16.mxu0 %v898
  %2175 = vmatpush1.bf16.msra.mxu0 %v897
  %2176 = vmatprep.subr.bf16.mxu0 0
  %2177 = vmatpush1.bf16.msra.mxu0 0
  %2178 = vmatprep.subr.bf16.mxu0 0
  %2179 = vmatpush1.bf16.msra.mxu0 0
  %2180 = vmatprep.subr.bf16.mxu0 0
  %2181 = vmatpush1.bf16.msra.mxu0 0
  %2182 = vmatprep.subr.bf16.mxu0 0
  %2183 = vmatpush1.bf16.msra.mxu0 0
  %2184 = vmatprep.subr.bf16.mxu0 0
  %2185 = vmatpush1.bf16.msra.mxu0 0
  %2186 = vmatprep.subr.bf16.mxu0 0
  %2187 = vmatpush1.bf16.msra.mxu0 0
  %2188 = vmatprep.subr.bf16.mxu0 0
  %2189 = vmatpush1.bf16.msra.mxu0 0
  %2190 = vmatprep.subr.bf16.mxu0 0
  %2191 = vmatpush1.bf16.msra.mxu0 0
  %2192 = vmatprep.mubr.bf16.mxu0 0
  %2193 = vmatmul.mubr.bf16.gmra.mrb[0].mxu0 %v2159
  %v2194 = vpop.f32.mrb[0].mxu0
  %v2195 = vadd.f32 %v784, %v2194
  %v2196 = vpop.f32.mrb[0].mxu0
  %v2197 = vadd.f32 %v788, %v2196
  %v2198 = vpop.f32.mrb[0].mxu0
  %v2199 = vpop.f32.mrb[0].mxu0
  %2200 = vdwg.mxu0
  %2201 = vmatprep.subr.bf16.mxu0 0
  %2202 = vmatpush1.bf16.msra.mxu0 %v878
  %2203 = vmatprep.subr.bf16.mxu0 0
  %2204 = vmatpush1.bf16.msra.mxu0 %v881
  %2205 = vmatprep.subr.bf16.mxu0 0
  %2206 = vmatpush1.bf16.msra.mxu0 %v884
  %2207 = vmatprep.subr.bf16.mxu0 0
  %2208 = vmatpush1.bf16.msra.mxu0 %v887
  %2209 = vmatprep.subr.bf16.mxu0 0
  %2210 = vmatpush1.bf16.msra.mxu0 %v890
  %2211 = vmatprep.subr.bf16.mxu0 0
  %2212 = vmatpush1.bf16.msra.mxu0 %v893
  %2213 = vmatprep.subr.bf16.mxu0 0
  %2214 = vmatpush1.bf16.msra.mxu0 %v896
  %2215 = vmatprep.subr.bf16.mxu0 0
  %2216 = vmatpush1.bf16.msra.mxu0 %v899
  %2217 = vmatprep.subr.bf16.mxu0 0
  %2218 = vmatpush1.bf16.msra.mxu0 0
  %2219 = vmatprep.subr.bf16.mxu0 0
  %2220 = vmatpush1.bf16.msra.mxu0 0
  %2221 = vmatprep.subr.bf16.mxu0 0
  %2222 = vmatpush1.bf16.msra.mxu0 0
  %2223 = vmatprep.subr.bf16.mxu0 0
  %2224 = vmatpush1.bf16.msra.mxu0 0
  %2225 = vmatprep.subr.bf16.mxu0 0
  %2226 = vmatpush1.bf16.msra.mxu0 0
  %2227 = vmatprep.subr.bf16.mxu0 0
  %2228 = vmatpush1.bf16.msra.mxu0 0
  %2229 = vmatprep.subr.bf16.mxu0 0
  %2230 = vmatpush1.bf16.msra.mxu0 0
  %2231 = vmatprep.subr.bf16.mxu0 0
  %2232 = vmatpush1.bf16.msra.mxu0 0
  %2233 = vmatprep.mubr.bf16.mxu0 0
  %2234 = vmatmul.mubr.bf16.gmra.mrb[0].mxu0 %v2159
  %v2235 = vpop.f32.mrb[0].mxu0
  %v2236 = vadd.f32 %v792, %v2235
  %v2237 = vpop.f32.mrb[0].mxu0
  %v2238 = vpop.f32.mrb[0].mxu0
  %v2239 = vpop.f32.mrb[0].mxu0
  %2240 = vdwg.mxu0
  %v2241 = vadd.f32 %v388, %v2195
  %v2242 = vxor.u32 %v2241, 2147483648
  %v2243 = vmul.f32 %v2242, 1.442695
  %v2244 = vpow.pop %v2243
  %v2245 = vadd.f32 %v2244, 1.0
  %v2246 = vrcp.pop %v2245
  %v2247 = vmul.f32 1.0, %v2246
  %v2248 = vadd.f32 %v390, %v2197
  %v2249 = vxor.u32 %v2248, 2147483648
  %v2250 = vmul.f32 %v2249, 1.442695
  %v2251 = vpow.pop %v2250
  %v2252 = vadd.f32 %v2251, 1.0
  %v2253 = vrcp.pop %v2252
  %v2254 = vmul.f32 1.0, %v2253
  %v2255 = vmul.f32 %v2247, %v2236
  %v2256 = vadd.f32 %v455, %v2255
  %v2257 = vtanh.pop %v2256
  %v2258 = vsub.f32 1.0, %v2254
  %v2259 = vmul.f32 %v2258, %v2257
  %v2260 = vmul.f32 %v2254, %v2055
  %v2261 = vadd.f32 %v2259, %v2260
  %v2262 = vpack.c.bf16 %v2158, %v2158
  %2263 = vmatprep.subr.bf16.mxu0 %v630
  %2264 = vmatpush1.bf16.msra.mxu0 %v629
  %2265 = vmatprep.subr.bf16.mxu0 %v633
  %2266 = vmatpush1.bf16.msra.mxu0 %v632
  %2267 = vmatprep.subr.bf16.mxu0 %v636
  %2268 = vmatpush1.bf16.msra.mxu0 %v635
  %2269 = vmatprep.subr.bf16.mxu0 %v639
  %2270 = vmatpush1.bf16.msra.mxu0 %v638
  %2271 = vmatprep.subr.bf16.mxu0 %v642
  %2272 = vmatpush1.bf16.msra.mxu0 %v641
  %2273 = vmatprep.subr.bf16.mxu0 %v645
  %2274 = vmatpush1.bf16.msra.mxu0 %v644
  %2275 = vmatprep.subr.bf16.mxu0 %v648
  %2276 = vmatpush1.bf16.msra.mxu0 %v647
  %2277 = vmatprep.subr.bf16.mxu0 %v651
  %2278 = vmatpush1.bf16.msra.mxu0 %v650
  %2279 = vmatprep.subr.bf16.mxu0 0
  %2280 = vmatpush1.bf16.msra.mxu0 0
  %2281 = vmatprep.subr.bf16.mxu0 0
  %2282 = vmatpush1.bf16.msra.mxu0 0
  %2283 = vmatprep.subr.bf16.mxu0 0
  %2284 = vmatpush1.bf16.msra.mxu0 0
  %2285 = vmatprep.subr.bf16.mxu0 0
  %2286 = vmatpush1.bf16.msra.mxu0 0
  %2287 = vmatprep.subr.bf16.mxu0 0
  %2288 = vmatpush1.bf16.msra.mxu0 0
  %2289 = vmatprep.subr.bf16.mxu0 0
  %2290 = vmatpush1.bf16.msra.mxu0 0
  %2291 = vmatprep.subr.bf16.mxu0 0
  %2292 = vmatpush1.bf16.msra.mxu0 0
  %2293 = vmatprep.subr.bf16.mxu0 0
  %2294 = vmatpush1.bf16.msra.mxu0 0
  %2295 = vmatprep.mubr.bf16.mxu0 0
  %2296 = vmatmul.mubr.bf16.gmra.mrb[0].mxu0 %v2262
  %v2297 = vpop.f32.mrb[0].mxu0
  %v2298 = vadd.f32 %v537, %v2297
  %v2299 = vpop.f32.mrb[0].mxu0
  %v2300 = vadd.f32 %v541, %v2299
  %v2301 = vpop.f32.mrb[0].mxu0
  %v2302 = vpop.f32.mrb[0].mxu0
  %2303 = vdwg.mxu0
  %2304 = vmatprep.subr.bf16.mxu0 0
  %2305 = vmatpush1.bf16.msra.mxu0 %v631
  %2306 = vmatprep.subr.bf16.mxu0 0
  %2307 = vmatpush1.bf16.msra.mxu0 %v634
  %2308 = vmatprep.subr.bf16.mxu0 0
  %2309 = vmatpush1.bf16.msra.mxu0 %v637
  %2310 = vmatprep.subr.bf16.mxu0 0
  %2311 = vmatpush1.bf16.msra.mxu0 %v640
  %2312 = vmatprep.subr.bf16.mxu0 0
  %2313 = vmatpush1.bf16.msra.mxu0 %v643
  %2314 = vmatprep.subr.bf16.mxu0 0
  %2315 = vmatpush1.bf16.msra.mxu0 %v646
  %2316 = vmatprep.subr.bf16.mxu0 0
  %2317 = vmatpush1.bf16.msra.mxu0 %v649
  %2318 = vmatprep.subr.bf16.mxu0 0
  %2319 = vmatpush1.bf16.msra.mxu0 %v652
  %2320 = vmatprep.subr.bf16.mxu0 0
  %2321 = vmatpush1.bf16.msra.mxu0 0
  %2322 = vmatprep.subr.bf16.mxu0 0
  %2323 = vmatpush1.bf16.msra.mxu0 0
  %2324 = vmatprep.subr.bf16.mxu0 0
  %2325 = vmatpush1.bf16.msra.mxu0 0
  %2326 = vmatprep.subr.bf16.mxu0 0
  %2327 = vmatpush1.bf16.msra.mxu0 0
  %2328 = vmatprep.subr.bf16.mxu0 0
  %2329 = vmatpush1.bf16.msra.mxu0 0
  %2330 = vmatprep.subr.bf16.mxu0 0
  %2331 = vmatpush1.bf16.msra.mxu0 0
  %2332 = vmatprep.subr.bf16.mxu0 0
  %2333 = vmatpush1.bf16.msra.mxu0 0
  %2334 = vmatprep.subr.bf16.mxu0 0
  %2335 = vmatpush1.bf16.msra.mxu0 0
  %2336 = vmatprep.mubr.bf16.mxu0 0
  %2337 = vmatmul.mubr.bf16.gmra.mrb[0].mxu0 %v2262
  %v2338 = vpop.f32.mrb[0].mxu0
  %v2339 = vadd.f32 %v545, %v2338
  %v2340 = vpop.f32.mrb[0].mxu0
  %v2341 = vpop.f32.mrb[0].mxu0
  %v2342 = vpop.f32.mrb[0].mxu0
  %2343 = vdwg.mxu0
  %v2344 = vadd.f32 %v174, %v2298
  %v2345 = vxor.u32 %v2344, 2147483648
  %v2346 = vmul.f32 %v2345, 1.442695
  %v2347 = vpow.pop %v2346
  %v2348 = vadd.f32 %v2347, 1.0
  %v2349 = vrcp.pop %v2348
  %v2350 = vmul.f32 1.0, %v2349
  %v2351 = vadd.f32 %v176, %v2300
  %v2352 = vxor.u32 %v2351, 2147483648
  %v2353 = vmul.f32 %v2352, 1.442695
  %v2354 = vpow.pop %v2353
  %v2355 = vadd.f32 %v2354, 1.0
  %v2356 = vrcp.pop %v2355
  %v2357 = vmul.f32 1.0, %v2356
  %v2358 = vmul.f32 %v2350, %v2339
  %v2359 = vadd.f32 %v240, %v2358
  %v2360 = vtanh.pop %v2359
  %v2361 = vsub.f32 1.0, %v2357
  %v2362 = vmul.f32 %v2361, %v2360
  %v2363 = vmul.f32 %v2357, %v2158
  %v2364 = vadd.f32 %v2362, %v2363
  %v2365 = vpack.c.bf16 %v2261, %v2261
  %2366 = vmatprep.subr.bf16.mxu0 %v877
  %2367 = vmatpush1.bf16.msra.mxu0 %v876
  %2368 = vmatprep.subr.bf16.mxu0 %v880
  %2369 = vmatpush1.bf16.msra.mxu0 %v879
  %2370 = vmatprep.subr.bf16.mxu0 %v883
  %2371 = vmatpush1.bf16.msra.mxu0 %v882
  %2372 = vmatprep.subr.bf16.mxu0 %v886
  %2373 = vmatpush1.bf16.msra.mxu0 %v885
  %2374 = vmatprep.subr.bf16.mxu0 %v889
  %2375 = vmatpush1.bf16.msra.mxu0 %v888
  %2376 = vmatprep.subr.bf16.mxu0 %v892
  %2377 = vmatpush1.bf16.msra.mxu0 %v891
  %2378 = vmatprep.subr.bf16.mxu0 %v895
  %2379 = vmatpush1.bf16.msra.mxu0 %v894
  %2380 = vmatprep.subr.bf16.mxu0 %v898
  %2381 = vmatpush1.bf16.msra.mxu0 %v897
  %2382 = vmatprep.subr.bf16.mxu0 0
  %2383 = vmatpush1.bf16.msra.mxu0 0
  %2384 = vmatprep.subr.bf16.mxu0 0
  %2385 = vmatpush1.bf16.msra.mxu0 0
  %2386 = vmatprep.subr.bf16.mxu0 0
  %2387 = vmatpush1.bf16.msra.mxu0 0
  %2388 = vmatprep.subr.bf16.mxu0 0
  %2389 = vmatpush1.bf16.msra.mxu0 0
  %2390 = vmatprep.subr.bf16.mxu0 0
  %2391 = vmatpush1.bf16.msra.mxu0 0
  %2392 = vmatprep.subr.bf16.mxu0 0
  %2393 = vmatpush1.bf16.msra.mxu0 0
  %2394 = vmatprep.subr.bf16.mxu0 0
  %2395 = vmatpush1.bf16.msra.mxu0 0
  %2396 = vmatprep.subr.bf16.mxu0 0
  %2397 = vmatpush1.bf16.msra.mxu0 0
  %2398 = vmatprep.mubr.bf16.mxu0 0
  %2399 = vmatmul.mubr.bf16.gmra.mrb[0].mxu0 %v2365
  %v2400 = vpop.f32.mrb[0].mxu0
  %v2401 = vadd.f32 %v784, %v2400
  %v2402 = vpop.f32.mrb[0].mxu0
  %v2403 = vadd.f32 %v788, %v2402
  %v2404 = vpop.f32.mrb[0].mxu0
  %v2405 = vpop.f32.mrb[0].mxu0
  %2406 = vdwg.mxu0
  %2407 = vmatprep.subr.bf16.mxu0 0
  %2408 = vmatpush1.bf16.msra.mxu0 %v878
  %2409 = vmatprep.subr.bf16.mxu0 0
  %2410 = vmatpush1.bf16.msra.mxu0 %v881
  %2411 = vmatprep.subr.bf16.mxu0 0
  %2412 = vmatpush1.bf16.msra.mxu0 %v884
  %2413 = vmatprep.subr.bf16.mxu0 0
  %2414 = vmatpush1.bf16.msra.mxu0 %v887
  %2415 = vmatprep.subr.bf16.mxu0 0
  %2416 = vmatpush1.bf16.msra.mxu0 %v890
  %2417 = vmatprep.subr.bf16.mxu0 0
  %2418 = vmatpush1.bf16.msra.mxu0 %v893
  %2419 = vmatprep.subr.bf16.mxu0 0
  %2420 = vmatpush1.bf16.msra.mxu0 %v896
  %2421 = vmatprep.subr.bf16.mxu0 0
  %2422 = vmatpush1.bf16.msra.mxu0 %v899
  %2423 = vmatprep.subr.bf16.mxu0 0
  %2424 = vmatpush1.bf16.msra.mxu0 0
  %2425 = vmatprep.subr.bf16.mxu0 0
  %2426 = vmatpush1.bf16.msra.mxu0 0
  %2427 = vmatprep.subr.bf16.mxu0 0
  %2428 = vmatpush1.bf16.msra.mxu0 0
  %2429 = vmatprep.subr.bf16.mxu0 0
  %2430 = vmatpush1.bf16.msra.mxu0 0
  %2431 = vmatprep.subr.bf16.mxu0 0
  %2432 = vmatpush1.bf16.msra.mxu0 0
  %2433 = vmatprep.subr.bf16.mxu0 0
  %2434 = vmatpush1.bf16.msra.mxu0 0
  %2435 = vmatprep.subr.bf16.mxu0 0
  %2436 = vmatpush1.bf16.msra.mxu0 0
  %2437 = vmatprep.subr.bf16.mxu0 0
  %2438 = vmatpush1.bf16.msra.mxu0 0
  %2439 = vmatprep.mubr.bf16.mxu0 0
  %2440 = vmatmul.mubr.bf16.gmra.mrb[0].mxu0 %v2365
  %v2441 = vpop.f32.mrb[0].mxu0
  %v2442 = vadd.f32 %v792, %v2441
  %v2443 = vpop.f32.mrb[0].mxu0
  %v2444 = vpop.f32.mrb[0].mxu0
  %v2445 = vpop.f32.mrb[0].mxu0
  %2446 = vdwg.mxu0
  %v2447 = vadd.f32 %v392, %v2401
  %v2448 = vxor.u32 %v2447, 2147483648
  %v2449 = vmul.f32 %v2448, 1.442695
  %v2450 = vpow.pop %v2449
  %v2451 = vadd.f32 %v2450, 1.0
  %v2452 = vrcp.pop %v2451
  %v2453 = vmul.f32 1.0, %v2452
  %v2454 = vadd.f32 %v394, %v2403
  %v2455 = vxor.u32 %v2454, 2147483648
  %v2456 = vmul.f32 %v2455, 1.442695
  %v2457 = vpow.pop %v2456
  %v2458 = vadd.f32 %v2457, 1.0
  %v2459 = vrcp.pop %v2458
  %v2460 = vmul.f32 1.0, %v2459
  %v2461 = vmul.f32 %v2453, %v2442
  %v2462 = vadd.f32 %v458, %v2461
  %v2463 = vtanh.pop %v2462
  %v2464 = vsub.f32 1.0, %v2460
  %v2465 = vmul.f32 %v2464, %v2463
  %v2466 = vmul.f32 %v2460, %v2261
  %v2467 = vadd.f32 %v2465, %v2466
  %2468 = vst [vmem:[#allocation2] sm:$0xff] %v2364
  %2469 = vst [vmem:[%s530] sm:$0xff] %v2467
  // Predicated region
  $region26: #{_forward_core.2} parent=0 // pred_check
    %p2470 = pneg %p21
  $region27: #{_forward_core.2} parent=0 // pred_check_branch
    %2472 = sbr.rel (%p2470) target = $region29
  $region28: #{_forward_core.2} parent=0 // pred_region
    %2473 = vst [vmem:[%s5] sm:$0xff] %v2364
    %s2474 = scalar_lea.vmem %s5, 8
    %2475 = vst [vmem:[%s2474] sm:$0xff] %v2467
  $region29: #{_forward_core.2} parent=0 // pred_fallthru
    _
  // Predicated region
  $region30: #{_forward_core.2} parent=0 // pred_check
    _
  $region31: #{_forward_core.2} parent=0 // pred_check_branch
    %2477 = sbr.rel (0) target = $region33
  $region32: #{_forward_core.2} parent=0 // pred_region
    _
  $region33: #{_forward_core.2} parent=0 // pred_fallthru
    _
  // Predicated region
  $region34: #{_forward_core.2} parent=0 // pred_check
    _
  $region35: #{_forward_core.2} parent=0 // pred_check_branch
    %2479 = sbr.rel (0) target = $region37
  $region36: #{_forward_core.2} parent=0 // pred_region
    _
  $region37: #{_forward_core.2} parent=0 // pred_fallthru
    _

</llo_original>
